<compile_context>
chip_gen: v7x
topology: tpu7x:2x2x1
jax: 0.10.0
libtpu: 0.0.40
codegen_flags: <defaults>
</compile_context>

<pallas_src>
import jax
import jax.numpy as jnp
from jax.experimental import pallas as pl
from jax.experimental.pallas import tpu as pltpu

LANE = 128
BN_EPS = 1e-5


def _round_up(x, m):
    return (x + m - 1) // m * m


def basic_block_kernel(x_ref, w1_ref, b1_ref, w2_ref, b2_ref, o_ref, pad_ref):
    # x_ref:   (1, H, W, Cp)  channel-padded NHWC input (one image)
    # w*_ref:  (9*Cp, Cp)     im2col weights, row = (ky*3+kx)*Cp + cin,
    #                         BN scale already folded along cout
    # b*_ref:  (1, Cp)        folded BatchNorm bias
    # o_ref:   (1, H, W, Cp)
    # pad_ref: VMEM scratch (H+2, W+2, Cp), reused for both conv inputs
    H, W, Cp = x_ref.shape[1], x_ref.shape[2], x_ref.shape[3]
    Hp, Wp = H + 2, W + 2

    def conv3x3(w_ref):
        # im2col: concatenate the 9 shifted patches along the lane axis (all
        # offsets are multiples of Cp=128 -> aligned concat) and run one
        # big-K (K = 9*Cp) MXU matmul with f32 accumulation.
        cols = [pad_ref[ky:ky + H, kx:kx + W, :].reshape(H * W, Cp)
                for ky in range(3) for kx in range(3)]
        lhs = jnp.concatenate(cols, axis=-1)              # (H*W, 9*Cp)
        return jnp.dot(lhs, w_ref[...], preferred_element_type=jnp.float32)

    # Zero the padded scratch once per grid step; both conv stages only write
    # the interior, so the 1-pixel zero border stays valid for conv1 and conv2.
    pad_ref[...] = jnp.zeros((Hp, Wp, Cp), jnp.float32)

    # ---- conv1 (bn1 scale folded into weights) + bias + relu1 ---------------
    pad_ref[1:H + 1, 1:W + 1, :] = x_ref[0]
    h = jnp.maximum(conv3x3(w1_ref) + b1_ref[...], 0.0)

    # ---- conv2 (bn2 scale folded into weights) + bias ------------------------
    pad_ref[1:H + 1, 1:W + 1, :] = h.reshape(H, W, Cp)
    out = conv3x3(w2_ref) + b2_ref[...]

    # ---- residual add (identity = x, stride=1 / no downsample) + relu2 -------
    out = jnp.maximum(out + x_ref[0].reshape(H * W, Cp), 0.0)
    o_ref[0] = out.reshape(H, W, Cp).astype(o_ref.dtype)


def _fold_bn(gamma, beta, mean, var, eps):
    scale = gamma / jnp.sqrt(var + eps)
    bias = beta - mean * scale
    return scale, bias


@jax.jit
def basic_block_pallas(x, w1, g1, be1, m1, v1, w2, g2, be2, m2, v2):
    """x: (B, C, H, W) NCHW f32. Conv weights in PyTorch (Cout, Cin, 3, 3) layout.
    BN params per conv: gamma, beta, running_mean, running_var (eval mode)."""
    B, C, H, W = x.shape
    Cout = w1.shape[0]
    assert C == Cout, "stride=1 / no-downsample path requires in==out channels"
    Cp = _round_up(max(C, Cout), LANE)            # lane-dense channel dim
    Hp, Wp = H + 2, W + 2

    # NCHW -> NHWC, pad channels up to Cp. Spatial conv padding is applied
    # inside the kernel via the zero-bordered VMEM scratch (no HBM pad op).
    x_nhwc = jnp.transpose(x, (0, 2, 3, 1))
    x_cp = jnp.pad(x_nhwc, ((0, 0), (0, 0), (0, 0), (0, Cp - C)))

    s1, b1 = _fold_bn(g1, be1, m1, v1, BN_EPS)
    s2, b2 = _fold_bn(g2, be2, m2, v2, BN_EPS)

    def prep_w(w, scale):
        # (Cout, Cin, 3, 3) -> (9*Cp, Cp) im2col weights with the BN scale
        # folded along the output-channel axis: X @ (W*s) == s * (X @ W).
        cout, cin = w.shape[0], w.shape[1]
        w_ = jnp.transpose(w, (2, 3, 1, 0)).reshape(9, cin, cout)
        w_ = w_ * scale[None, None, :]
        w_ = jnp.pad(w_, ((0, 0), (0, Cp - cin), (0, Cp - cout)))
        return w_.reshape(9 * Cp, Cp)               # row = tap*Cp + cin

    def prep_b(b):                                  # (Cout,) -> (1, Cp)
        return jnp.pad(b, (0, Cp - b.shape[0])).reshape(1, Cp)

    w1p, w2p = prep_w(w1, s1), prep_w(w2, s2)
    b1p, b2p = prep_b(b1), prep_b(b2)

    # ---- VMEM budget (no double counting, no 32 MiB floor, capped < v7x 64) --
    itemsize = 4
    io_tiles = 2 * 2 * H * W * Cp * itemsize               # x + out, double-buffered
    wgt_bytes = 2 * (9 * Cp * Cp + Cp) * itemsize           # W1+b1, W2+b2 (single copy)
    pad_scratch = Hp * Wp * Cp * itemsize
    tmp_bytes = (9 + 2) * H * W * Cp * itemsize             # im2col LHS + h/out temps
    est = io_tiles + 2 * wgt_bytes + pad_scratch + tmp_bytes
    vmem_limit = min(2 * est + (4 << 20), 48 << 20)

    flops = B * 2 * (2 * H * W * (9 * Cp) * Cp)             # two big-K matmuls / image
    bytes_accessed = (x_cp.size + B * H * W * Cp) * itemsize + wgt_bytes

    out = pl.pallas_call(
        basic_block_kernel,
        out_shape=jax.ShapeDtypeStruct((B, H, W, Cp), x.dtype),
        grid_spec=pltpu.PrefetchScalarGridSpec(
            num_scalar_prefetch=0,
            grid=(B,),                                       # one image per grid step
            in_specs=[
                pl.BlockSpec((1, H, W, Cp), lambda b: (b, 0, 0, 0)),   # x
                pl.BlockSpec((9 * Cp, Cp), lambda b: (0, 0)),          # W1 (resident)
                pl.BlockSpec((1, Cp), lambda b: (0, 0)),               # bn1 bias
                pl.BlockSpec((9 * Cp, Cp), lambda b: (0, 0)),          # W2 (resident)
                pl.BlockSpec((1, Cp), lambda b: (0, 0)),               # bn2 bias
            ],
            out_specs=pl.BlockSpec((1, H, W, Cp), lambda b: (b, 0, 0, 0)),
            scratch_shapes=[pltpu.VMEM((Hp, Wp, Cp), jnp.float32)],
        ),
        compiler_params=pltpu.CompilerParams(
            dimension_semantics=("parallel",),
            vmem_limit_bytes=vmem_limit,
        ),
        cost_estimate=pl.CostEstimate(
            flops=flops, transcendentals=0, bytes_accessed=bytes_accessed),
    )(x_cp, w1p, b1p, w2p, b2p)

    # Drop channel padding, back to NCHW.
    return jnp.transpose(out[..., :C], (0, 3, 1, 2))


def basic_block_reference(x, w1, g1, be1, m1, v1, w2, g2, be2, m2, v2):
    def conv3x3(a, w):
        return jax.lax.conv_general_dilated(
            a, w, window_strides=(1, 1), padding=((1, 1), (1, 1)),
            dimension_numbers=("NCHW", "OIHW", "NCHW"),
            precision=jax.lax.Precision.HIGHEST)

    def bn(a, g, b, m, v):
        s = g / jnp.sqrt(v + BN_EPS)
        return a * s[None, :, None, None] + (b - m * s)[None, :, None, None]

    out = jax.nn.relu(bn(conv3x3(x, w1), g1, be1, m1, v1))
    out = bn(conv3x3(out, w2), g2, be2, m2, v2)
    return jax.nn.relu(out + x)


if __name__ == "__main__":
    # Small shapes consistent with BasicBlock(in_channels=4, out_channels=4).
    B, C, H, W = 2, 4, 16, 16

    key = jax.random.PRNGKey(0)
    ks = jax.random.split(key, 11)

    x = jax.random.normal(ks[0], (B, C, H, W), dtype=jnp.float32)

    lim = 1.0 / jnp.sqrt(C * 9.0)  # Conv2d default init range
    w1 = jax.random.uniform(ks[1], (C, C, 3, 3), jnp.float32, -lim, lim)
    w2 = jax.random.uniform(ks[2], (C, C, 3, 3), jnp.float32, -lim, lim)

    g1 = jax.random.uniform(ks[3], (C,), jnp.float32, 0.5, 1.5)
    be1 = jax.random.uniform(ks[4], (C,), jnp.float32, -0.5, 0.5)
    m1 = jax.random.uniform(ks[5], (C,), jnp.float32, -0.5, 0.5)
    v1 = jax.random.uniform(ks[6], (C,), jnp.float32, 0.5, 1.5)

    g2 = jax.random.uniform(ks[7], (C,), jnp.float32, 0.5, 1.5)
    be2 = jax.random.uniform(ks[8], (C,), jnp.float32, -0.5, 0.5)
    m2 = jax.random.uniform(ks[9], (C,), jnp.float32, -0.5, 0.5)
    v2 = jax.random.uniform(ks[10], (C,), jnp.float32, 0.5, 1.5)

    out = basic_block_pallas(x, w1, g1, be1, m1, v1, w2, g2, be2, m2, v2)
    out = jax.block_until_ready(out)

    ref = basic_block_reference(x, w1, g1, be1, m1, v1, w2, g2, be2, m2, v2)
    assert out.shape == (B, C, H, W)
    assert jnp.allclose(out, ref, atol=2e-3, rtol=2e-3), "mismatch vs reference"

    print("KERNEL_OK")
</pallas_src>

<mosaic_0001>
module attributes {stable_mosaic.version = 11 : i64} {
  func.func @basic_block_kernel(%arg0: i32, %arg1: memref<1x16x16x128xf32, #tpu.memory_space<vmem>>, %arg2: memref<1152x128xf32, #tpu.memory_space<vmem>>, %arg3: memref<1x128xf32, #tpu.memory_space<vmem>>, %arg4: memref<1152x128xf32, #tpu.memory_space<vmem>>, %arg5: memref<1x128xf32, #tpu.memory_space<vmem>>, %arg6: memref<1x16x16x128xf32, #tpu.memory_space<vmem>>, %arg7: memref<18x18x128xf32, #tpu.memory_space<vmem>>) attributes {dimension_semantics = [#tpu.dimension_semantics<parallel>], iteration_bounds = array<i64: 2>, scalar_prefetch = 0 : i64, scratch_operands = 1 : i64, tpu.core_type = #tpu.core_type<tc>, window_params = [{transform_indices = @transform_0, window_bounds = array<i64: 1, 16, 16, 128>}, {pipeline_mode = #tpu.pipeline_mode<synchronous>, transform_indices = @transform_1, window_bounds = array<i64: 1152, 128>}, {pipeline_mode = #tpu.pipeline_mode<synchronous>, transform_indices = @transform_2, window_bounds = array<i64: 1, 128>}, {pipeline_mode = #tpu.pipeline_mode<synchronous>, transform_indices = @transform_3, window_bounds = array<i64: 1152, 128>}, {pipeline_mode = #tpu.pipeline_mode<synchronous>, transform_indices = @transform_4, window_bounds = array<i64: 1, 128>}, {transform_indices = @transform_5, window_bounds = array<i64: 1, 16, 16, 128>}]} {
    %cst = arith.constant 0.000000e+00 : f32
    %0 = vector.broadcast %cst : f32 to vector<18x18x128xf32>
    %c0 = arith.constant 0 : index
    %c0_0 = arith.constant 0 : index
    %c0_1 = arith.constant 0 : index
    %1 = vector.load %arg7[%c0, %c0_0, %c0_1] : memref<18x18x128xf32, #tpu.memory_space<vmem>>, vector<18x18x128xf32>
    tpu.vector_store %arg7[%c0, %c0_0, %c0_1], %0 {strides = array<i32>} : memref<18x18x128xf32, #tpu.memory_space<vmem>>, vector<18x18x128xf32>,
    %c0_2 = arith.constant 0 : index
    %c0_3 = arith.constant 0 : index
    %c0_4 = arith.constant 0 : index
    %c0_5 = arith.constant 0 : index
    %2 = vector.load %arg1[%c0_2, %c0_3, %c0_4, %c0_5] : memref<1x16x16x128xf32, #tpu.memory_space<vmem>>, vector<1x16x16x128xf32>
    %3 = vector.shape_cast %2 : vector<1x16x16x128xf32> to vector<16x16x128xf32>
    %c1 = arith.constant 1 : index
    %c1_6 = arith.constant 1 : index
    %c0_7 = arith.constant 0 : index
    %4 = vector.load %arg7[%c1, %c1_6, %c0_7] : memref<18x18x128xf32, #tpu.memory_space<vmem>>, vector<16x16x128xf32>
    tpu.vector_store %arg7[%c1, %c1_6, %c0_7], %3 {strides = array<i32>} : memref<18x18x128xf32, #tpu.memory_space<vmem>>, vector<16x16x128xf32>,
    %c0_8 = arith.constant 0 : index
    %c0_9 = arith.constant 0 : index
    %c0_10 = arith.constant 0 : index
    %5 = vector.load %arg7[%c0_8, %c0_9, %c0_10] : memref<18x18x128xf32, #tpu.memory_space<vmem>>, vector<16x16x128xf32>
    %6 = vector.shape_cast %5 : vector<16x16x128xf32> to vector<256x128xf32>
    %c0_11 = arith.constant 0 : index
    %c1_12 = arith.constant 1 : index
    %c0_13 = arith.constant 0 : index
    %7 = vector.load %arg7[%c0_11, %c1_12, %c0_13] : memref<18x18x128xf32, #tpu.memory_space<vmem>>, vector<16x16x128xf32>
    %8 = vector.shape_cast %7 : vector<16x16x128xf32> to vector<256x128xf32>
    %c0_14 = arith.constant 0 : index
    %c2 = arith.constant 2 : index
    %c0_15 = arith.constant 0 : index
    %9 = vector.load %arg7[%c0_14, %c2, %c0_15] : memref<18x18x128xf32, #tpu.memory_space<vmem>>, vector<16x16x128xf32>
    %10 = vector.shape_cast %9 : vector<16x16x128xf32> to vector<256x128xf32>
    %c1_16 = arith.constant 1 : index
    %c0_17 = arith.constant 0 : index
    %c0_18 = arith.constant 0 : index
    %11 = vector.load %arg7[%c1_16, %c0_17, %c0_18] : memref<18x18x128xf32, #tpu.memory_space<vmem>>, vector<16x16x128xf32>
    %12 = vector.shape_cast %11 : vector<16x16x128xf32> to vector<256x128xf32>
    %c1_19 = arith.constant 1 : index
    %c1_20 = arith.constant 1 : index
    %c0_21 = arith.constant 0 : index
    %13 = vector.load %arg7[%c1_19, %c1_20, %c0_21] : memref<18x18x128xf32, #tpu.memory_space<vmem>>, vector<16x16x128xf32>
    %14 = vector.shape_cast %13 : vector<16x16x128xf32> to vector<256x128xf32>
    %c1_22 = arith.constant 1 : index
    %c2_23 = arith.constant 2 : index
    %c0_24 = arith.constant 0 : index
    %15 = vector.load %arg7[%c1_22, %c2_23, %c0_24] : memref<18x18x128xf32, #tpu.memory_space<vmem>>, vector<16x16x128xf32>
    %16 = vector.shape_cast %15 : vector<16x16x128xf32> to vector<256x128xf32>
    %c2_25 = arith.constant 2 : index
    %c0_26 = arith.constant 0 : index
    %c0_27 = arith.constant 0 : index
    %17 = vector.load %arg7[%c2_25, %c0_26, %c0_27] : memref<18x18x128xf32, #tpu.memory_space<vmem>>, vector<16x16x128xf32>
    %18 = vector.shape_cast %17 : vector<16x16x128xf32> to vector<256x128xf32>
    %c2_28 = arith.constant 2 : index
    %c1_29 = arith.constant 1 : index
    %c0_30 = arith.constant 0 : index
    %19 = vector.load %arg7[%c2_28, %c1_29, %c0_30] : memref<18x18x128xf32, #tpu.memory_space<vmem>>, vector<16x16x128xf32>
    %20 = vector.shape_cast %19 : vector<16x16x128xf32> to vector<256x128xf32>
    %c2_31 = arith.constant 2 : index
    %c2_32 = arith.constant 2 : index
    %c0_33 = arith.constant 0 : index
    %21 = vector.load %arg7[%c2_31, %c2_32, %c0_33] : memref<18x18x128xf32, #tpu.memory_space<vmem>>, vector<16x16x128xf32>
    %22 = vector.shape_cast %21 : vector<16x16x128xf32> to vector<256x128xf32>
    %23 = tpu.concatenate %6, %8, %10, %12, %14, %16, %18, %20, %22 in 1 : vector<256x128xf32>, vector<256x128xf32>, vector<256x128xf32>, vector<256x128xf32>, vector<256x128xf32>, vector<256x128xf32>, vector<256x128xf32>, vector<256x128xf32>, vector<256x128xf32> -> vector<256x1152xf32>
    %c0_34 = arith.constant 0 : index
    %c0_35 = arith.constant 0 : index
    %24 = vector.load %arg2[%c0_34, %c0_35] : memref<1152x128xf32, #tpu.memory_space<vmem>>, vector<1152x128xf32>
    %cst_36 = arith.constant dense<0.000000e+00> : vector<256x128xf32>
    %25 = tpu.matmul %23, %24, %cst_36 {dimension_numbers = #tpu.dot_dimension_numbers<[1], [0], [0], [1], [0, 0, 1, 1], [], []>} : vector<256x1152xf32>, vector<1152x128xf32>, vector<256x128xf32> -> vector<256x128xf32>
    %c0_37 = arith.constant 0 : index
    %c0_38 = arith.constant 0 : index
    %26 = vector.load %arg3[%c0_37, %c0_38] : memref<1x128xf32, #tpu.memory_space<vmem>>, vector<1x128xf32>
    %27 = vector.broadcast %26 : vector<1x128xf32> to vector<256x128xf32>
    %28 = arith.addf %25, %27 : vector<256x128xf32>
    %cst_39 = arith.constant 0.000000e+00 : f32
    %29 = vector.broadcast %cst_39 : f32 to vector<256x128xf32>
    %30 = arith.maximumf %28, %29 : vector<256x128xf32>
    %31 = vector.shape_cast %30 : vector<256x128xf32> to vector<16x16x128xf32>
    %c1_40 = arith.constant 1 : index
    %c1_41 = arith.constant 1 : index
    %c0_42 = arith.constant 0 : index
    %32 = vector.load %arg7[%c1_40, %c1_41, %c0_42] : memref<18x18x128xf32, #tpu.memory_space<vmem>>, vector<16x16x128xf32>
    tpu.vector_store %arg7[%c1_40, %c1_41, %c0_42], %31 {strides = array<i32>} : memref<18x18x128xf32, #tpu.memory_space<vmem>>, vector<16x16x128xf32>,
    %c0_43 = arith.constant 0 : index
    %c0_44 = arith.constant 0 : index
    %c0_45 = arith.constant 0 : index
    %33 = vector.load %arg7[%c0_43, %c0_44, %c0_45] : memref<18x18x128xf32, #tpu.memory_space<vmem>>, vector<16x16x128xf32>
    %34 = vector.shape_cast %33 : vector<16x16x128xf32> to vector<256x128xf32>
    %c0_46 = arith.constant 0 : index
    %c1_47 = arith.constant 1 : index
    %c0_48 = arith.constant 0 : index
    %35 = vector.load %arg7[%c0_46, %c1_47, %c0_48] : memref<18x18x128xf32, #tpu.memory_space<vmem>>, vector<16x16x128xf32>
    %36 = vector.shape_cast %35 : vector<16x16x128xf32> to vector<256x128xf32>
    %c0_49 = arith.constant 0 : index
    %c2_50 = arith.constant 2 : index
    %c0_51 = arith.constant 0 : index
    %37 = vector.load %arg7[%c0_49, %c2_50, %c0_51] : memref<18x18x128xf32, #tpu.memory_space<vmem>>, vector<16x16x128xf32>
    %38 = vector.shape_cast %37 : vector<16x16x128xf32> to vector<256x128xf32>
    %c1_52 = arith.constant 1 : index
    %c0_53 = arith.constant 0 : index
    %c0_54 = arith.constant 0 : index
    %39 = vector.load %arg7[%c1_52, %c0_53, %c0_54] : memref<18x18x128xf32, #tpu.memory_space<vmem>>, vector<16x16x128xf32>
    %40 = vector.shape_cast %39 : vector<16x16x128xf32> to vector<256x128xf32>
    %c1_55 = arith.constant 1 : index
    %c1_56 = arith.constant 1 : index
    %c0_57 = arith.constant 0 : index
    %41 = vector.load %arg7[%c1_55, %c1_56, %c0_57] : memref<18x18x128xf32, #tpu.memory_space<vmem>>, vector<16x16x128xf32>
    %42 = vector.shape_cast %41 : vector<16x16x128xf32> to vector<256x128xf32>
    %c1_58 = arith.constant 1 : index
    %c2_59 = arith.constant 2 : index
    %c0_60 = arith.constant 0 : index
    %43 = vector.load %arg7[%c1_58, %c2_59, %c0_60] : memref<18x18x128xf32, #tpu.memory_space<vmem>>, vector<16x16x128xf32>
    %44 = vector.shape_cast %43 : vector<16x16x128xf32> to vector<256x128xf32>
    %c2_61 = arith.constant 2 : index
    %c0_62 = arith.constant 0 : index
    %c0_63 = arith.constant 0 : index
    %45 = vector.load %arg7[%c2_61, %c0_62, %c0_63] : memref<18x18x128xf32, #tpu.memory_space<vmem>>, vector<16x16x128xf32>
    %46 = vector.shape_cast %45 : vector<16x16x128xf32> to vector<256x128xf32>
    %c2_64 = arith.constant 2 : index
    %c1_65 = arith.constant 1 : index
    %c0_66 = arith.constant 0 : index
    %47 = vector.load %arg7[%c2_64, %c1_65, %c0_66] : memref<18x18x128xf32, #tpu.memory_space<vmem>>, vector<16x16x128xf32>
    %48 = vector.shape_cast %47 : vector<16x16x128xf32> to vector<256x128xf32>
    %c2_67 = arith.constant 2 : index
    %c2_68 = arith.constant 2 : index
    %c0_69 = arith.constant 0 : index
    %49 = vector.load %arg7[%c2_67, %c2_68, %c0_69] : memref<18x18x128xf32, #tpu.memory_space<vmem>>, vector<16x16x128xf32>
    %50 = vector.shape_cast %49 : vector<16x16x128xf32> to vector<256x128xf32>
    %51 = tpu.concatenate %34, %36, %38, %40, %42, %44, %46, %48, %50 in 1 : vector<256x128xf32>, vector<256x128xf32>, vector<256x128xf32>, vector<256x128xf32>, vector<256x128xf32>, vector<256x128xf32>, vector<256x128xf32>, vector<256x128xf32>, vector<256x128xf32> -> vector<256x1152xf32>
    %c0_70 = arith.constant 0 : index
    %c0_71 = arith.constant 0 : index
    %52 = vector.load %arg4[%c0_70, %c0_71] : memref<1152x128xf32, #tpu.memory_space<vmem>>, vector<1152x128xf32>
    %cst_72 = arith.constant dense<0.000000e+00> : vector<256x128xf32>
    %53 = tpu.matmul %51, %52, %cst_72 {dimension_numbers = #tpu.dot_dimension_numbers<[1], [0], [0], [1], [0, 0, 1, 1], [], []>} : vector<256x1152xf32>, vector<1152x128xf32>, vector<256x128xf32> -> vector<256x128xf32>
    %c0_73 = arith.constant 0 : index
    %c0_74 = arith.constant 0 : index
    %54 = vector.load %arg5[%c0_73, %c0_74] : memref<1x128xf32, #tpu.memory_space<vmem>>, vector<1x128xf32>
    %55 = vector.broadcast %54 : vector<1x128xf32> to vector<256x128xf32>
    %56 = arith.addf %53, %55 : vector<256x128xf32>
    %c0_75 = arith.constant 0 : index
    %c0_76 = arith.constant 0 : index
    %c0_77 = arith.constant 0 : index
    %c0_78 = arith.constant 0 : index
    %57 = vector.load %arg1[%c0_75, %c0_76, %c0_77, %c0_78] : memref<1x16x16x128xf32, #tpu.memory_space<vmem>>, vector<1x16x16x128xf32>
    %58 = vector.shape_cast %57 : vector<1x16x16x128xf32> to vector<16x16x128xf32>
    %59 = vector.shape_cast %58 : vector<16x16x128xf32> to vector<256x128xf32>
    %60 = arith.addf %56, %59 : vector<256x128xf32>
    %cst_79 = arith.constant 0.000000e+00 : f32
    %61 = vector.broadcast %cst_79 : f32 to vector<256x128xf32>
    %62 = arith.maximumf %60, %61 : vector<256x128xf32>
    %63 = vector.shape_cast %62 : vector<256x128xf32> to vector<16x16x128xf32>
    %c0_80 = arith.constant 0 : index
    %c0_81 = arith.constant 0 : index
    %c0_82 = arith.constant 0 : index
    %c0_83 = arith.constant 0 : index
    %64 = vector.load %arg6[%c0_80, %c0_81, %c0_82, %c0_83] : memref<1x16x16x128xf32, #tpu.memory_space<vmem>>, vector<1x16x16x128xf32>
    %65 = vector.shape_cast %64 : vector<1x16x16x128xf32> to vector<16x16x128xf32>
    %66 = vector.shape_cast %63 : vector<16x16x128xf32> to vector<1x16x16x128xf32>
    tpu.vector_store %arg6[%c0_80, %c0_81, %c0_82, %c0_83], %66 {strides = array<i32>} : memref<1x16x16x128xf32, #tpu.memory_space<vmem>>, vector<1x16x16x128xf32>,
    return
  }
  func.func @transform_0(%arg0: i32) -> (i32, i32, i32, i32) {
    %c0_i32 = arith.constant 0 : i32
    %c0_i32_0 = arith.constant 0 : i32
    %c0_i32_1 = arith.constant 0 : i32
    %c0_i32_2 = arith.constant 0 : i32
    return %arg0, %c0_i32, %c0_i32_0, %c0_i32_1 : i32, i32, i32, i32
  }
  func.func @transform_1(%arg0: i32) -> (i32, i32) {
    %c0_i32 = arith.constant 0 : i32
    %c0_i32_0 = arith.constant 0 : i32
    %c0_i32_1 = arith.constant 0 : i32
    return %c0_i32, %c0_i32_0 : i32, i32
  }
  func.func @transform_2(%arg0: i32) -> (i32, i32) {
    %c0_i32 = arith.constant 0 : i32
    %c0_i32_0 = arith.constant 0 : i32
    %c0_i32_1 = arith.constant 0 : i32
    return %c0_i32, %c0_i32_0 : i32, i32
  }
  func.func @transform_3(%arg0: i32) -> (i32, i32) {
    %c0_i32 = arith.constant 0 : i32
    %c0_i32_0 = arith.constant 0 : i32
    %c0_i32_1 = arith.constant 0 : i32
    return %c0_i32, %c0_i32_0 : i32, i32
  }
  func.func @transform_4(%arg0: i32) -> (i32, i32) {
    %c0_i32 = arith.constant 0 : i32
    %c0_i32_0 = arith.constant 0 : i32
    %c0_i32_1 = arith.constant 0 : i32
    return %c0_i32, %c0_i32_0 : i32, i32
  }
  func.func @transform_5(%arg0: i32) -> (i32, i32, i32, i32) {
    %c0_i32 = arith.constant 0 : i32
    %c0_i32_0 = arith.constant 0 : i32
    %c0_i32_1 = arith.constant 0 : i32
    %c0_i32_2 = arith.constant 0 : i32
    return %arg0, %c0_i32, %c0_i32_0, %c0_i32_1 : i32, i32, i32, i32
  }
}

</mosaic_0001>

<llo_original>
// kernel: basic_block_pallas.1
$region0: #{basic_block_pallas.1}
  #allocation0 [shape = 'u32[]', space=smem, size = 0x4, offset = 0x4, fixed_abs, tag = 'smem constant byte address 0x4 - core index']
  #allocation1 [shape = 'u32[144,128]{1,0:T(1,128)}', space=vmem, size = 0x12000, scoped, tag = 'internal scratch']
  #allocation2 [shape = 'f32[18,18,128]{2,1,0:T(8,128)}', space=vmem, size = 0x36000, scoped, tag = 'scratch operand']
  %s0 = inlined_call_operand.vmem [shape: f32[2,16,16,128], index: 0, kind: input, shape index: {}]
  %s1 = inlined_call_operand.vmem [shape: f32[1152,128], index: 1, kind: input, shape index: {}]
  %s2 = inlined_call_operand.vmem [shape: f32[1,128], index: 2, kind: input, shape index: {}]
  %s3 = inlined_call_operand.vmem [shape: f32[1152,128], index: 3, kind: input, shape index: {}]
  %s4 = inlined_call_operand.vmem [shape: f32[1,128], index: 4, kind: input, shape index: {}]
  %s5 = inlined_call_operand.vmem [shape: f32[2,16,16,128], index: 5, kind: output, shape index: {}]
  %s6 = sld [smem:[#allocation0]]
  $region53: #{basic_block_pallas.1} parent=0
    _
  %s8 = ssub.s32 1, %s6
  %s9 = scalar_select 0, %s8, %s6
  loop: start=0, step=1, limit=4
  $region2: #{basic_block_pallas.1} parent=0 // loop_pre_header
    _
  $region3: #{basic_block_pallas.1} parent=0 // loop_header
    %s11 = sphi 0, %s15
    %p12 = scmp.ge.s32.totalorder %s11, 4
    %s21 = sphi 0, %s23
    %s24 = sphi 0, %s21
    %s25 = sphi 0, %s24
    %s41 = sphi 0, %s25
    %s45 = sphi 0, %s45
    %s47 = sphi 0, %s45
    %s48 = sphi 0, %s47
    %s62 = sphi 0, %s48
    %s66 = sphi 0, %s66
    %s68 = sphi 0, %s66
    %s69 = sphi 0, %s68
    %s83 = sphi 0, %s69
    %s87 = sphi 0, %s87
    %s89 = sphi 0, %s87
    %s90 = sphi 0, %s89
    %s104 = sphi 0, %s90
    %s108 = sphi 0, %s108
    %s110 = sphi 0, %s108
    %s111 = sphi 0, %s110
    %s125 = sphi 0, %s111
    %s131 = sphi 0, %s133
    %s134 = sphi 0, %s131
    %s135 = sphi 0, %s134
    %s151 = sphi 0, %s135
  $region4: #{basic_block_pallas.1} parent=0 // loop_header_branch
    %14 = sbr.rel (%p12) target = $region8
  $region5: #{basic_block_pallas.1} parent=0 // loop_body
    %s16 = ssub.s32 %s11, 1
    %s17 = ssub.s32 %s11, 2
    %s18 = sadd.s32 %s11, 1
    %s19 = ssub.s32 %s11, %s18
    %p20 = scmp.eq.s32.totalorder %s19, 0
    %s22 = sadd.s32 %s21, 1
    %s23 = scalar_select %p20, %s21, %s22
    %p26 = pneg %p20
    %p27 = scmp.eq.s32.totalorder %s11, 1
    %p28 = por %p26, %p27
    %p29 = scmp.ne.s32.totalorder %s21, %s24
    %p30 = scmp.eq.s32.totalorder %s11, 0
    %p31 = por %p29, %p30
    %p32 = scmp.ne.s32.totalorder %s21, %s24
    %p33 = scmp.eq.s32.totalorder %s16, 1
    %p34 = por %p32, %p33
    %p35 = scmp.ne.s32.totalorder %s24, %s25
    %p36 = scmp.eq.s32.totalorder %s16, 0
    %p37 = por %p35, %p36
    %p38 = scmp.ne.s32.totalorder %s24, %s25
    %p39 = scmp.eq.s32.totalorder %s17, 1
    %p40 = por %p38, %p39
    %p42 = scmp.ne.s32.totalorder %s25, %s41
    %p43 = scmp.eq.s32.totalorder %s17, 0
    %p44 = por %p42, %p43
    %s46 = sadd.s32 %s45, 1
    %p49 = scmp.eq.s32.totalorder %s11, 1
    %p50 = scmp.ne.s32.totalorder %s45, %s47
    %p51 = scmp.eq.s32.totalorder %s11, 0
    %p52 = por %p50, %p51
    %p53 = scmp.ne.s32.totalorder %s45, %s47
    %p54 = scmp.eq.s32.totalorder %s16, 1
    %p55 = por %p53, %p54
    %p56 = scmp.ne.s32.totalorder %s47, %s48
    %p57 = scmp.eq.s32.totalorder %s16, 0
    %p58 = por %p56, %p57
    %p59 = scmp.ne.s32.totalorder %s47, %s48
    %p60 = scmp.eq.s32.totalorder %s17, 1
    %p61 = por %p59, %p60
    %p63 = scmp.ne.s32.totalorder %s48, %s62
    %p64 = scmp.eq.s32.totalorder %s17, 0
    %p65 = por %p63, %p64
    %s67 = sadd.s32 %s66, 1
    %p70 = scmp.eq.s32.totalorder %s11, 1
    %p71 = scmp.ne.s32.totalorder %s66, %s68
    %p72 = scmp.eq.s32.totalorder %s11, 0
    %p73 = por %p71, %p72
    %p74 = scmp.ne.s32.totalorder %s66, %s68
    %p75 = scmp.eq.s32.totalorder %s16, 1
    %p76 = por %p74, %p75
    %p77 = scmp.ne.s32.totalorder %s68, %s69
    %p78 = scmp.eq.s32.totalorder %s16, 0
    %p79 = por %p77, %p78
    %p80 = scmp.ne.s32.totalorder %s68, %s69
    %p81 = scmp.eq.s32.totalorder %s17, 1
    %p82 = por %p80, %p81
    %p84 = scmp.ne.s32.totalorder %s69, %s83
    %p85 = scmp.eq.s32.totalorder %s17, 0
    %p86 = por %p84, %p85
    %s88 = sadd.s32 %s87, 1
    %p91 = scmp.eq.s32.totalorder %s11, 1
    %p92 = scmp.ne.s32.totalorder %s87, %s89
    %p93 = scmp.eq.s32.totalorder %s11, 0
    %p94 = por %p92, %p93
    %p95 = scmp.ne.s32.totalorder %s87, %s89
    %p96 = scmp.eq.s32.totalorder %s16, 1
    %p97 = por %p95, %p96
    %p98 = scmp.ne.s32.totalorder %s89, %s90
    %p99 = scmp.eq.s32.totalorder %s16, 0
    %p100 = por %p98, %p99
    %p101 = scmp.ne.s32.totalorder %s89, %s90
    %p102 = scmp.eq.s32.totalorder %s17, 1
    %p103 = por %p101, %p102
    %p105 = scmp.ne.s32.totalorder %s90, %s104
    %p106 = scmp.eq.s32.totalorder %s17, 0
    %p107 = por %p105, %p106
    %s109 = sadd.s32 %s108, 1
    %p112 = scmp.eq.s32.totalorder %s11, 1
    %p113 = scmp.ne.s32.totalorder %s108, %s110
    %p114 = scmp.eq.s32.totalorder %s11, 0
    %p115 = por %p113, %p114
    %p116 = scmp.ne.s32.totalorder %s108, %s110
    %p117 = scmp.eq.s32.totalorder %s16, 1
    %p118 = por %p116, %p117
    %p119 = scmp.ne.s32.totalorder %s110, %s111
    %p120 = scmp.eq.s32.totalorder %s16, 0
    %p121 = por %p119, %p120
    %p122 = scmp.ne.s32.totalorder %s110, %s111
    %p123 = scmp.eq.s32.totalorder %s17, 1
    %p124 = por %p122, %p123
    %p126 = scmp.ne.s32.totalorder %s111, %s125
    %p127 = scmp.eq.s32.totalorder %s17, 0
    %p128 = por %p126, %p127
    %s129 = ssub.s32 %s11, %s18
    %p130 = scmp.eq.s32.totalorder %s129, 0
    %s132 = sadd.s32 %s131, 1
    %s133 = scalar_select %p130, %s131, %s132
    %p136 = pneg %p130
    %p137 = scmp.eq.s32.totalorder %s11, 1
    %p138 = por %p136, %p137
    %p139 = scmp.ne.s32.totalorder %s131, %s134
    %p140 = scmp.eq.s32.totalorder %s11, 0
    %p141 = por %p139, %p140
    %p142 = scmp.ne.s32.totalorder %s131, %s134
    %p143 = scmp.eq.s32.totalorder %s16, 1
    %p144 = por %p142, %p143
    %p145 = scmp.ne.s32.totalorder %s134, %s135
    %p146 = scmp.eq.s32.totalorder %s16, 0
    %p147 = por %p145, %p146
    %p148 = scmp.ne.s32.totalorder %s134, %s135
    %p149 = scmp.eq.s32.totalorder %s17, 1
    %p150 = por %p148, %p149
    %p152 = scmp.ne.s32.totalorder %s135, %s151
    %p153 = scmp.eq.s32.totalorder %s17, 0
    %p154 = por %p152, %p153
    %p155 = scmp.le.s32.totalorder 1, %s11
    %p156 = scmp.lt.s32.totalorder %s11, 3
    %p157 = pnand %p155, %p156
    %p158 = pneg %p157
    // Predicated region
    $region9: #{basic_block_pallas.1} parent=5 // pred_check
      _
    $region10: #{basic_block_pallas.1} parent=5 // pred_check_branch
      %160 = sbr.rel (%p157) target = $region12
    $region11: #{basic_block_pallas.1} parent=5 // pred_region
      %s161 = ssub.s32 %s11, 1
      // Predicated region
      $region13: #{basic_block_pallas.1} parent=11 // pred_check
        %p162 = pneg %p58
      $region14: #{basic_block_pallas.1} parent=11 // pred_check_branch
        %164 = sbr.rel (%p162) target = $region16
      $region15: #{basic_block_pallas.1} parent=11 // pred_region
        _
      $region16: #{basic_block_pallas.1} parent=11 // pred_fallthru
        _
      // Predicated region
      $region17: #{basic_block_pallas.1} parent=11 // pred_check
        %p165 = pneg %p79
      $region18: #{basic_block_pallas.1} parent=11 // pred_check_branch
        %167 = sbr.rel (%p165) target = $region20
      $region19: #{basic_block_pallas.1} parent=11 // pred_region
        _
      $region20: #{basic_block_pallas.1} parent=11 // pred_fallthru
        _
      // Predicated region
      $region21: #{basic_block_pallas.1} parent=11 // pred_check
        %p168 = pneg %p100
      $region22: #{basic_block_pallas.1} parent=11 // pred_check_branch
        %170 = sbr.rel (%p168) target = $region24
      $region23: #{basic_block_pallas.1} parent=11 // pred_region
        _
      $region24: #{basic_block_pallas.1} parent=11 // pred_fallthru
        _
      // Predicated region
      $region25: #{basic_block_pallas.1} parent=11 // pred_check
        %p171 = pneg %p121
      $region26: #{basic_block_pallas.1} parent=11 // pred_check_branch
        %173 = sbr.rel (%p171) target = $region28
      $region27: #{basic_block_pallas.1} parent=11 // pred_region
        _
      $region28: #{basic_block_pallas.1} parent=11 // pred_fallthru
        _
    $region12: #{basic_block_pallas.1} parent=5 // pred_fallthru
      _
    %p174 = scmp.lt.s32.totalorder %s11, 2
    // Predicated region
    $region29: #{basic_block_pallas.1} parent=5 // pred_check
      %p175 = pneg %p174
    $region30: #{basic_block_pallas.1} parent=5 // pred_check_branch
      %177 = sbr.rel (%p175) target = $region32
    $region31: #{basic_block_pallas.1} parent=5 // pred_region
      // Predicated region
      $region33: #{basic_block_pallas.1} parent=31 // pred_check
        %p178 = pneg %p31
      $region34: #{basic_block_pallas.1} parent=31 // pred_check_branch
        %180 = sbr.rel (%p178) target = $region36
      $region35: #{basic_block_pallas.1} parent=31 // pred_region
        %p181 = scmp.lt.s32.totalorder %s11, 1
        %s182 = scalar_select %p181, %s11, 1
        %s183 = smul.addr %s182, 32
        %s184 = smul.addr %s183, 8
        %s185 = scalar_lea.vmem %s0, %s184
      $region36: #{basic_block_pallas.1} parent=31 // pred_fallthru
        _
    $region32: #{basic_block_pallas.1} parent=5 // pred_fallthru
      _
    %p186 = scmp.le.s32.totalorder 1, %s11
    %p187 = scmp.lt.s32.totalorder %s11, 3
    %p188 = pnand %p186, %p187
    %p189 = pneg %p188
    // Predicated region
    $region37: #{basic_block_pallas.1} parent=5 // pred_check
      _
    $region38: #{basic_block_pallas.1} parent=5 // pred_check_branch
      %191 = sbr.rel (%p188) target = $region40
    $region39: #{basic_block_pallas.1} parent=5 // pred_region
      %s192 = ssub.s32 %s11, 1
      %p193 = scmp.lt.s32.totalorder %s16, 1
      %s194 = scalar_select %p193, %s16, 1
      %s195 = smul.addr %s194, 32
      %s196 = smul.addr %s195, 8
      %s197 = scalar_lea.vmem %s0, %s196
      %p198 = pneg %p37
      %p199 = pneg %p34
      %p200 = pneg %p58
      %p201 = pneg %p55
      %p202 = pneg %p79
      %p203 = pneg %p76
      %p204 = pneg %p100
      %p205 = pneg %p97
      %p206 = pneg %p121
      %p207 = pneg %p118
      %p208 = pneg %p147
      %p209 = pneg %p144
      %p210 = scmp.lt.s32.totalorder %s16, 1
      %s211 = scalar_select %p210, %s16, 1
      %s212 = smul.addr %s211, 32
      %s213 = smul.addr %s212, 8
      %s214 = scalar_lea.vmem %s5, %s213
      %p215 = scmp.lt.s32.totalorder %s16, 1
      %s216 = scalar_select %p215, %s16, 1
      %s217 = smul.addr %s216, 32
      %s218 = smul.addr %s217, 8
      %s219 = scalar_lea.vmem %s0, %s218
      %p220 = scmp.lt.s32.totalorder %s16, 1
      %s221 = scalar_select %p220, %s16, 1
      %s222 = smul.addr %s221, 32
      %s223 = smul.addr %s222, 8
      %s224 = scalar_lea.vmem %s5, %s223
      %225 = vst [vmem:[#allocation2] sm:$0xff] 0.0
      %226 = vst [vmem:[#allocation2 + $0x8] sm:$0xff] 0.0
      %227 = vst [vmem:[#allocation2 + $0x10] sm:$0x3] 0.0
      %228 = vst [vmem:[#allocation2 + $0x18] sm:$0xff] 0.0
      %229 = vst [vmem:[#allocation2 + $0x20] sm:$0xff] 0.0
      %230 = vst [vmem:[#allocation2 + $0x28] sm:$0x3] 0.0
      %231 = vst [vmem:[#allocation2 + $0x30] sm:$0xff] 0.0
      %232 = vst [vmem:[#allocation2 + $0x38] sm:$0xff] 0.0
      %233 = vst [vmem:[#allocation2 + $0x40] sm:$0x3] 0.0
      %234 = vst [vmem:[#allocation2 + $0x48] sm:$0xff] 0.0
      %235 = vst [vmem:[#allocation2 + $0x50] sm:$0xff] 0.0
      %236 = vst [vmem:[#allocation2 + $0x58] sm:$0x3] 0.0
      %237 = vst [vmem:[#allocation2 + $0x60] sm:$0xff] 0.0
      %238 = vst [vmem:[#allocation2 + $0x68] sm:$0xff] 0.0
      %239 = vst [vmem:[#allocation2 + $0x70] sm:$0x3] 0.0
      %240 = vst [vmem:[#allocation2 + $0x78] sm:$0xff] 0.0
      %241 = vst [vmem:[#allocation2 + $0x80] sm:$0xff] 0.0
      %242 = vst [vmem:[#allocation2 + $0x88] sm:$0x3] 0.0
      %243 = vst [vmem:[#allocation2 + $0x90] sm:$0xff] 0.0
      %244 = vst [vmem:[#allocation2 + $0x98] sm:$0xff] 0.0
      %245 = vst [vmem:[#allocation2 + $0xa0] sm:$0x3] 0.0
      %246 = vst [vmem:[#allocation2 + $0xa8] sm:$0xff] 0.0
      %247 = vst [vmem:[#allocation2 + $0xb0] sm:$0xff] 0.0
      %248 = vst [vmem:[#allocation2 + $0xb8] sm:$0x3] 0.0
      %249 = vst [vmem:[#allocation2 + $0xc0] sm:$0xff] 0.0
      %250 = vst [vmem:[#allocation2 + $0xc8] sm:$0xff] 0.0
      %251 = vst [vmem:[#allocation2 + $0xd0] sm:$0x3] 0.0
      %252 = vst [vmem:[#allocation2 + $0xd8] sm:$0xff] 0.0
      %253 = vst [vmem:[#allocation2 + $0xe0] sm:$0xff] 0.0
      %254 = vst [vmem:[#allocation2 + $0xe8] sm:$0x3] 0.0
      %255 = vst [vmem:[#allocation2 + $0xf0] sm:$0xff] 0.0
      %256 = vst [vmem:[#allocation2 + $0xf8] sm:$0xff] 0.0
      %257 = vst [vmem:[#allocation2 + $0x100] sm:$0x3] 0.0
      %258 = vst [vmem:[#allocation2 + $0x108] sm:$0xff] 0.0
      %259 = vst [vmem:[#allocation2 + $0x110] sm:$0xff] 0.0
      %260 = vst [vmem:[#allocation2 + $0x118] sm:$0x3] 0.0
      %261 = vst [vmem:[#allocation2 + $0x120] sm:$0xff] 0.0
      %262 = vst [vmem:[#allocation2 + $0x128] sm:$0xff] 0.0
      %263 = vst [vmem:[#allocation2 + $0x130] sm:$0x3] 0.0
      %264 = vst [vmem:[#allocation2 + $0x138] sm:$0xff] 0.0
      %265 = vst [vmem:[#allocation2 + $0x140] sm:$0xff] 0.0
      %266 = vst [vmem:[#allocation2 + $0x148] sm:$0x3] 0.0
      %267 = vst [vmem:[#allocation2 + $0x150] sm:$0xff] 0.0
      %268 = vst [vmem:[#allocation2 + $0x158] sm:$0xff] 0.0
      %269 = vst [vmem:[#allocation2 + $0x160] sm:$0x3] 0.0
      %270 = vst [vmem:[#allocation2 + $0x168] sm:$0xff] 0.0
      %271 = vst [vmem:[#allocation2 + $0x170] sm:$0xff] 0.0
      %272 = vst [vmem:[#allocation2 + $0x178] sm:$0x3] 0.0
      %273 = vst [vmem:[#allocation2 + $0x180] sm:$0xff] 0.0
      %274 = vst [vmem:[#allocation2 + $0x188] sm:$0xff] 0.0
      %275 = vst [vmem:[#allocation2 + $0x190] sm:$0x3] 0.0
      %276 = vst [vmem:[#allocation2 + $0x198] sm:$0xff] 0.0
      %277 = vst [vmem:[#allocation2 + $0x1a0] sm:$0xff] 0.0
      %278 = vst [vmem:[#allocation2 + $0x1a8] sm:$0x3] 0.0
      %v279 = vld [vmem:[%s219] sm:$0xff]
      %v280 = vld [vmem:[%s219 + $0x8] sm:$0xff]
      %v281 = vld [vmem:[%s219 + $0x10] sm:$0xff]
      %v282 = vld [vmem:[%s219 + $0x18] sm:$0xff]
      %v283 = vld [vmem:[%s219 + $0x20] sm:$0xff]
      %v284 = vld [vmem:[%s219 + $0x28] sm:$0xff]
      %v285 = vld [vmem:[%s219 + $0x30] sm:$0xff]
      %v286 = vld [vmem:[%s219 + $0x38] sm:$0xff]
      %v287 = vld [vmem:[%s219 + $0x40] sm:$0xff]
      %v288 = vld [vmem:[%s219 + $0x48] sm:$0xff]
      %v289 = vld [vmem:[%s219 + $0x50] sm:$0xff]
      %v290 = vld [vmem:[%s219 + $0x58] sm:$0xff]
      %v291 = vld [vmem:[%s219 + $0x60] sm:$0xff]
      %v292 = vld [vmem:[%s219 + $0x68] sm:$0xff]
      %v293 = vld [vmem:[%s219 + $0x70] sm:$0xff]
      %v294 = vld [vmem:[%s219 + $0x78] sm:$0xff]
      %v295 = vld [vmem:[%s219 + $0x80] sm:$0xff]
      %v296 = vld [vmem:[%s219 + $0x88] sm:$0xff]
      %v297 = vld [vmem:[%s219 + $0x90] sm:$0xff]
      %v298 = vld [vmem:[%s219 + $0x98] sm:$0xff]
      %v299 = vld [vmem:[%s219 + $0xa0] sm:$0xff]
      %v300 = vld [vmem:[%s219 + $0xa8] sm:$0xff]
      %v301 = vld [vmem:[%s219 + $0xb0] sm:$0xff]
      %v302 = vld [vmem:[%s219 + $0xb8] sm:$0xff]
      %v303 = vld [vmem:[%s219 + $0xc0] sm:$0xff]
      %v304 = vld [vmem:[%s219 + $0xc8] sm:$0xff]
      %v305 = vld [vmem:[%s219 + $0xd0] sm:$0xff]
      %v306 = vld [vmem:[%s219 + $0xd8] sm:$0xff]
      %v307 = vld [vmem:[%s219 + $0xe0] sm:$0xff]
      %v308 = vld [vmem:[%s219 + $0xe8] sm:$0xff]
      %v309 = vld [vmem:[%s219 + $0xf0] sm:$0xff]
      %v310 = vld [vmem:[%s219 + $0xf8] sm:$0xff]
      %s311 = scalar_lea.vmem [#allocation2], 24
      %312 = vst [vmem:[%s311 + $0x1] sm:$0xff] %v279
      %313 = vst [vmem:[%s311 + $0x9] sm:$0xff] %v280
      %314 = vst [vmem:[%s311 + $0x19] sm:$0xff] %v281
      %315 = vst [vmem:[%s311 + $0x21] sm:$0xff] %v282
      %316 = vst [vmem:[%s311 + $0x31] sm:$0xff] %v283
      %317 = vst [vmem:[%s311 + $0x39] sm:$0xff] %v284
      %318 = vst [vmem:[%s311 + $0x49] sm:$0xff] %v285
      %319 = vst [vmem:[%s311 + $0x51] sm:$0xff] %v286
      %320 = vst [vmem:[%s311 + $0x61] sm:$0xff] %v287
      %321 = vst [vmem:[%s311 + $0x69] sm:$0xff] %v288
      %322 = vst [vmem:[%s311 + $0x79] sm:$0xff] %v289
      %323 = vst [vmem:[%s311 + $0x81] sm:$0xff] %v290
      %324 = vst [vmem:[%s311 + $0x91] sm:$0xff] %v291
      %325 = vst [vmem:[%s311 + $0x99] sm:$0xff] %v292
      %326 = vst [vmem:[%s311 + $0xa9] sm:$0xff] %v293
      %327 = vst [vmem:[%s311 + $0xb1] sm:$0xff] %v294
      %328 = vst [vmem:[%s311 + $0xc1] sm:$0xff] %v295
      %329 = vst [vmem:[%s311 + $0xc9] sm:$0xff] %v296
      %330 = vst [vmem:[%s311 + $0xd9] sm:$0xff] %v297
      %331 = vst [vmem:[%s311 + $0xe1] sm:$0xff] %v298
      %332 = vst [vmem:[%s311 + $0xf1] sm:$0xff] %v299
      %333 = vst [vmem:[%s311 + $0xf9] sm:$0xff] %v300
      %334 = vst [vmem:[%s311 + $0x109] sm:$0xff] %v301
      %335 = vst [vmem:[%s311 + $0x111] sm:$0xff] %v302
      %336 = vst [vmem:[%s311 + $0x121] sm:$0xff] %v303
      %337 = vst [vmem:[%s311 + $0x129] sm:$0xff] %v304
      %338 = vst [vmem:[%s311 + $0x139] sm:$0xff] %v305
      %339 = vst [vmem:[%s311 + $0x141] sm:$0xff] %v306
      %340 = vst [vmem:[%s311 + $0x151] sm:$0xff] %v307
      %341 = vst [vmem:[%s311 + $0x159] sm:$0xff] %v308
      %342 = vst [vmem:[%s311 + $0x169] sm:$0xff] %v309
      %343 = vst [vmem:[%s311 + $0x171] sm:$0xff] %v310
      %v344 = vld [vmem:[#allocation2] sm:$0xff]
      %v345 = vld [vmem:[#allocation2 + $0x8] sm:$0xff]
      %v346 = vld [vmem:[#allocation2 + $0x18] sm:$0xff]
      %v347 = vld [vmem:[#allocation2 + $0x20] sm:$0xff]
      %v348 = vld [vmem:[#allocation2 + $0x30] sm:$0xff]
      %v349 = vld [vmem:[#allocation2 + $0x38] sm:$0xff]
      %v350 = vld [vmem:[#allocation2 + $0x48] sm:$0xff]
      %v351 = vld [vmem:[#allocation2 + $0x50] sm:$0xff]
      %v352 = vld [vmem:[#allocation2 + $0x60] sm:$0xff]
      %v353 = vld [vmem:[#allocation2 + $0x68] sm:$0xff]
      %v354 = vld [vmem:[#allocation2 + $0x78] sm:$0xff]
      %v355 = vld [vmem:[#allocation2 + $0x80] sm:$0xff]
      %v356 = vld [vmem:[#allocation2 + $0x90] sm:$0xff]
      %v357 = vld [vmem:[#allocation2 + $0x98] sm:$0xff]
      %v358 = vld [vmem:[#allocation2 + $0xa8] sm:$0xff]
      %v359 = vld [vmem:[#allocation2 + $0xb0] sm:$0xff]
      %v360 = vld [vmem:[#allocation2 + $0xc0] sm:$0xff]
      %v361 = vld [vmem:[#allocation2 + $0xc8] sm:$0xff]
      %v362 = vld [vmem:[#allocation2 + $0xd8] sm:$0xff]
      %v363 = vld [vmem:[#allocation2 + $0xe0] sm:$0xff]
      %v364 = vld [vmem:[#allocation2 + $0xf0] sm:$0xff]
      %v365 = vld [vmem:[#allocation2 + $0xf8] sm:$0xff]
      %v366 = vld [vmem:[#allocation2 + $0x108] sm:$0xff]
      %v367 = vld [vmem:[#allocation2 + $0x110] sm:$0xff]
      %v368 = vld [vmem:[#allocation2 + $0x120] sm:$0xff]
      %v369 = vld [vmem:[#allocation2 + $0x128] sm:$0xff]
      %v370 = vld [vmem:[#allocation2 + $0x138] sm:$0xff]
      %v371 = vld [vmem:[#allocation2 + $0x140] sm:$0xff]
      %v372 = vld [vmem:[#allocation2 + $0x150] sm:$0xff]
      %v373 = vld [vmem:[#allocation2 + $0x158] sm:$0xff]
      %v374 = vld [vmem:[#allocation2 + $0x168] sm:$0xff]
      %v375 = vld [vmem:[#allocation2 + $0x170] sm:$0xff]
      %v376 = vld [vmem:[#allocation2 + $0x1] sm:$0xff]
      %v377 = vld [vmem:[#allocation2 + $0x9] sm:$0xff]
      %v378 = vld [vmem:[#allocation2 + $0x19] sm:$0xff]
      %v379 = vld [vmem:[#allocation2 + $0x21] sm:$0xff]
      %v380 = vld [vmem:[#allocation2 + $0x31] sm:$0xff]
      %v381 = vld [vmem:[#allocation2 + $0x39] sm:$0xff]
      %v382 = vld [vmem:[#allocation2 + $0x49] sm:$0xff]
      %v383 = vld [vmem:[#allocation2 + $0x51] sm:$0xff]
      %v384 = vld [vmem:[#allocation2 + $0x61] sm:$0xff]
      %v385 = vld [vmem:[#allocation2 + $0x69] sm:$0xff]
      %v386 = vld [vmem:[#allocation2 + $0x79] sm:$0xff]
      %v387 = vld [vmem:[#allocation2 + $0x81] sm:$0xff]
      %v388 = vld [vmem:[#allocation2 + $0x91] sm:$0xff]
      %v389 = vld [vmem:[#allocation2 + $0x99] sm:$0xff]
      %v390 = vld [vmem:[#allocation2 + $0xa9] sm:$0xff]
      %v391 = vld [vmem:[#allocation2 + $0xb1] sm:$0xff]
      %v392 = vld [vmem:[#allocation2 + $0xc1] sm:$0xff]
      %v393 = vld [vmem:[#allocation2 + $0xc9] sm:$0xff]
      %v394 = vld [vmem:[#allocation2 + $0xd9] sm:$0xff]
      %v395 = vld [vmem:[#allocation2 + $0xe1] sm:$0xff]
      %v396 = vld [vmem:[#allocation2 + $0xf1] sm:$0xff]
      %v397 = vld [vmem:[#allocation2 + $0xf9] sm:$0xff]
      %v398 = vld [vmem:[#allocation2 + $0x109] sm:$0xff]
      %v399 = vld [vmem:[#allocation2 + $0x111] sm:$0xff]
      %v400 = vld [vmem:[#allocation2 + $0x121] sm:$0xff]
      %v401 = vld [vmem:[#allocation2 + $0x129] sm:$0xff]
      %v402 = vld [vmem:[#allocation2 + $0x139] sm:$0xff]
      %v403 = vld [vmem:[#allocation2 + $0x141] sm:$0xff]
      %v404 = vld [vmem:[#allocation2 + $0x151] sm:$0xff]
      %v405 = vld [vmem:[#allocation2 + $0x159] sm:$0xff]
      %v406 = vld [vmem:[#allocation2 + $0x169] sm:$0xff]
      %v407 = vld [vmem:[#allocation2 + $0x171] sm:$0xff]
      %v408 = vld [vmem:[#allocation2 + $0x2] sm:$0xff]
      %v409 = vld [vmem:[#allocation2 + $0xa] sm:$0xff]
      %v410 = vld [vmem:[#allocation2 + $0x1a] sm:$0xff]
      %v411 = vld [vmem:[#allocation2 + $0x22] sm:$0xff]
      %v412 = vld [vmem:[#allocation2 + $0x32] sm:$0xff]
      %v413 = vld [vmem:[#allocation2 + $0x3a] sm:$0xff]
      %v414 = vld [vmem:[#allocation2 + $0x4a] sm:$0xff]
      %v415 = vld [vmem:[#allocation2 + $0x52] sm:$0xff]
      %v416 = vld [vmem:[#allocation2 + $0x62] sm:$0xff]
      %v417 = vld [vmem:[#allocation2 + $0x6a] sm:$0xff]
      %v418 = vld [vmem:[#allocation2 + $0x7a] sm:$0xff]
      %v419 = vld [vmem:[#allocation2 + $0x82] sm:$0xff]
      %v420 = vld [vmem:[#allocation2 + $0x92] sm:$0xff]
      %v421 = vld [vmem:[#allocation2 + $0x9a] sm:$0xff]
      %v422 = vld [vmem:[#allocation2 + $0xaa] sm:$0xff]
      %v423 = vld [vmem:[#allocation2 + $0xb2] sm:$0xff]
      %v424 = vld [vmem:[#allocation2 + $0xc2] sm:$0xff]
      %v425 = vld [vmem:[#allocation2 + $0xca] sm:$0xff]
      %v426 = vld [vmem:[#allocation2 + $0xda] sm:$0xff]
      %v427 = vld [vmem:[#allocation2 + $0xe2] sm:$0xff]
      %v428 = vld [vmem:[#allocation2 + $0xf2] sm:$0xff]
      %v429 = vld [vmem:[#allocation2 + $0xfa] sm:$0xff]
      %v430 = vld [vmem:[#allocation2 + $0x10a] sm:$0xff]
      %v431 = vld [vmem:[#allocation2 + $0x112] sm:$0xff]
      %v432 = vld [vmem:[#allocation2 + $0x122] sm:$0xff]
      %v433 = vld [vmem:[#allocation2 + $0x12a] sm:$0xff]
      %v434 = vld [vmem:[#allocation2 + $0x13a] sm:$0xff]
      %v435 = vld [vmem:[#allocation2 + $0x142] sm:$0xff]
      %v436 = vld [vmem:[#allocation2 + $0x152] sm:$0xff]
      %v437 = vld [vmem:[#allocation2 + $0x15a] sm:$0xff]
      %v438 = vld [vmem:[#allocation2 + $0x16a] sm:$0xff]
      %v439 = vld [vmem:[#allocation2 + $0x172] sm:$0xff]
      %v440 = vld [vmem:[%s311] sm:$0xff]
      %v441 = vld [vmem:[%s311 + $0x8] sm:$0xff]
      %v442 = vld [vmem:[%s311 + $0x18] sm:$0xff]
      %v443 = vld [vmem:[%s311 + $0x20] sm:$0xff]
      %v444 = vld [vmem:[%s311 + $0x30] sm:$0xff]
      %v445 = vld [vmem:[%s311 + $0x38] sm:$0xff]
      %v446 = vld [vmem:[%s311 + $0x48] sm:$0xff]
      %v447 = vld [vmem:[%s311 + $0x50] sm:$0xff]
      %v448 = vld [vmem:[%s311 + $0x60] sm:$0xff]
      %v449 = vld [vmem:[%s311 + $0x68] sm:$0xff]
      %v450 = vld [vmem:[%s311 + $0x78] sm:$0xff]
      %v451 = vld [vmem:[%s311 + $0x80] sm:$0xff]
      %v452 = vld [vmem:[%s311 + $0x90] sm:$0xff]
      %v453 = vld [vmem:[%s311 + $0x98] sm:$0xff]
      %v454 = vld [vmem:[%s311 + $0xa8] sm:$0xff]
      %v455 = vld [vmem:[%s311 + $0xb0] sm:$0xff]
      %v456 = vld [vmem:[%s311 + $0xc0] sm:$0xff]
      %v457 = vld [vmem:[%s311 + $0xc8] sm:$0xff]
      %v458 = vld [vmem:[%s311 + $0xd8] sm:$0xff]
      %v459 = vld [vmem:[%s311 + $0xe0] sm:$0xff]
      %v460 = vld [vmem:[%s311 + $0xf0] sm:$0xff]
      %v461 = vld [vmem:[%s311 + $0xf8] sm:$0xff]
      %v462 = vld [vmem:[%s311 + $0x108] sm:$0xff]
      %v463 = vld [vmem:[%s311 + $0x110] sm:$0xff]
      %v464 = vld [vmem:[%s311 + $0x120] sm:$0xff]
      %v465 = vld [vmem:[%s311 + $0x128] sm:$0xff]
      %v466 = vld [vmem:[%s311 + $0x138] sm:$0xff]
      %v467 = vld [vmem:[%s311 + $0x140] sm:$0xff]
      %v468 = vld [vmem:[%s311 + $0x150] sm:$0xff]
      %v469 = vld [vmem:[%s311 + $0x158] sm:$0xff]
      %v470 = vld [vmem:[%s311 + $0x168] sm:$0xff]
      %v471 = vld [vmem:[%s311 + $0x170] sm:$0xff]
      %v472 = vld [vmem:[%s311 + $0x1] sm:$0xff]
      %v473 = vld [vmem:[%s311 + $0x9] sm:$0xff]
      %v474 = vld [vmem:[%s311 + $0x19] sm:$0xff]
      %v475 = vld [vmem:[%s311 + $0x21] sm:$0xff]
      %v476 = vld [vmem:[%s311 + $0x31] sm:$0xff]
      %v477 = vld [vmem:[%s311 + $0x39] sm:$0xff]
      %v478 = vld [vmem:[%s311 + $0x49] sm:$0xff]
      %v479 = vld [vmem:[%s311 + $0x51] sm:$0xff]
      %v480 = vld [vmem:[%s311 + $0x61] sm:$0xff]
      %v481 = vld [vmem:[%s311 + $0x69] sm:$0xff]
      %v482 = vld [vmem:[%s311 + $0x79] sm:$0xff]
      %v483 = vld [vmem:[%s311 + $0x81] sm:$0xff]
      %v484 = vld [vmem:[%s311 + $0x91] sm:$0xff]
      %v485 = vld [vmem:[%s311 + $0x99] sm:$0xff]
      %v486 = vld [vmem:[%s311 + $0xa9] sm:$0xff]
      %v487 = vld [vmem:[%s311 + $0xb1] sm:$0xff]
      %v488 = vld [vmem:[%s311 + $0xc1] sm:$0xff]
      %v489 = vld [vmem:[%s311 + $0xc9] sm:$0xff]
      %v490 = vld [vmem:[%s311 + $0xd9] sm:$0xff]
      %v491 = vld [vmem:[%s311 + $0xe1] sm:$0xff]
      %v492 = vld [vmem:[%s311 + $0xf1] sm:$0xff]
      %v493 = vld [vmem:[%s311 + $0xf9] sm:$0xff]
      %v494 = vld [vmem:[%s311 + $0x109] sm:$0xff]
      %v495 = vld [vmem:[%s311 + $0x111] sm:$0xff]
      %v496 = vld [vmem:[%s311 + $0x121] sm:$0xff]
      %v497 = vld [vmem:[%s311 + $0x129] sm:$0xff]
      %v498 = vld [vmem:[%s311 + $0x139] sm:$0xff]
      %v499 = vld [vmem:[%s311 + $0x141] sm:$0xff]
      %v500 = vld [vmem:[%s311 + $0x151] sm:$0xff]
      %v501 = vld [vmem:[%s311 + $0x159] sm:$0xff]
      %v502 = vld [vmem:[%s311 + $0x169] sm:$0xff]
      %v503 = vld [vmem:[%s311 + $0x171] sm:$0xff]
      %v504 = vld [vmem:[%s311 + $0x2] sm:$0xff]
      %v505 = vld [vmem:[%s311 + $0xa] sm:$0xff]
      %v506 = vld [vmem:[%s311 + $0x1a] sm:$0xff]
      %v507 = vld [vmem:[%s311 + $0x22] sm:$0xff]
      %v508 = vld [vmem:[%s311 + $0x32] sm:$0xff]
      %v509 = vld [vmem:[%s311 + $0x3a] sm:$0xff]
      %v510 = vld [vmem:[%s311 + $0x4a] sm:$0xff]
      %v511 = vld [vmem:[%s311 + $0x52] sm:$0xff]
      %v512 = vld [vmem:[%s311 + $0x62] sm:$0xff]
      %v513 = vld [vmem:[%s311 + $0x6a] sm:$0xff]
      %v514 = vld [vmem:[%s311 + $0x7a] sm:$0xff]
      %v515 = vld [vmem:[%s311 + $0x82] sm:$0xff]
      %v516 = vld [vmem:[%s311 + $0x92] sm:$0xff]
      %v517 = vld [vmem:[%s311 + $0x9a] sm:$0xff]
      %v518 = vld [vmem:[%s311 + $0xaa] sm:$0xff]
      %v519 = vld [vmem:[%s311 + $0xb2] sm:$0xff]
      %v520 = vld [vmem:[%s311 + $0xc2] sm:$0xff]
      %v521 = vld [vmem:[%s311 + $0xca] sm:$0xff]
      %v522 = vld [vmem:[%s311 + $0xda] sm:$0xff]
      %v523 = vld [vmem:[%s311 + $0xe2] sm:$0xff]
      %v524 = vld [vmem:[%s311 + $0xf2] sm:$0xff]
      %v525 = vld [vmem:[%s311 + $0xfa] sm:$0xff]
      %v526 = vld [vmem:[%s311 + $0x10a] sm:$0xff]
      %v527 = vld [vmem:[%s311 + $0x112] sm:$0xff]
      %v528 = vld [vmem:[%s311 + $0x122] sm:$0xff]
      %v529 = vld [vmem:[%s311 + $0x12a] sm:$0xff]
      %v530 = vld [vmem:[%s311 + $0x13a] sm:$0xff]
      %v531 = vld [vmem:[%s311 + $0x142] sm:$0xff]
      %v532 = vld [vmem:[%s311 + $0x152] sm:$0xff]
      %v533 = vld [vmem:[%s311 + $0x15a] sm:$0xff]
      %v534 = vld [vmem:[%s311 + $0x16a] sm:$0xff]
      %v535 = vld [vmem:[%s311 + $0x172] sm:$0xff]
      %s536 = scalar_lea.vmem [#allocation2], 48
      %v537 = vld [vmem:[%s536] sm:$0xff]
      %v538 = vld [vmem:[%s536 + $0x8] sm:$0xff]
      %v539 = vld [vmem:[%s536 + $0x18] sm:$0xff]
      %v540 = vld [vmem:[%s536 + $0x20] sm:$0xff]
      %v541 = vld [vmem:[%s536 + $0x30] sm:$0xff]
      %v542 = vld [vmem:[%s536 + $0x38] sm:$0xff]
      %v543 = vld [vmem:[%s536 + $0x48] sm:$0xff]
      %v544 = vld [vmem:[%s536 + $0x50] sm:$0xff]
      %v545 = vld [vmem:[%s536 + $0x60] sm:$0xff]
      %v546 = vld [vmem:[%s536 + $0x68] sm:$0xff]
      %v547 = vld [vmem:[%s536 + $0x78] sm:$0xff]
      %v548 = vld [vmem:[%s536 + $0x80] sm:$0xff]
      %v549 = vld [vmem:[%s536 + $0x90] sm:$0xff]
      %v550 = vld [vmem:[%s536 + $0x98] sm:$0xff]
      %v551 = vld [vmem:[%s536 + $0xa8] sm:$0xff]
      %v552 = vld [vmem:[%s536 + $0xb0] sm:$0xff]
      %v553 = vld [vmem:[%s536 + $0xc0] sm:$0xff]
      %v554 = vld [vmem:[%s536 + $0xc8] sm:$0xff]
      %v555 = vld [vmem:[%s536 + $0xd8] sm:$0xff]
      %v556 = vld [vmem:[%s536 + $0xe0] sm:$0xff]
      %v557 = vld [vmem:[%s536 + $0xf0] sm:$0xff]
      %v558 = vld [vmem:[%s536 + $0xf8] sm:$0xff]
      %v559 = vld [vmem:[%s536 + $0x108] sm:$0xff]
      %v560 = vld [vmem:[%s536 + $0x110] sm:$0xff]
      %v561 = vld [vmem:[%s536 + $0x120] sm:$0xff]
      %v562 = vld [vmem:[%s536 + $0x128] sm:$0xff]
      %v563 = vld [vmem:[%s536 + $0x138] sm:$0xff]
      %v564 = vld [vmem:[%s536 + $0x140] sm:$0xff]
      %v565 = vld [vmem:[%s536 + $0x150] sm:$0xff]
      %v566 = vld [vmem:[%s536 + $0x158] sm:$0xff]
      %v567 = vld [vmem:[%s536 + $0x168] sm:$0xff]
      %v568 = vld [vmem:[%s536 + $0x170] sm:$0xff]
      %v569 = vld [vmem:[%s536 + $0x1] sm:$0xff]
      %v570 = vld [vmem:[%s536 + $0x9] sm:$0xff]
      %v571 = vld [vmem:[%s536 + $0x19] sm:$0xff]
      %v572 = vld [vmem:[%s536 + $0x21] sm:$0xff]
      %v573 = vld [vmem:[%s536 + $0x31] sm:$0xff]
      %v574 = vld [vmem:[%s536 + $0x39] sm:$0xff]
      %v575 = vld [vmem:[%s536 + $0x49] sm:$0xff]
      %v576 = vld [vmem:[%s536 + $0x51] sm:$0xff]
      %v577 = vld [vmem:[%s536 + $0x61] sm:$0xff]
      %v578 = vld [vmem:[%s536 + $0x69] sm:$0xff]
      %v579 = vld [vmem:[%s536 + $0x79] sm:$0xff]
      %v580 = vld [vmem:[%s536 + $0x81] sm:$0xff]
      %v581 = vld [vmem:[%s536 + $0x91] sm:$0xff]
      %v582 = vld [vmem:[%s536 + $0x99] sm:$0xff]
      %v583 = vld [vmem:[%s536 + $0xa9] sm:$0xff]
      %v584 = vld [vmem:[%s536 + $0xb1] sm:$0xff]
      %v585 = vld [vmem:[%s536 + $0xc1] sm:$0xff]
      %v586 = vld [vmem:[%s536 + $0xc9] sm:$0xff]
      %v587 = vld [vmem:[%s536 + $0xd9] sm:$0xff]
      %v588 = vld [vmem:[%s536 + $0xe1] sm:$0xff]
      %v589 = vld [vmem:[%s536 + $0xf1] sm:$0xff]
      %v590 = vld [vmem:[%s536 + $0xf9] sm:$0xff]
      %v591 = vld [vmem:[%s536 + $0x109] sm:$0xff]
      %v592 = vld [vmem:[%s536 + $0x111] sm:$0xff]
      %v593 = vld [vmem:[%s536 + $0x121] sm:$0xff]
      %v594 = vld [vmem:[%s536 + $0x129] sm:$0xff]
      %v595 = vld [vmem:[%s536 + $0x139] sm:$0xff]
      %v596 = vld [vmem:[%s536 + $0x141] sm:$0xff]
      %v597 = vld [vmem:[%s536 + $0x151] sm:$0xff]
      %v598 = vld [vmem:[%s536 + $0x159] sm:$0xff]
      %v599 = vld [vmem:[%s536 + $0x169] sm:$0xff]
      %v600 = vld [vmem:[%s536 + $0x171] sm:$0xff]
      %v601 = vld [vmem:[%s536 + $0x2] sm:$0xff]
      %v602 = vld [vmem:[%s536 + $0xa] sm:$0xff]
      %v603 = vld [vmem:[%s536 + $0x1a] sm:$0xff]
      %v604 = vld [vmem:[%s536 + $0x22] sm:$0xff]
      %v605 = vld [vmem:[%s536 + $0x32] sm:$0xff]
      %v606 = vld [vmem:[%s536 + $0x3a] sm:$0xff]
      %v607 = vld [vmem:[%s536 + $0x4a] sm:$0xff]
      %v608 = vld [vmem:[%s536 + $0x52] sm:$0xff]
      %v609 = vld [vmem:[%s536 + $0x62] sm:$0xff]
      %v610 = vld [vmem:[%s536 + $0x6a] sm:$0xff]
      %v611 = vld [vmem:[%s536 + $0x7a] sm:$0xff]
      %v612 = vld [vmem:[%s536 + $0x82] sm:$0xff]
      %v613 = vld [vmem:[%s536 + $0x92] sm:$0xff]
      %v614 = vld [vmem:[%s536 + $0x9a] sm:$0xff]
      %v615 = vld [vmem:[%s536 + $0xaa] sm:$0xff]
      %v616 = vld [vmem:[%s536 + $0xb2] sm:$0xff]
      %v617 = vld [vmem:[%s536 + $0xc2] sm:$0xff]
      %v618 = vld [vmem:[%s536 + $0xca] sm:$0xff]
      %v619 = vld [vmem:[%s536 + $0xda] sm:$0xff]
      %v620 = vld [vmem:[%s536 + $0xe2] sm:$0xff]
      %v621 = vld [vmem:[%s536 + $0xf2] sm:$0xff]
      %v622 = vld [vmem:[%s536 + $0xfa] sm:$0xff]
      %v623 = vld [vmem:[%s536 + $0x10a] sm:$0xff]
      %v624 = vld [vmem:[%s536 + $0x112] sm:$0xff]
      %v625 = vld [vmem:[%s536 + $0x122] sm:$0xff]
      %v626 = vld [vmem:[%s536 + $0x12a] sm:$0xff]
      %v627 = vld [vmem:[%s536 + $0x13a] sm:$0xff]
      %v628 = vld [vmem:[%s536 + $0x142] sm:$0xff]
      %v629 = vld [vmem:[%s536 + $0x152] sm:$0xff]
      %v630 = vld [vmem:[%s536 + $0x15a] sm:$0xff]
      %v631 = vld [vmem:[%s536 + $0x16a] sm:$0xff]
      %v632 = vld [vmem:[%s536 + $0x172] sm:$0xff]
      %v633 = vld [vmem:[%s1] sm:$0xff]
      %v634 = vld [vmem:[%s1 + $0x8] sm:$0xff]
      %v635 = vld [vmem:[%s1 + $0x10] sm:$0xff]
      %v636 = vld [vmem:[%s1 + $0x18] sm:$0xff]
      %v637 = vld [vmem:[%s1 + $0x20] sm:$0xff]
      %v638 = vld [vmem:[%s1 + $0x28] sm:$0xff]
      %v639 = vld [vmem:[%s1 + $0x30] sm:$0xff]
      %v640 = vld [vmem:[%s1 + $0x38] sm:$0xff]
      %v641 = vld [vmem:[%s1 + $0x40] sm:$0xff]
      %v642 = vld [vmem:[%s1 + $0x48] sm:$0xff]
      %v643 = vld [vmem:[%s1 + $0x50] sm:$0xff]
      %v644 = vld [vmem:[%s1 + $0x58] sm:$0xff]
      %v645 = vld [vmem:[%s1 + $0x60] sm:$0xff]
      %v646 = vld [vmem:[%s1 + $0x68] sm:$0xff]
      %v647 = vld [vmem:[%s1 + $0x70] sm:$0xff]
      %v648 = vld [vmem:[%s1 + $0x78] sm:$0xff]
      %v649 = vld [vmem:[%s1 + $0x80] sm:$0xff]
      %v650 = vld [vmem:[%s1 + $0x88] sm:$0xff]
      %v651 = vld [vmem:[%s1 + $0x90] sm:$0xff]
      %v652 = vld [vmem:[%s1 + $0x98] sm:$0xff]
      %v653 = vld [vmem:[%s1 + $0xa0] sm:$0xff]
      %v654 = vld [vmem:[%s1 + $0xa8] sm:$0xff]
      %v655 = vld [vmem:[%s1 + $0xb0] sm:$0xff]
      %v656 = vld [vmem:[%s1 + $0xb8] sm:$0xff]
      %v657 = vld [vmem:[%s1 + $0xc0] sm:$0xff]
      %v658 = vld [vmem:[%s1 + $0xc8] sm:$0xff]
      %v659 = vld [vmem:[%s1 + $0xd0] sm:$0xff]
      %v660 = vld [vmem:[%s1 + $0xd8] sm:$0xff]
      %v661 = vld [vmem:[%s1 + $0xe0] sm:$0xff]
      %v662 = vld [vmem:[%s1 + $0xe8] sm:$0xff]
      %v663 = vld [vmem:[%s1 + $0xf0] sm:$0xff]
      %v664 = vld [vmem:[%s1 + $0xf8] sm:$0xff]
      %v665 = vld [vmem:[%s1 + $0x100] sm:$0xff]
      %v666 = vld [vmem:[%s1 + $0x108] sm:$0xff]
      %v667 = vld [vmem:[%s1 + $0x110] sm:$0xff]
      %v668 = vld [vmem:[%s1 + $0x118] sm:$0xff]
      %v669 = vld [vmem:[%s1 + $0x120] sm:$0xff]
      %v670 = vld [vmem:[%s1 + $0x128] sm:$0xff]
      %v671 = vld [vmem:[%s1 + $0x130] sm:$0xff]
      %v672 = vld [vmem:[%s1 + $0x138] sm:$0xff]
      %v673 = vld [vmem:[%s1 + $0x140] sm:$0xff]
      %v674 = vld [vmem:[%s1 + $0x148] sm:$0xff]
      %v675 = vld [vmem:[%s1 + $0x150] sm:$0xff]
      %v676 = vld [vmem:[%s1 + $0x158] sm:$0xff]
      %v677 = vld [vmem:[%s1 + $0x160] sm:$0xff]
      %v678 = vld [vmem:[%s1 + $0x168] sm:$0xff]
      %v679 = vld [vmem:[%s1 + $0x170] sm:$0xff]
      %v680 = vld [vmem:[%s1 + $0x178] sm:$0xff]
      %v681 = vld [vmem:[%s1 + $0x180] sm:$0xff]
      %v682 = vld [vmem:[%s1 + $0x188] sm:$0xff]
      %v683 = vld [vmem:[%s1 + $0x190] sm:$0xff]
      %v684 = vld [vmem:[%s1 + $0x198] sm:$0xff]
      %v685 = vld [vmem:[%s1 + $0x1a0] sm:$0xff]
      %v686 = vld [vmem:[%s1 + $0x1a8] sm:$0xff]
      %v687 = vld [vmem:[%s1 + $0x1b0] sm:$0xff]
      %v688 = vld [vmem:[%s1 + $0x1b8] sm:$0xff]
      %v689 = vld [vmem:[%s1 + $0x1c0] sm:$0xff]
      %v690 = vld [vmem:[%s1 + $0x1c8] sm:$0xff]
      %v691 = vld [vmem:[%s1 + $0x1d0] sm:$0xff]
      %v692 = vld [vmem:[%s1 + $0x1d8] sm:$0xff]
      %v693 = vld [vmem:[%s1 + $0x1e0] sm:$0xff]
      %v694 = vld [vmem:[%s1 + $0x1e8] sm:$0xff]
      %v695 = vld [vmem:[%s1 + $0x1f0] sm:$0xff]
      %v696 = vld [vmem:[%s1 + $0x1f8] sm:$0xff]
      %v697 = vld [vmem:[%s1 + $0x200] sm:$0xff]
      %v698 = vld [vmem:[%s1 + $0x208] sm:$0xff]
      %v699 = vld [vmem:[%s1 + $0x210] sm:$0xff]
      %v700 = vld [vmem:[%s1 + $0x218] sm:$0xff]
      %v701 = vld [vmem:[%s1 + $0x220] sm:$0xff]
      %v702 = vld [vmem:[%s1 + $0x228] sm:$0xff]
      %v703 = vld [vmem:[%s1 + $0x230] sm:$0xff]
      %v704 = vld [vmem:[%s1 + $0x238] sm:$0xff]
      %v705 = vld [vmem:[%s1 + $0x240] sm:$0xff]
      %v706 = vld [vmem:[%s1 + $0x248] sm:$0xff]
      %v707 = vld [vmem:[%s1 + $0x250] sm:$0xff]
      %v708 = vld [vmem:[%s1 + $0x258] sm:$0xff]
      %v709 = vld [vmem:[%s1 + $0x260] sm:$0xff]
      %v710 = vld [vmem:[%s1 + $0x268] sm:$0xff]
      %v711 = vld [vmem:[%s1 + $0x270] sm:$0xff]
      %v712 = vld [vmem:[%s1 + $0x278] sm:$0xff]
      %v713 = vld [vmem:[%s1 + $0x280] sm:$0xff]
      %v714 = vld [vmem:[%s1 + $0x288] sm:$0xff]
      %v715 = vld [vmem:[%s1 + $0x290] sm:$0xff]
      %v716 = vld [vmem:[%s1 + $0x298] sm:$0xff]
      %v717 = vld [vmem:[%s1 + $0x2a0] sm:$0xff]
      %v718 = vld [vmem:[%s1 + $0x2a8] sm:$0xff]
      %v719 = vld [vmem:[%s1 + $0x2b0] sm:$0xff]
      %v720 = vld [vmem:[%s1 + $0x2b8] sm:$0xff]
      %v721 = vld [vmem:[%s1 + $0x2c0] sm:$0xff]
      %v722 = vld [vmem:[%s1 + $0x2c8] sm:$0xff]
      %v723 = vld [vmem:[%s1 + $0x2d0] sm:$0xff]
      %v724 = vld [vmem:[%s1 + $0x2d8] sm:$0xff]
      %v725 = vld [vmem:[%s1 + $0x2e0] sm:$0xff]
      %v726 = vld [vmem:[%s1 + $0x2e8] sm:$0xff]
      %v727 = vld [vmem:[%s1 + $0x2f0] sm:$0xff]
      %v728 = vld [vmem:[%s1 + $0x2f8] sm:$0xff]
      %v729 = vld [vmem:[%s1 + $0x300] sm:$0xff]
      %v730 = vld [vmem:[%s1 + $0x308] sm:$0xff]
      %v731 = vld [vmem:[%s1 + $0x310] sm:$0xff]
      %v732 = vld [vmem:[%s1 + $0x318] sm:$0xff]
      %v733 = vld [vmem:[%s1 + $0x320] sm:$0xff]
      %v734 = vld [vmem:[%s1 + $0x328] sm:$0xff]
      %v735 = vld [vmem:[%s1 + $0x330] sm:$0xff]
      %v736 = vld [vmem:[%s1 + $0x338] sm:$0xff]
      %v737 = vld [vmem:[%s1 + $0x340] sm:$0xff]
      %v738 = vld [vmem:[%s1 + $0x348] sm:$0xff]
      %v739 = vld [vmem:[%s1 + $0x350] sm:$0xff]
      %v740 = vld [vmem:[%s1 + $0x358] sm:$0xff]
      %v741 = vld [vmem:[%s1 + $0x360] sm:$0xff]
      %v742 = vld [vmem:[%s1 + $0x368] sm:$0xff]
      %v743 = vld [vmem:[%s1 + $0x370] sm:$0xff]
      %v744 = vld [vmem:[%s1 + $0x378] sm:$0xff]
      %v745 = vld [vmem:[%s1 + $0x380] sm:$0xff]
      %v746 = vld [vmem:[%s1 + $0x388] sm:$0xff]
      %v747 = vld [vmem:[%s1 + $0x390] sm:$0xff]
      %v748 = vld [vmem:[%s1 + $0x398] sm:$0xff]
      %v749 = vld [vmem:[%s1 + $0x3a0] sm:$0xff]
      %v750 = vld [vmem:[%s1 + $0x3a8] sm:$0xff]
      %v751 = vld [vmem:[%s1 + $0x3b0] sm:$0xff]
      %v752 = vld [vmem:[%s1 + $0x3b8] sm:$0xff]
      %v753 = vld [vmem:[%s1 + $0x3c0] sm:$0xff]
      %v754 = vld [vmem:[%s1 + $0x3c8] sm:$0xff]
      %v755 = vld [vmem:[%s1 + $0x3d0] sm:$0xff]
      %v756 = vld [vmem:[%s1 + $0x3d8] sm:$0xff]
      %v757 = vld [vmem:[%s1 + $0x3e0] sm:$0xff]
      %v758 = vld [vmem:[%s1 + $0x3e8] sm:$0xff]
      %v759 = vld [vmem:[%s1 + $0x3f0] sm:$0xff]
      %v760 = vld [vmem:[%s1 + $0x3f8] sm:$0xff]
      %v761 = vld [vmem:[%s1 + $0x400] sm:$0xff]
      %v762 = vld [vmem:[%s1 + $0x408] sm:$0xff]
      %v763 = vld [vmem:[%s1 + $0x410] sm:$0xff]
      %v764 = vld [vmem:[%s1 + $0x418] sm:$0xff]
      %v765 = vld [vmem:[%s1 + $0x420] sm:$0xff]
      %v766 = vld [vmem:[%s1 + $0x428] sm:$0xff]
      %v767 = vld [vmem:[%s1 + $0x430] sm:$0xff]
      %v768 = vld [vmem:[%s1 + $0x438] sm:$0xff]
      %v769 = vld [vmem:[%s1 + $0x440] sm:$0xff]
      %v770 = vld [vmem:[%s1 + $0x448] sm:$0xff]
      %v771 = vld [vmem:[%s1 + $0x450] sm:$0xff]
      %v772 = vld [vmem:[%s1 + $0x458] sm:$0xff]
      %v773 = vld [vmem:[%s1 + $0x460] sm:$0xff]
      %v774 = vld [vmem:[%s1 + $0x468] sm:$0xff]
      %v775 = vld [vmem:[%s1 + $0x470] sm:$0xff]
      %v776 = vld [vmem:[%s1 + $0x478] sm:$0xff]
      %v777 = vld [vmem:[%s2] sm:$0x1]
      %v779 = vlaneseq
      %v780 = vshrl.u32 %v779, 7
      %v781 = vsub.s32 0, %v780
      %v782 = vrot.slane %v777, %v781
      %784 = vmatprep.subr.mxu0 0.0
      %785 = vmatpush1.msra.mxu0 %v633
      %786 = vmatprep.subr.mxu0 0.0
      %787 = vmatpush1.msra.mxu0 %v634
      %788 = vmatprep.subr.mxu0 0.0
      %789 = vmatpush1.msra.mxu0 %v635
      %790 = vmatprep.subr.mxu0 0.0
      %791 = vmatpush1.msra.mxu0 %v636
      %792 = vmatprep.subr.mxu0 0.0
      %793 = vmatpush1.msra.mxu0 %v637
      %794 = vmatprep.subr.mxu0 0.0
      %795 = vmatpush1.msra.mxu0 %v638
      %796 = vmatprep.subr.mxu0 0.0
      %797 = vmatpush1.msra.mxu0 %v639
      %798 = vmatprep.subr.mxu0 0.0
      %799 = vmatpush1.msra.mxu0 %v640
      %800 = vmatprep.subr.mxu0 0.0
      %801 = vmatpush1.msra.mxu0 %v641
      %802 = vmatprep.subr.mxu0 0.0
      %803 = vmatpush1.msra.mxu0 %v642
      %804 = vmatprep.subr.mxu0 0.0
      %805 = vmatpush1.msra.mxu0 %v643
      %806 = vmatprep.subr.mxu0 0.0
      %807 = vmatpush1.msra.mxu0 %v644
      %808 = vmatprep.subr.mxu0 0.0
      %809 = vmatpush1.msra.mxu0 %v645
      %810 = vmatprep.subr.mxu0 0.0
      %811 = vmatpush1.msra.mxu0 %v646
      %812 = vmatprep.subr.mxu0 0.0
      %813 = vmatpush1.msra.mxu0 %v647
      %814 = vmatprep.subr.mxu0 0.0
      %815 = vmatpush1.msra.mxu0 %v648
      %816 = vmatprep.subr.mxu0 0.0
      %817 = vmatpush1.msra.mxu0 %v649
      %818 = vmatprep.subr.mxu0 0.0
      %819 = vmatpush1.msra.mxu0 %v650
      %820 = vmatprep.subr.mxu0 0.0
      %821 = vmatpush1.msra.mxu0 %v651
      %822 = vmatprep.subr.mxu0 0.0
      %823 = vmatpush1.msra.mxu0 %v652
      %824 = vmatprep.subr.mxu0 0.0
      %825 = vmatpush1.msra.mxu0 %v653
      %826 = vmatprep.subr.mxu0 0.0
      %827 = vmatpush1.msra.mxu0 %v654
      %828 = vmatprep.subr.mxu0 0.0
      %829 = vmatpush1.msra.mxu0 %v655
      %830 = vmatprep.subr.mxu0 0.0
      %831 = vmatpush1.msra.mxu0 %v656
      %832 = vmatprep.subr.mxu0 0.0
      %833 = vmatpush1.msra.mxu0 %v657
      %834 = vmatprep.subr.mxu0 0.0
      %835 = vmatpush1.msra.mxu0 %v658
      %836 = vmatprep.subr.mxu0 0.0
      %837 = vmatpush1.msra.mxu0 %v659
      %838 = vmatprep.subr.mxu0 0.0
      %839 = vmatpush1.msra.mxu0 %v660
      %840 = vmatprep.subr.mxu0 0.0
      %841 = vmatpush1.msra.mxu0 %v661
      %842 = vmatprep.subr.mxu0 0.0
      %843 = vmatpush1.msra.mxu0 %v662
      %844 = vmatprep.subr.mxu0 0.0
      %845 = vmatpush1.msra.mxu0 %v663
      %846 = vmatprep.subr.mxu0 0.0
      %847 = vmatpush1.msra.mxu0 %v664
      %848 = vmatprep.mubr.f32.mxu0 %v376
      %849 = vmatmul.mubr.f32.gmra.mrb[0].mxu0 %v344
      %v850 = vpop.f32.mrb[0].mxu0
      %v851 = vadd.f32 %v782, %v850
      %v852 = vpop.f32.mrb[0].mxu0
      %853 = vmatprep.mubr.f32.mxu0 %v377
      %854 = vmatmul.mubr.f32.gmra.mrb[0].mxu0 %v345
      %v855 = vpop.f32.mrb[0].mxu0
      %v856 = vadd.f32 %v782, %v855
      %v857 = vpop.f32.mrb[0].mxu0
      %858 = vmatprep.mubr.f32.mxu0 %v378
      %859 = vmatmul.mubr.f32.gmra.mrb[0].mxu0 %v346
      %v860 = vpop.f32.mrb[0].mxu0
      %v861 = vadd.f32 %v782, %v860
      %v862 = vpop.f32.mrb[0].mxu0
      %863 = vmatprep.mubr.f32.mxu0 %v379
      %864 = vmatmul.mubr.f32.gmra.mrb[0].mxu0 %v347
      %v865 = vpop.f32.mrb[0].mxu0
      %v866 = vadd.f32 %v782, %v865
      %v867 = vpop.f32.mrb[0].mxu0
      %868 = vmatprep.mubr.f32.mxu0 %v380
      %869 = vmatmul.mubr.f32.gmra.mrb[0].mxu0 %v348
      %v870 = vpop.f32.mrb[0].mxu0
      %v871 = vadd.f32 %v782, %v870
      %v872 = vpop.f32.mrb[0].mxu0
      %873 = vmatprep.mubr.f32.mxu0 %v381
      %874 = vmatmul.mubr.f32.gmra.mrb[0].mxu0 %v349
      %v875 = vpop.f32.mrb[0].mxu0
      %v876 = vadd.f32 %v782, %v875
      %v877 = vpop.f32.mrb[0].mxu0
      %878 = vmatprep.mubr.f32.mxu0 %v382
      %879 = vmatmul.mubr.f32.gmra.mrb[0].mxu0 %v350
      %v880 = vpop.f32.mrb[0].mxu0
      %v881 = vadd.f32 %v782, %v880
      %v882 = vpop.f32.mrb[0].mxu0
      %883 = vmatprep.mubr.f32.mxu0 %v383
      %884 = vmatmul.mubr.f32.gmra.mrb[0].mxu0 %v351
      %v885 = vpop.f32.mrb[0].mxu0
      %v886 = vadd.f32 %v782, %v885
      %v887 = vpop.f32.mrb[0].mxu0
      %888 = vmatprep.mubr.f32.mxu0 %v384
      %889 = vmatmul.mubr.f32.gmra.mrb[0].mxu0 %v352
      %v890 = vpop.f32.mrb[0].mxu0
      %v891 = vadd.f32 %v782, %v890
      %v892 = vpop.f32.mrb[0].mxu0
      %893 = vmatprep.mubr.f32.mxu0 %v385
      %894 = vmatmul.mubr.f32.gmra.mrb[0].mxu0 %v353
      %v895 = vpop.f32.mrb[0].mxu0
      %v896 = vadd.f32 %v782, %v895
      %v897 = vpop.f32.mrb[0].mxu0
      %898 = vmatprep.mubr.f32.mxu0 %v386
      %899 = vmatmul.mubr.f32.gmra.mrb[0].mxu0 %v354
      %v900 = vpop.f32.mrb[0].mxu0
      %v901 = vadd.f32 %v782, %v900
      %v902 = vpop.f32.mrb[0].mxu0
      %903 = vmatprep.mubr.f32.mxu0 %v387
      %904 = vmatmul.mubr.f32.gmra.mrb[0].mxu0 %v355
      %v905 = vpop.f32.mrb[0].mxu0
      %v906 = vadd.f32 %v782, %v905
      %v907 = vpop.f32.mrb[0].mxu0
      %908 = vmatprep.mubr.f32.mxu0 %v388
      %909 = vmatmul.mubr.f32.gmra.mrb[0].mxu0 %v356
      %v910 = vpop.f32.mrb[0].mxu0
      %v911 = vadd.f32 %v782, %v910
      %v912 = vpop.f32.mrb[0].mxu0
      %913 = vmatprep.mubr.f32.mxu0 %v389
      %914 = vmatmul.mubr.f32.gmra.mrb[0].mxu0 %v357
      %v915 = vpop.f32.mrb[0].mxu0
      %v916 = vadd.f32 %v782, %v915
      %v917 = vpop.f32.mrb[0].mxu0
      %918 = vmatprep.mubr.f32.mxu0 %v390
      %919 = vmatmul.mubr.f32.gmra.mrb[0].mxu0 %v358
      %v920 = vpop.f32.mrb[0].mxu0
      %v921 = vadd.f32 %v782, %v920
      %v922 = vpop.f32.mrb[0].mxu0
      %923 = vmatprep.mubr.f32.mxu0 %v391
      %924 = vmatmul.mubr.f32.gmra.mrb[0].mxu0 %v359
      %v925 = vpop.f32.mrb[0].mxu0
      %v926 = vadd.f32 %v782, %v925
      %v927 = vpop.f32.mrb[0].mxu0
      %928 = vmatprep.mubr.f32.mxu0 %v392
      %929 = vmatmul.mubr.f32.gmra.mrb[0].mxu0 %v360
      %v930 = vpop.f32.mrb[0].mxu0
      %v931 = vadd.f32 %v782, %v930
      %v932 = vpop.f32.mrb[0].mxu0
      %933 = vmatprep.mubr.f32.mxu0 %v393
      %934 = vmatmul.mubr.f32.gmra.mrb[0].mxu0 %v361
      %v935 = vpop.f32.mrb[0].mxu0
      %v936 = vadd.f32 %v782, %v935
      %v937 = vpop.f32.mrb[0].mxu0
      %938 = vmatprep.mubr.f32.mxu0 %v394
      %939 = vmatmul.mubr.f32.gmra.mrb[0].mxu0 %v362
      %v940 = vpop.f32.mrb[0].mxu0
      %v941 = vadd.f32 %v782, %v940
      %v942 = vpop.f32.mrb[0].mxu0
      %943 = vmatprep.mubr.f32.mxu0 %v395
      %944 = vmatmul.mubr.f32.gmra.mrb[0].mxu0 %v363
      %v945 = vpop.f32.mrb[0].mxu0
      %v946 = vadd.f32 %v782, %v945
      %v947 = vpop.f32.mrb[0].mxu0
      %948 = vmatprep.mubr.f32.mxu0 %v396
      %949 = vmatmul.mubr.f32.gmra.mrb[0].mxu0 %v364
      %v950 = vpop.f32.mrb[0].mxu0
      %v951 = vadd.f32 %v782, %v950
      %v952 = vpop.f32.mrb[0].mxu0
      %953 = vmatprep.mubr.f32.mxu0 %v397
      %954 = vmatmul.mubr.f32.gmra.mrb[0].mxu0 %v365
      %v955 = vpop.f32.mrb[0].mxu0
      %v956 = vadd.f32 %v782, %v955
      %v957 = vpop.f32.mrb[0].mxu0
      %958 = vmatprep.mubr.f32.mxu0 %v398
      %959 = vmatmul.mubr.f32.gmra.mrb[0].mxu0 %v366
      %v960 = vpop.f32.mrb[0].mxu0
      %v961 = vadd.f32 %v782, %v960
      %v962 = vpop.f32.mrb[0].mxu0
      %963 = vmatprep.mubr.f32.mxu0 %v399
      %964 = vmatmul.mubr.f32.gmra.mrb[0].mxu0 %v367
      %v965 = vpop.f32.mrb[0].mxu0
      %v966 = vadd.f32 %v782, %v965
      %v967 = vpop.f32.mrb[0].mxu0
      %968 = vmatprep.mubr.f32.mxu0 %v400
      %969 = vmatmul.mubr.f32.gmra.mrb[0].mxu0 %v368
      %v970 = vpop.f32.mrb[0].mxu0
      %v971 = vadd.f32 %v782, %v970
      %v972 = vpop.f32.mrb[0].mxu0
      %973 = vmatprep.mubr.f32.mxu0 %v401
      %974 = vmatmul.mubr.f32.gmra.mrb[0].mxu0 %v369
      %v975 = vpop.f32.mrb[0].mxu0
      %v976 = vadd.f32 %v782, %v975
      %v977 = vpop.f32.mrb[0].mxu0
      %978 = vmatprep.mubr.f32.mxu0 %v402
      %979 = vmatmul.mubr.f32.gmra.mrb[0].mxu0 %v370
      %v980 = vpop.f32.mrb[0].mxu0
      %v981 = vadd.f32 %v782, %v980
      %v982 = vpop.f32.mrb[0].mxu0
      %983 = vmatprep.mubr.f32.mxu0 %v403
      %984 = vmatmul.mubr.f32.gmra.mrb[0].mxu0 %v371
      %v985 = vpop.f32.mrb[0].mxu0
      %v986 = vadd.f32 %v782, %v985
      %v987 = vpop.f32.mrb[0].mxu0
      %988 = vmatprep.mubr.f32.mxu0 %v404
      %989 = vmatmul.mubr.f32.gmra.mrb[0].mxu0 %v372
      %v990 = vpop.f32.mrb[0].mxu0
      %v991 = vadd.f32 %v782, %v990
      %v992 = vpop.f32.mrb[0].mxu0
      %993 = vmatprep.mubr.f32.mxu0 %v405
      %994 = vmatmul.mubr.f32.gmra.mrb[0].mxu0 %v373
      %v995 = vpop.f32.mrb[0].mxu0
      %v996 = vadd.f32 %v782, %v995
      %v997 = vpop.f32.mrb[0].mxu0
      %998 = vmatprep.mubr.f32.mxu0 %v406
      %999 = vmatmul.mubr.f32.gmra.mrb[0].mxu0 %v374
      %v1000 = vpop.f32.mrb[0].mxu0
      %v1001 = vadd.f32 %v782, %v1000
      %v1002 = vpop.f32.mrb[0].mxu0
      %1003 = vmatprep.mubr.f32.mxu0 %v407
      %1004 = vmatmul.mubr.f32.gmra.mrb[0].mxu0 %v375
      %v1005 = vpop.f32.mrb[0].mxu0
      %v1006 = vadd.f32 %v782, %v1005
      %v1007 = vpop.f32.mrb[0].mxu0
      %1008 = vdwg.mxu0
      %1009 = vmatprep.subr.mxu0 0.0
      %1010 = vmatpush1.msra.mxu0 %v665
      %1011 = vmatprep.subr.mxu0 0.0
      %1012 = vmatpush1.msra.mxu0 %v666
      %1013 = vmatprep.subr.mxu0 0.0
      %1014 = vmatpush1.msra.mxu0 %v667
      %1015 = vmatprep.subr.mxu0 0.0
      %1016 = vmatpush1.msra.mxu0 %v668
      %1017 = vmatprep.subr.mxu0 0.0
      %1018 = vmatpush1.msra.mxu0 %v669
      %1019 = vmatprep.subr.mxu0 0.0
      %1020 = vmatpush1.msra.mxu0 %v670
      %1021 = vmatprep.subr.mxu0 0.0
      %1022 = vmatpush1.msra.mxu0 %v671
      %1023 = vmatprep.subr.mxu0 0.0
      %1024 = vmatpush1.msra.mxu0 %v672
      %1025 = vmatprep.subr.mxu0 0.0
      %1026 = vmatpush1.msra.mxu0 %v673
      %1027 = vmatprep.subr.mxu0 0.0
      %1028 = vmatpush1.msra.mxu0 %v674
      %1029 = vmatprep.subr.mxu0 0.0
      %1030 = vmatpush1.msra.mxu0 %v675
      %1031 = vmatprep.subr.mxu0 0.0
      %1032 = vmatpush1.msra.mxu0 %v676
      %1033 = vmatprep.subr.mxu0 0.0
      %1034 = vmatpush1.msra.mxu0 %v677
      %1035 = vmatprep.subr.mxu0 0.0
      %1036 = vmatpush1.msra.mxu0 %v678
      %1037 = vmatprep.subr.mxu0 0.0
      %1038 = vmatpush1.msra.mxu0 %v679
      %1039 = vmatprep.subr.mxu0 0.0
      %1040 = vmatpush1.msra.mxu0 %v680
      %1041 = vmatprep.subr.mxu0 0.0
      %1042 = vmatpush1.msra.mxu0 %v681
      %1043 = vmatprep.subr.mxu0 0.0
      %1044 = vmatpush1.msra.mxu0 %v682
      %1045 = vmatprep.subr.mxu0 0.0
      %1046 = vmatpush1.msra.mxu0 %v683
      %1047 = vmatprep.subr.mxu0 0.0
      %1048 = vmatpush1.msra.mxu0 %v684
      %1049 = vmatprep.subr.mxu0 0.0
      %1050 = vmatpush1.msra.mxu0 %v685
      %1051 = vmatprep.subr.mxu0 0.0
      %1052 = vmatpush1.msra.mxu0 %v686
      %1053 = vmatprep.subr.mxu0 0.0
      %1054 = vmatpush1.msra.mxu0 %v687
      %1055 = vmatprep.subr.mxu0 0.0
      %1056 = vmatpush1.msra.mxu0 %v688
      %1057 = vmatprep.subr.mxu0 0.0
      %1058 = vmatpush1.msra.mxu0 %v689
      %1059 = vmatprep.subr.mxu0 0.0
      %1060 = vmatpush1.msra.mxu0 %v690
      %1061 = vmatprep.subr.mxu0 0.0
      %1062 = vmatpush1.msra.mxu0 %v691
      %1063 = vmatprep.subr.mxu0 0.0
      %1064 = vmatpush1.msra.mxu0 %v692
      %1065 = vmatprep.subr.mxu0 0.0
      %1066 = vmatpush1.msra.mxu0 %v693
      %1067 = vmatprep.subr.mxu0 0.0
      %1068 = vmatpush1.msra.mxu0 %v694
      %1069 = vmatprep.subr.mxu0 0.0
      %1070 = vmatpush1.msra.mxu0 %v695
      %1071 = vmatprep.subr.mxu0 0.0
      %1072 = vmatpush1.msra.mxu0 %v696
      %1073 = vmatprep.mubr.f32.mxu0 %v440
      %1074 = vmatmul.mubr.f32.gmra.mrb[0].mxu0 %v408
      %v1075 = vpop.f32.mrb[0].mxu0
      %v1076 = vadd.f32 %v851, %v1075
      %v1077 = vpop.f32.mrb[0].mxu0
      %1078 = vmatprep.mubr.f32.mxu0 %v441
      %1079 = vmatmul.mubr.f32.gmra.mrb[0].mxu0 %v409
      %v1080 = vpop.f32.mrb[0].mxu0
      %v1081 = vadd.f32 %v856, %v1080
      %v1082 = vpop.f32.mrb[0].mxu0
      %1083 = vmatprep.mubr.f32.mxu0 %v442
      %1084 = vmatmul.mubr.f32.gmra.mrb[0].mxu0 %v410
      %v1085 = vpop.f32.mrb[0].mxu0
      %v1086 = vadd.f32 %v861, %v1085
      %v1087 = vpop.f32.mrb[0].mxu0
      %1088 = vmatprep.mubr.f32.mxu0 %v443
      %1089 = vmatmul.mubr.f32.gmra.mrb[0].mxu0 %v411
      %v1090 = vpop.f32.mrb[0].mxu0
      %v1091 = vadd.f32 %v866, %v1090
      %v1092 = vpop.f32.mrb[0].mxu0
      %1093 = vmatprep.mubr.f32.mxu0 %v444
      %1094 = vmatmul.mubr.f32.gmra.mrb[0].mxu0 %v412
      %v1095 = vpop.f32.mrb[0].mxu0
      %v1096 = vadd.f32 %v871, %v1095
      %v1097 = vpop.f32.mrb[0].mxu0
      %1098 = vmatprep.mubr.f32.mxu0 %v445
      %1099 = vmatmul.mubr.f32.gmra.mrb[0].mxu0 %v413
      %v1100 = vpop.f32.mrb[0].mxu0
      %v1101 = vadd.f32 %v876, %v1100
      %v1102 = vpop.f32.mrb[0].mxu0
      %1103 = vmatprep.mubr.f32.mxu0 %v446
      %1104 = vmatmul.mubr.f32.gmra.mrb[0].mxu0 %v414
      %v1105 = vpop.f32.mrb[0].mxu0
      %v1106 = vadd.f32 %v881, %v1105
      %v1107 = vpop.f32.mrb[0].mxu0
      %1108 = vmatprep.mubr.f32.mxu0 %v447
      %1109 = vmatmul.mubr.f32.gmra.mrb[0].mxu0 %v415
      %v1110 = vpop.f32.mrb[0].mxu0
      %v1111 = vadd.f32 %v886, %v1110
      %v1112 = vpop.f32.mrb[0].mxu0
      %1113 = vmatprep.mubr.f32.mxu0 %v448
      %1114 = vmatmul.mubr.f32.gmra.mrb[0].mxu0 %v416
      %v1115 = vpop.f32.mrb[0].mxu0
      %v1116 = vadd.f32 %v891, %v1115
      %v1117 = vpop.f32.mrb[0].mxu0
      %1118 = vmatprep.mubr.f32.mxu0 %v449
      %1119 = vmatmul.mubr.f32.gmra.mrb[0].mxu0 %v417
      %v1120 = vpop.f32.mrb[0].mxu0
      %v1121 = vadd.f32 %v896, %v1120
      %v1122 = vpop.f32.mrb[0].mxu0
      %1123 = vmatprep.mubr.f32.mxu0 %v450
      %1124 = vmatmul.mubr.f32.gmra.mrb[0].mxu0 %v418
      %v1125 = vpop.f32.mrb[0].mxu0
      %v1126 = vadd.f32 %v901, %v1125
      %v1127 = vpop.f32.mrb[0].mxu0
      %1128 = vmatprep.mubr.f32.mxu0 %v451
      %1129 = vmatmul.mubr.f32.gmra.mrb[0].mxu0 %v419
      %v1130 = vpop.f32.mrb[0].mxu0
      %v1131 = vadd.f32 %v906, %v1130
      %v1132 = vpop.f32.mrb[0].mxu0
      %1133 = vmatprep.mubr.f32.mxu0 %v452
      %1134 = vmatmul.mubr.f32.gmra.mrb[0].mxu0 %v420
      %v1135 = vpop.f32.mrb[0].mxu0
      %v1136 = vadd.f32 %v911, %v1135
      %v1137 = vpop.f32.mrb[0].mxu0
      %1138 = vmatprep.mubr.f32.mxu0 %v453
      %1139 = vmatmul.mubr.f32.gmra.mrb[0].mxu0 %v421
      %v1140 = vpop.f32.mrb[0].mxu0
      %v1141 = vadd.f32 %v916, %v1140
      %v1142 = vpop.f32.mrb[0].mxu0
      %1143 = vmatprep.mubr.f32.mxu0 %v454
      %1144 = vmatmul.mubr.f32.gmra.mrb[0].mxu0 %v422
      %v1145 = vpop.f32.mrb[0].mxu0
      %v1146 = vadd.f32 %v921, %v1145
      %v1147 = vpop.f32.mrb[0].mxu0
      %1148 = vmatprep.mubr.f32.mxu0 %v455
      %1149 = vmatmul.mubr.f32.gmra.mrb[0].mxu0 %v423
      %v1150 = vpop.f32.mrb[0].mxu0
      %v1151 = vadd.f32 %v926, %v1150
      %v1152 = vpop.f32.mrb[0].mxu0
      %1153 = vmatprep.mubr.f32.mxu0 %v456
      %1154 = vmatmul.mubr.f32.gmra.mrb[0].mxu0 %v424
      %v1155 = vpop.f32.mrb[0].mxu0
      %v1156 = vadd.f32 %v931, %v1155
      %v1157 = vpop.f32.mrb[0].mxu0
      %1158 = vmatprep.mubr.f32.mxu0 %v457
      %1159 = vmatmul.mubr.f32.gmra.mrb[0].mxu0 %v425
      %v1160 = vpop.f32.mrb[0].mxu0
      %v1161 = vadd.f32 %v936, %v1160
      %v1162 = vpop.f32.mrb[0].mxu0
      %1163 = vmatprep.mubr.f32.mxu0 %v458
      %1164 = vmatmul.mubr.f32.gmra.mrb[0].mxu0 %v426
      %v1165 = vpop.f32.mrb[0].mxu0
      %v1166 = vadd.f32 %v941, %v1165
      %v1167 = vpop.f32.mrb[0].mxu0
      %1168 = vmatprep.mubr.f32.mxu0 %v459
      %1169 = vmatmul.mubr.f32.gmra.mrb[0].mxu0 %v427
      %v1170 = vpop.f32.mrb[0].mxu0
      %v1171 = vadd.f32 %v946, %v1170
      %v1172 = vpop.f32.mrb[0].mxu0
      %1173 = vmatprep.mubr.f32.mxu0 %v460
      %1174 = vmatmul.mubr.f32.gmra.mrb[0].mxu0 %v428
      %v1175 = vpop.f32.mrb[0].mxu0
      %v1176 = vadd.f32 %v951, %v1175
      %v1177 = vpop.f32.mrb[0].mxu0
      %1178 = vmatprep.mubr.f32.mxu0 %v461
      %1179 = vmatmul.mubr.f32.gmra.mrb[0].mxu0 %v429
      %v1180 = vpop.f32.mrb[0].mxu0
      %v1181 = vadd.f32 %v956, %v1180
      %v1182 = vpop.f32.mrb[0].mxu0
      %1183 = vmatprep.mubr.f32.mxu0 %v462
      %1184 = vmatmul.mubr.f32.gmra.mrb[0].mxu0 %v430
      %v1185 = vpop.f32.mrb[0].mxu0
      %v1186 = vadd.f32 %v961, %v1185
      %v1187 = vpop.f32.mrb[0].mxu0
      %1188 = vmatprep.mubr.f32.mxu0 %v463
      %1189 = vmatmul.mubr.f32.gmra.mrb[0].mxu0 %v431
      %v1190 = vpop.f32.mrb[0].mxu0
      %v1191 = vadd.f32 %v966, %v1190
      %v1192 = vpop.f32.mrb[0].mxu0
      %1193 = vmatprep.mubr.f32.mxu0 %v464
      %1194 = vmatmul.mubr.f32.gmra.mrb[0].mxu0 %v432
      %v1195 = vpop.f32.mrb[0].mxu0
      %v1196 = vadd.f32 %v971, %v1195
      %v1197 = vpop.f32.mrb[0].mxu0
      %1198 = vmatprep.mubr.f32.mxu0 %v465
      %1199 = vmatmul.mubr.f32.gmra.mrb[0].mxu0 %v433
      %v1200 = vpop.f32.mrb[0].mxu0
      %v1201 = vadd.f32 %v976, %v1200
      %v1202 = vpop.f32.mrb[0].mxu0
      %1203 = vmatprep.mubr.f32.mxu0 %v466
      %1204 = vmatmul.mubr.f32.gmra.mrb[0].mxu0 %v434
      %v1205 = vpop.f32.mrb[0].mxu0
      %v1206 = vadd.f32 %v981, %v1205
      %v1207 = vpop.f32.mrb[0].mxu0
      %1208 = vmatprep.mubr.f32.mxu0 %v467
      %1209 = vmatmul.mubr.f32.gmra.mrb[0].mxu0 %v435
      %v1210 = vpop.f32.mrb[0].mxu0
      %v1211 = vadd.f32 %v986, %v1210
      %v1212 = vpop.f32.mrb[0].mxu0
      %1213 = vmatprep.mubr.f32.mxu0 %v468
      %1214 = vmatmul.mubr.f32.gmra.mrb[0].mxu0 %v436
      %v1215 = vpop.f32.mrb[0].mxu0
      %v1216 = vadd.f32 %v991, %v1215
      %v1217 = vpop.f32.mrb[0].mxu0
      %1218 = vmatprep.mubr.f32.mxu0 %v469
      %1219 = vmatmul.mubr.f32.gmra.mrb[0].mxu0 %v437
      %v1220 = vpop.f32.mrb[0].mxu0
      %v1221 = vadd.f32 %v996, %v1220
      %v1222 = vpop.f32.mrb[0].mxu0
      %1223 = vmatprep.mubr.f32.mxu0 %v470
      %1224 = vmatmul.mubr.f32.gmra.mrb[0].mxu0 %v438
      %v1225 = vpop.f32.mrb[0].mxu0
      %v1226 = vadd.f32 %v1001, %v1225
      %v1227 = vpop.f32.mrb[0].mxu0
      %1228 = vmatprep.mubr.f32.mxu0 %v471
      %1229 = vmatmul.mubr.f32.gmra.mrb[0].mxu0 %v439
      %v1230 = vpop.f32.mrb[0].mxu0
      %v1231 = vadd.f32 %v1006, %v1230
      %v1232 = vpop.f32.mrb[0].mxu0
      %1233 = vdwg.mxu0
      %1234 = vmatprep.subr.mxu0 0.0
      %1235 = vmatpush1.msra.mxu0 %v697
      %1236 = vmatprep.subr.mxu0 0.0
      %1237 = vmatpush1.msra.mxu0 %v698
      %1238 = vmatprep.subr.mxu0 0.0
      %1239 = vmatpush1.msra.mxu0 %v699
      %1240 = vmatprep.subr.mxu0 0.0
      %1241 = vmatpush1.msra.mxu0 %v700
      %1242 = vmatprep.subr.mxu0 0.0
      %1243 = vmatpush1.msra.mxu0 %v701
      %1244 = vmatprep.subr.mxu0 0.0
      %1245 = vmatpush1.msra.mxu0 %v702
      %1246 = vmatprep.subr.mxu0 0.0
      %1247 = vmatpush1.msra.mxu0 %v703
      %1248 = vmatprep.subr.mxu0 0.0
      %1249 = vmatpush1.msra.mxu0 %v704
      %1250 = vmatprep.subr.mxu0 0.0
      %1251 = vmatpush1.msra.mxu0 %v705
      %1252 = vmatprep.subr.mxu0 0.0
      %1253 = vmatpush1.msra.mxu0 %v706
      %1254 = vmatprep.subr.mxu0 0.0
      %1255 = vmatpush1.msra.mxu0 %v707
      %1256 = vmatprep.subr.mxu0 0.0
      %1257 = vmatpush1.msra.mxu0 %v708
      %1258 = vmatprep.subr.mxu0 0.0
      %1259 = vmatpush1.msra.mxu0 %v709
      %1260 = vmatprep.subr.mxu0 0.0
      %1261 = vmatpush1.msra.mxu0 %v710
      %1262 = vmatprep.subr.mxu0 0.0
      %1263 = vmatpush1.msra.mxu0 %v711
      %1264 = vmatprep.subr.mxu0 0.0
      %1265 = vmatpush1.msra.mxu0 %v712
      %1266 = vmatprep.subr.mxu0 0.0
      %1267 = vmatpush1.msra.mxu0 %v713
      %1268 = vmatprep.subr.mxu0 0.0
      %1269 = vmatpush1.msra.mxu0 %v714
      %1270 = vmatprep.subr.mxu0 0.0
      %1271 = vmatpush1.msra.mxu0 %v715
      %1272 = vmatprep.subr.mxu0 0.0
      %1273 = vmatpush1.msra.mxu0 %v716
      %1274 = vmatprep.subr.mxu0 0.0
      %1275 = vmatpush1.msra.mxu0 %v717
      %1276 = vmatprep.subr.mxu0 0.0
      %1277 = vmatpush1.msra.mxu0 %v718
      %1278 = vmatprep.subr.mxu0 0.0
      %1279 = vmatpush1.msra.mxu0 %v719
      %1280 = vmatprep.subr.mxu0 0.0
      %1281 = vmatpush1.msra.mxu0 %v720
      %1282 = vmatprep.subr.mxu0 0.0
      %1283 = vmatpush1.msra.mxu0 %v721
      %1284 = vmatprep.subr.mxu0 0.0
      %1285 = vmatpush1.msra.mxu0 %v722
      %1286 = vmatprep.subr.mxu0 0.0
      %1287 = vmatpush1.msra.mxu0 %v723
      %1288 = vmatprep.subr.mxu0 0.0
      %1289 = vmatpush1.msra.mxu0 %v724
      %1290 = vmatprep.subr.mxu0 0.0
      %1291 = vmatpush1.msra.mxu0 %v725
      %1292 = vmatprep.subr.mxu0 0.0
      %1293 = vmatpush1.msra.mxu0 %v726
      %1294 = vmatprep.subr.mxu0 0.0
      %1295 = vmatpush1.msra.mxu0 %v727
      %1296 = vmatprep.subr.mxu0 0.0
      %1297 = vmatpush1.msra.mxu0 %v728
      %1298 = vmatprep.mubr.f32.mxu0 %v504
      %1299 = vmatmul.mubr.f32.gmra.mrb[0].mxu0 %v472
      %v1300 = vpop.f32.mrb[0].mxu0
      %v1301 = vadd.f32 %v1076, %v1300
      %v1302 = vpop.f32.mrb[0].mxu0
      %1303 = vmatprep.mubr.f32.mxu0 %v505
      %1304 = vmatmul.mubr.f32.gmra.mrb[0].mxu0 %v473
      %v1305 = vpop.f32.mrb[0].mxu0
      %v1306 = vadd.f32 %v1081, %v1305
      %v1307 = vpop.f32.mrb[0].mxu0
      %1308 = vmatprep.mubr.f32.mxu0 %v506
      %1309 = vmatmul.mubr.f32.gmra.mrb[0].mxu0 %v474
      %v1310 = vpop.f32.mrb[0].mxu0
      %v1311 = vadd.f32 %v1086, %v1310
      %v1312 = vpop.f32.mrb[0].mxu0
      %1313 = vmatprep.mubr.f32.mxu0 %v507
      %1314 = vmatmul.mubr.f32.gmra.mrb[0].mxu0 %v475
      %v1315 = vpop.f32.mrb[0].mxu0
      %v1316 = vadd.f32 %v1091, %v1315
      %v1317 = vpop.f32.mrb[0].mxu0
      %1318 = vmatprep.mubr.f32.mxu0 %v508
      %1319 = vmatmul.mubr.f32.gmra.mrb[0].mxu0 %v476
      %v1320 = vpop.f32.mrb[0].mxu0
      %v1321 = vadd.f32 %v1096, %v1320
      %v1322 = vpop.f32.mrb[0].mxu0
      %1323 = vmatprep.mubr.f32.mxu0 %v509
      %1324 = vmatmul.mubr.f32.gmra.mrb[0].mxu0 %v477
      %v1325 = vpop.f32.mrb[0].mxu0
      %v1326 = vadd.f32 %v1101, %v1325
      %v1327 = vpop.f32.mrb[0].mxu0
      %1328 = vmatprep.mubr.f32.mxu0 %v510
      %1329 = vmatmul.mubr.f32.gmra.mrb[0].mxu0 %v478
      %v1330 = vpop.f32.mrb[0].mxu0
      %v1331 = vadd.f32 %v1106, %v1330
      %v1332 = vpop.f32.mrb[0].mxu0
      %1333 = vmatprep.mubr.f32.mxu0 %v511
      %1334 = vmatmul.mubr.f32.gmra.mrb[0].mxu0 %v479
      %v1335 = vpop.f32.mrb[0].mxu0
      %v1336 = vadd.f32 %v1111, %v1335
      %v1337 = vpop.f32.mrb[0].mxu0
      %1338 = vmatprep.mubr.f32.mxu0 %v512
      %1339 = vmatmul.mubr.f32.gmra.mrb[0].mxu0 %v480
      %v1340 = vpop.f32.mrb[0].mxu0
      %v1341 = vadd.f32 %v1116, %v1340
      %v1342 = vpop.f32.mrb[0].mxu0
      %1343 = vmatprep.mubr.f32.mxu0 %v513
      %1344 = vmatmul.mubr.f32.gmra.mrb[0].mxu0 %v481
      %v1345 = vpop.f32.mrb[0].mxu0
      %v1346 = vadd.f32 %v1121, %v1345
      %v1347 = vpop.f32.mrb[0].mxu0
      %1348 = vmatprep.mubr.f32.mxu0 %v514
      %1349 = vmatmul.mubr.f32.gmra.mrb[0].mxu0 %v482
      %v1350 = vpop.f32.mrb[0].mxu0
      %v1351 = vadd.f32 %v1126, %v1350
      %v1352 = vpop.f32.mrb[0].mxu0
      %1353 = vmatprep.mubr.f32.mxu0 %v515
      %1354 = vmatmul.mubr.f32.gmra.mrb[0].mxu0 %v483
      %v1355 = vpop.f32.mrb[0].mxu0
      %v1356 = vadd.f32 %v1131, %v1355
      %v1357 = vpop.f32.mrb[0].mxu0
      %1358 = vmatprep.mubr.f32.mxu0 %v516
      %1359 = vmatmul.mubr.f32.gmra.mrb[0].mxu0 %v484
      %v1360 = vpop.f32.mrb[0].mxu0
      %v1361 = vadd.f32 %v1136, %v1360
      %v1362 = vpop.f32.mrb[0].mxu0
      %1363 = vmatprep.mubr.f32.mxu0 %v517
      %1364 = vmatmul.mubr.f32.gmra.mrb[0].mxu0 %v485
      %v1365 = vpop.f32.mrb[0].mxu0
      %v1366 = vadd.f32 %v1141, %v1365
      %v1367 = vpop.f32.mrb[0].mxu0
      %1368 = vmatprep.mubr.f32.mxu0 %v518
      %1369 = vmatmul.mubr.f32.gmra.mrb[0].mxu0 %v486
      %v1370 = vpop.f32.mrb[0].mxu0
      %v1371 = vadd.f32 %v1146, %v1370
      %v1372 = vpop.f32.mrb[0].mxu0
      %1373 = vmatprep.mubr.f32.mxu0 %v519
      %1374 = vmatmul.mubr.f32.gmra.mrb[0].mxu0 %v487
      %v1375 = vpop.f32.mrb[0].mxu0
      %v1376 = vadd.f32 %v1151, %v1375
      %v1377 = vpop.f32.mrb[0].mxu0
      %1378 = vmatprep.mubr.f32.mxu0 %v520
      %1379 = vmatmul.mubr.f32.gmra.mrb[0].mxu0 %v488
      %v1380 = vpop.f32.mrb[0].mxu0
      %v1381 = vadd.f32 %v1156, %v1380
      %v1382 = vpop.f32.mrb[0].mxu0
      %1383 = vmatprep.mubr.f32.mxu0 %v521
      %1384 = vmatmul.mubr.f32.gmra.mrb[0].mxu0 %v489
      %v1385 = vpop.f32.mrb[0].mxu0
      %v1386 = vadd.f32 %v1161, %v1385
      %v1387 = vpop.f32.mrb[0].mxu0
      %1388 = vmatprep.mubr.f32.mxu0 %v522
      %1389 = vmatmul.mubr.f32.gmra.mrb[0].mxu0 %v490
      %v1390 = vpop.f32.mrb[0].mxu0
      %v1391 = vadd.f32 %v1166, %v1390
      %v1392 = vpop.f32.mrb[0].mxu0
      %1393 = vmatprep.mubr.f32.mxu0 %v523
      %1394 = vmatmul.mubr.f32.gmra.mrb[0].mxu0 %v491
      %v1395 = vpop.f32.mrb[0].mxu0
      %v1396 = vadd.f32 %v1171, %v1395
      %v1397 = vpop.f32.mrb[0].mxu0
      %1398 = vmatprep.mubr.f32.mxu0 %v524
      %1399 = vmatmul.mubr.f32.gmra.mrb[0].mxu0 %v492
      %v1400 = vpop.f32.mrb[0].mxu0
      %v1401 = vadd.f32 %v1176, %v1400
      %v1402 = vpop.f32.mrb[0].mxu0
      %1403 = vmatprep.mubr.f32.mxu0 %v525
      %1404 = vmatmul.mubr.f32.gmra.mrb[0].mxu0 %v493
      %v1405 = vpop.f32.mrb[0].mxu0
      %v1406 = vadd.f32 %v1181, %v1405
      %v1407 = vpop.f32.mrb[0].mxu0
      %1408 = vmatprep.mubr.f32.mxu0 %v526
      %1409 = vmatmul.mubr.f32.gmra.mrb[0].mxu0 %v494
      %v1410 = vpop.f32.mrb[0].mxu0
      %v1411 = vadd.f32 %v1186, %v1410
      %v1412 = vpop.f32.mrb[0].mxu0
      %1413 = vmatprep.mubr.f32.mxu0 %v527
      %1414 = vmatmul.mubr.f32.gmra.mrb[0].mxu0 %v495
      %v1415 = vpop.f32.mrb[0].mxu0
      %v1416 = vadd.f32 %v1191, %v1415
      %v1417 = vpop.f32.mrb[0].mxu0
      %1418 = vmatprep.mubr.f32.mxu0 %v528
      %1419 = vmatmul.mubr.f32.gmra.mrb[0].mxu0 %v496
      %v1420 = vpop.f32.mrb[0].mxu0
      %v1421 = vadd.f32 %v1196, %v1420
      %v1422 = vpop.f32.mrb[0].mxu0
      %1423 = vmatprep.mubr.f32.mxu0 %v529
      %1424 = vmatmul.mubr.f32.gmra.mrb[0].mxu0 %v497
      %v1425 = vpop.f32.mrb[0].mxu0
      %v1426 = vadd.f32 %v1201, %v1425
      %v1427 = vpop.f32.mrb[0].mxu0
      %1428 = vmatprep.mubr.f32.mxu0 %v530
      %1429 = vmatmul.mubr.f32.gmra.mrb[0].mxu0 %v498
      %v1430 = vpop.f32.mrb[0].mxu0
      %v1431 = vadd.f32 %v1206, %v1430
      %v1432 = vpop.f32.mrb[0].mxu0
      %1433 = vmatprep.mubr.f32.mxu0 %v531
      %1434 = vmatmul.mubr.f32.gmra.mrb[0].mxu0 %v499
      %v1435 = vpop.f32.mrb[0].mxu0
      %v1436 = vadd.f32 %v1211, %v1435
      %v1437 = vpop.f32.mrb[0].mxu0
      %1438 = vmatprep.mubr.f32.mxu0 %v532
      %1439 = vmatmul.mubr.f32.gmra.mrb[0].mxu0 %v500
      %v1440 = vpop.f32.mrb[0].mxu0
      %v1441 = vadd.f32 %v1216, %v1440
      %v1442 = vpop.f32.mrb[0].mxu0
      %1443 = vmatprep.mubr.f32.mxu0 %v533
      %1444 = vmatmul.mubr.f32.gmra.mrb[0].mxu0 %v501
      %v1445 = vpop.f32.mrb[0].mxu0
      %v1446 = vadd.f32 %v1221, %v1445
      %v1447 = vpop.f32.mrb[0].mxu0
      %1448 = vmatprep.mubr.f32.mxu0 %v534
      %1449 = vmatmul.mubr.f32.gmra.mrb[0].mxu0 %v502
      %v1450 = vpop.f32.mrb[0].mxu0
      %v1451 = vadd.f32 %v1226, %v1450
      %v1452 = vpop.f32.mrb[0].mxu0
      %1453 = vmatprep.mubr.f32.mxu0 %v535
      %1454 = vmatmul.mubr.f32.gmra.mrb[0].mxu0 %v503
      %v1455 = vpop.f32.mrb[0].mxu0
      %v1456 = vadd.f32 %v1231, %v1455
      %v1457 = vpop.f32.mrb[0].mxu0
      %1458 = vdwg.mxu0
      %1459 = vmatprep.subr.mxu0 0.0
      %1460 = vmatpush1.msra.mxu0 %v729
      %1461 = vmatprep.subr.mxu0 0.0
      %1462 = vmatpush1.msra.mxu0 %v730
      %1463 = vmatprep.subr.mxu0 0.0
      %1464 = vmatpush1.msra.mxu0 %v731
      %1465 = vmatprep.subr.mxu0 0.0
      %1466 = vmatpush1.msra.mxu0 %v732
      %1467 = vmatprep.subr.mxu0 0.0
      %1468 = vmatpush1.msra.mxu0 %v733
      %1469 = vmatprep.subr.mxu0 0.0
      %1470 = vmatpush1.msra.mxu0 %v734
      %1471 = vmatprep.subr.mxu0 0.0
      %1472 = vmatpush1.msra.mxu0 %v735
      %1473 = vmatprep.subr.mxu0 0.0
      %1474 = vmatpush1.msra.mxu0 %v736
      %1475 = vmatprep.subr.mxu0 0.0
      %1476 = vmatpush1.msra.mxu0 %v737
      %1477 = vmatprep.subr.mxu0 0.0
      %1478 = vmatpush1.msra.mxu0 %v738
      %1479 = vmatprep.subr.mxu0 0.0
      %1480 = vmatpush1.msra.mxu0 %v739
      %1481 = vmatprep.subr.mxu0 0.0
      %1482 = vmatpush1.msra.mxu0 %v740
      %1483 = vmatprep.subr.mxu0 0.0
      %1484 = vmatpush1.msra.mxu0 %v741
      %1485 = vmatprep.subr.mxu0 0.0
      %1486 = vmatpush1.msra.mxu0 %v742
      %1487 = vmatprep.subr.mxu0 0.0
      %1488 = vmatpush1.msra.mxu0 %v743
      %1489 = vmatprep.subr.mxu0 0.0
      %1490 = vmatpush1.msra.mxu0 %v744
      %1491 = vmatprep.subr.mxu0 0.0
      %1492 = vmatpush1.msra.mxu0 %v745
      %1493 = vmatprep.subr.mxu0 0.0
      %1494 = vmatpush1.msra.mxu0 %v746
      %1495 = vmatprep.subr.mxu0 0.0
      %1496 = vmatpush1.msra.mxu0 %v747
      %1497 = vmatprep.subr.mxu0 0.0
      %1498 = vmatpush1.msra.mxu0 %v748
      %1499 = vmatprep.subr.mxu0 0.0
      %1500 = vmatpush1.msra.mxu0 %v749
      %1501 = vmatprep.subr.mxu0 0.0
      %1502 = vmatpush1.msra.mxu0 %v750
      %1503 = vmatprep.subr.mxu0 0.0
      %1504 = vmatpush1.msra.mxu0 %v751
      %1505 = vmatprep.subr.mxu0 0.0
      %1506 = vmatpush1.msra.mxu0 %v752
      %1507 = vmatprep.subr.mxu0 0.0
      %1508 = vmatpush1.msra.mxu0 %v753
      %1509 = vmatprep.subr.mxu0 0.0
      %1510 = vmatpush1.msra.mxu0 %v754
      %1511 = vmatprep.subr.mxu0 0.0
      %1512 = vmatpush1.msra.mxu0 %v755
      %1513 = vmatprep.subr.mxu0 0.0
      %1514 = vmatpush1.msra.mxu0 %v756
      %1515 = vmatprep.subr.mxu0 0.0
      %1516 = vmatpush1.msra.mxu0 %v757
      %1517 = vmatprep.subr.mxu0 0.0
      %1518 = vmatpush1.msra.mxu0 %v758
      %1519 = vmatprep.subr.mxu0 0.0
      %1520 = vmatpush1.msra.mxu0 %v759
      %1521 = vmatprep.subr.mxu0 0.0
      %1522 = vmatpush1.msra.mxu0 %v760
      %1523 = vmatprep.mubr.f32.mxu0 %v569
      %1524 = vmatmul.mubr.f32.gmra.mrb[0].mxu0 %v537
      %v1525 = vpop.f32.mrb[0].mxu0
      %v1526 = vadd.f32 %v1301, %v1525
      %v1527 = vpop.f32.mrb[0].mxu0
      %1528 = vmatprep.mubr.f32.mxu0 %v570
      %1529 = vmatmul.mubr.f32.gmra.mrb[0].mxu0 %v538
      %v1530 = vpop.f32.mrb[0].mxu0
      %v1531 = vadd.f32 %v1306, %v1530
      %v1532 = vpop.f32.mrb[0].mxu0
      %1533 = vmatprep.mubr.f32.mxu0 %v571
      %1534 = vmatmul.mubr.f32.gmra.mrb[0].mxu0 %v539
      %v1535 = vpop.f32.mrb[0].mxu0
      %v1536 = vadd.f32 %v1311, %v1535
      %v1537 = vpop.f32.mrb[0].mxu0
      %1538 = vmatprep.mubr.f32.mxu0 %v572
      %1539 = vmatmul.mubr.f32.gmra.mrb[0].mxu0 %v540
      %v1540 = vpop.f32.mrb[0].mxu0
      %v1541 = vadd.f32 %v1316, %v1540
      %v1542 = vpop.f32.mrb[0].mxu0
      %1543 = vmatprep.mubr.f32.mxu0 %v573
      %1544 = vmatmul.mubr.f32.gmra.mrb[0].mxu0 %v541
      %v1545 = vpop.f32.mrb[0].mxu0
      %v1546 = vadd.f32 %v1321, %v1545
      %v1547 = vpop.f32.mrb[0].mxu0
      %1548 = vmatprep.mubr.f32.mxu0 %v574
      %1549 = vmatmul.mubr.f32.gmra.mrb[0].mxu0 %v542
      %v1550 = vpop.f32.mrb[0].mxu0
      %v1551 = vadd.f32 %v1326, %v1550
      %v1552 = vpop.f32.mrb[0].mxu0
      %1553 = vmatprep.mubr.f32.mxu0 %v575
      %1554 = vmatmul.mubr.f32.gmra.mrb[0].mxu0 %v543
      %v1555 = vpop.f32.mrb[0].mxu0
      %v1556 = vadd.f32 %v1331, %v1555
      %v1557 = vpop.f32.mrb[0].mxu0
      %1558 = vmatprep.mubr.f32.mxu0 %v576
      %1559 = vmatmul.mubr.f32.gmra.mrb[0].mxu0 %v544
      %v1560 = vpop.f32.mrb[0].mxu0
      %v1561 = vadd.f32 %v1336, %v1560
      %v1562 = vpop.f32.mrb[0].mxu0
      %1563 = vmatprep.mubr.f32.mxu0 %v577
      %1564 = vmatmul.mubr.f32.gmra.mrb[0].mxu0 %v545
      %v1565 = vpop.f32.mrb[0].mxu0
      %v1566 = vadd.f32 %v1341, %v1565
      %v1567 = vpop.f32.mrb[0].mxu0
      %1568 = vmatprep.mubr.f32.mxu0 %v578
      %1569 = vmatmul.mubr.f32.gmra.mrb[0].mxu0 %v546
      %v1570 = vpop.f32.mrb[0].mxu0
      %v1571 = vadd.f32 %v1346, %v1570
      %v1572 = vpop.f32.mrb[0].mxu0
      %1573 = vmatprep.mubr.f32.mxu0 %v579
      %1574 = vmatmul.mubr.f32.gmra.mrb[0].mxu0 %v547
      %v1575 = vpop.f32.mrb[0].mxu0
      %v1576 = vadd.f32 %v1351, %v1575
      %v1577 = vpop.f32.mrb[0].mxu0
      %1578 = vmatprep.mubr.f32.mxu0 %v580
      %1579 = vmatmul.mubr.f32.gmra.mrb[0].mxu0 %v548
      %v1580 = vpop.f32.mrb[0].mxu0
      %v1581 = vadd.f32 %v1356, %v1580
      %v1582 = vpop.f32.mrb[0].mxu0
      %1583 = vmatprep.mubr.f32.mxu0 %v581
      %1584 = vmatmul.mubr.f32.gmra.mrb[0].mxu0 %v549
      %v1585 = vpop.f32.mrb[0].mxu0
      %v1586 = vadd.f32 %v1361, %v1585
      %v1587 = vpop.f32.mrb[0].mxu0
      %1588 = vmatprep.mubr.f32.mxu0 %v582
      %1589 = vmatmul.mubr.f32.gmra.mrb[0].mxu0 %v550
      %v1590 = vpop.f32.mrb[0].mxu0
      %v1591 = vadd.f32 %v1366, %v1590
      %v1592 = vpop.f32.mrb[0].mxu0
      %1593 = vmatprep.mubr.f32.mxu0 %v583
      %1594 = vmatmul.mubr.f32.gmra.mrb[0].mxu0 %v551
      %v1595 = vpop.f32.mrb[0].mxu0
      %v1596 = vadd.f32 %v1371, %v1595
      %v1597 = vpop.f32.mrb[0].mxu0
      %1598 = vmatprep.mubr.f32.mxu0 %v584
      %1599 = vmatmul.mubr.f32.gmra.mrb[0].mxu0 %v552
      %v1600 = vpop.f32.mrb[0].mxu0
      %v1601 = vadd.f32 %v1376, %v1600
      %v1602 = vpop.f32.mrb[0].mxu0
      %1603 = vmatprep.mubr.f32.mxu0 %v585
      %1604 = vmatmul.mubr.f32.gmra.mrb[0].mxu0 %v553
      %v1605 = vpop.f32.mrb[0].mxu0
      %v1606 = vadd.f32 %v1381, %v1605
      %v1607 = vpop.f32.mrb[0].mxu0
      %1608 = vmatprep.mubr.f32.mxu0 %v586
      %1609 = vmatmul.mubr.f32.gmra.mrb[0].mxu0 %v554
      %v1610 = vpop.f32.mrb[0].mxu0
      %v1611 = vadd.f32 %v1386, %v1610
      %v1612 = vpop.f32.mrb[0].mxu0
      %1613 = vmatprep.mubr.f32.mxu0 %v587
      %1614 = vmatmul.mubr.f32.gmra.mrb[0].mxu0 %v555
      %v1615 = vpop.f32.mrb[0].mxu0
      %v1616 = vadd.f32 %v1391, %v1615
      %v1617 = vpop.f32.mrb[0].mxu0
      %1618 = vmatprep.mubr.f32.mxu0 %v588
      %1619 = vmatmul.mubr.f32.gmra.mrb[0].mxu0 %v556
      %v1620 = vpop.f32.mrb[0].mxu0
      %v1621 = vadd.f32 %v1396, %v1620
      %v1622 = vpop.f32.mrb[0].mxu0
      %1623 = vmatprep.mubr.f32.mxu0 %v589
      %1624 = vmatmul.mubr.f32.gmra.mrb[0].mxu0 %v557
      %v1625 = vpop.f32.mrb[0].mxu0
      %v1626 = vadd.f32 %v1401, %v1625
      %v1627 = vpop.f32.mrb[0].mxu0
      %1628 = vmatprep.mubr.f32.mxu0 %v590
      %1629 = vmatmul.mubr.f32.gmra.mrb[0].mxu0 %v558
      %v1630 = vpop.f32.mrb[0].mxu0
      %v1631 = vadd.f32 %v1406, %v1630
      %v1632 = vpop.f32.mrb[0].mxu0
      %1633 = vmatprep.mubr.f32.mxu0 %v591
      %1634 = vmatmul.mubr.f32.gmra.mrb[0].mxu0 %v559
      %v1635 = vpop.f32.mrb[0].mxu0
      %v1636 = vadd.f32 %v1411, %v1635
      %v1637 = vpop.f32.mrb[0].mxu0
      %1638 = vmatprep.mubr.f32.mxu0 %v592
      %1639 = vmatmul.mubr.f32.gmra.mrb[0].mxu0 %v560
      %v1640 = vpop.f32.mrb[0].mxu0
      %v1641 = vadd.f32 %v1416, %v1640
      %v1642 = vpop.f32.mrb[0].mxu0
      %1643 = vmatprep.mubr.f32.mxu0 %v593
      %1644 = vmatmul.mubr.f32.gmra.mrb[0].mxu0 %v561
      %v1645 = vpop.f32.mrb[0].mxu0
      %v1646 = vadd.f32 %v1421, %v1645
      %v1647 = vpop.f32.mrb[0].mxu0
      %1648 = vmatprep.mubr.f32.mxu0 %v594
      %1649 = vmatmul.mubr.f32.gmra.mrb[0].mxu0 %v562
      %v1650 = vpop.f32.mrb[0].mxu0
      %v1651 = vadd.f32 %v1426, %v1650
      %v1652 = vpop.f32.mrb[0].mxu0
      %1653 = vmatprep.mubr.f32.mxu0 %v595
      %1654 = vmatmul.mubr.f32.gmra.mrb[0].mxu0 %v563
      %v1655 = vpop.f32.mrb[0].mxu0
      %v1656 = vadd.f32 %v1431, %v1655
      %v1657 = vpop.f32.mrb[0].mxu0
      %1658 = vmatprep.mubr.f32.mxu0 %v596
      %1659 = vmatmul.mubr.f32.gmra.mrb[0].mxu0 %v564
      %v1660 = vpop.f32.mrb[0].mxu0
      %v1661 = vadd.f32 %v1436, %v1660
      %v1662 = vpop.f32.mrb[0].mxu0
      %1663 = vmatprep.mubr.f32.mxu0 %v597
      %1664 = vmatmul.mubr.f32.gmra.mrb[0].mxu0 %v565
      %v1665 = vpop.f32.mrb[0].mxu0
      %v1666 = vadd.f32 %v1441, %v1665
      %v1667 = vpop.f32.mrb[0].mxu0
      %1668 = vmatprep.mubr.f32.mxu0 %v598
      %1669 = vmatmul.mubr.f32.gmra.mrb[0].mxu0 %v566
      %v1670 = vpop.f32.mrb[0].mxu0
      %v1671 = vadd.f32 %v1446, %v1670
      %v1672 = vpop.f32.mrb[0].mxu0
      %1673 = vmatprep.mubr.f32.mxu0 %v599
      %1674 = vmatmul.mubr.f32.gmra.mrb[0].mxu0 %v567
      %v1675 = vpop.f32.mrb[0].mxu0
      %v1676 = vadd.f32 %v1451, %v1675
      %v1677 = vpop.f32.mrb[0].mxu0
      %1678 = vmatprep.mubr.f32.mxu0 %v600
      %1679 = vmatmul.mubr.f32.gmra.mrb[0].mxu0 %v568
      %v1680 = vpop.f32.mrb[0].mxu0
      %v1681 = vadd.f32 %v1456, %v1680
      %v1682 = vpop.f32.mrb[0].mxu0
      %1683 = vdwg.mxu0
      %1684 = vmatprep.subr.mxu0 0.0
      %1685 = vmatpush1.msra.mxu0 %v761
      %1686 = vmatprep.subr.mxu0 0.0
      %1687 = vmatpush1.msra.mxu0 %v762
      %1688 = vmatprep.subr.mxu0 0.0
      %1689 = vmatpush1.msra.mxu0 %v763
      %1690 = vmatprep.subr.mxu0 0.0
      %1691 = vmatpush1.msra.mxu0 %v764
      %1692 = vmatprep.subr.mxu0 0.0
      %1693 = vmatpush1.msra.mxu0 %v765
      %1694 = vmatprep.subr.mxu0 0.0
      %1695 = vmatpush1.msra.mxu0 %v766
      %1696 = vmatprep.subr.mxu0 0.0
      %1697 = vmatpush1.msra.mxu0 %v767
      %1698 = vmatprep.subr.mxu0 0.0
      %1699 = vmatpush1.msra.mxu0 %v768
      %1700 = vmatprep.subr.mxu0 0.0
      %1701 = vmatpush1.msra.mxu0 %v769
      %1702 = vmatprep.subr.mxu0 0.0
      %1703 = vmatpush1.msra.mxu0 %v770
      %1704 = vmatprep.subr.mxu0 0.0
      %1705 = vmatpush1.msra.mxu0 %v771
      %1706 = vmatprep.subr.mxu0 0.0
      %1707 = vmatpush1.msra.mxu0 %v772
      %1708 = vmatprep.subr.mxu0 0.0
      %1709 = vmatpush1.msra.mxu0 %v773
      %1710 = vmatprep.subr.mxu0 0.0
      %1711 = vmatpush1.msra.mxu0 %v774
      %1712 = vmatprep.subr.mxu0 0.0
      %1713 = vmatpush1.msra.mxu0 %v775
      %1714 = vmatprep.subr.mxu0 0.0
      %1715 = vmatpush1.msra.mxu0 %v776
      %1716 = vmatprep.subr.mxu0 0.0
      %1717 = vmatpush1.msra.mxu0 0.0
      %1718 = vmatprep.subr.mxu0 0.0
      %1719 = vmatpush1.msra.mxu0 0.0
      %1720 = vmatprep.subr.mxu0 0.0
      %1721 = vmatpush1.msra.mxu0 0.0
      %1722 = vmatprep.subr.mxu0 0.0
      %1723 = vmatpush1.msra.mxu0 0.0
      %1724 = vmatprep.subr.mxu0 0.0
      %1725 = vmatpush1.msra.mxu0 0.0
      %1726 = vmatprep.subr.mxu0 0.0
      %1727 = vmatpush1.msra.mxu0 0.0
      %1728 = vmatprep.subr.mxu0 0.0
      %1729 = vmatpush1.msra.mxu0 0.0
      %1730 = vmatprep.subr.mxu0 0.0
      %1731 = vmatpush1.msra.mxu0 0.0
      %1732 = vmatprep.subr.mxu0 0.0
      %1733 = vmatpush1.msra.mxu0 0.0
      %1734 = vmatprep.subr.mxu0 0.0
      %1735 = vmatpush1.msra.mxu0 0.0
      %1736 = vmatprep.subr.mxu0 0.0
      %1737 = vmatpush1.msra.mxu0 0.0
      %1738 = vmatprep.subr.mxu0 0.0
      %1739 = vmatpush1.msra.mxu0 0.0
      %1740 = vmatprep.subr.mxu0 0.0
      %1741 = vmatpush1.msra.mxu0 0.0
      %1742 = vmatprep.subr.mxu0 0.0
      %1743 = vmatpush1.msra.mxu0 0.0
      %1744 = vmatprep.subr.mxu0 0.0
      %1745 = vmatpush1.msra.mxu0 0.0
      %1746 = vmatprep.subr.mxu0 0.0
      %1747 = vmatpush1.msra.mxu0 0.0
      %1748 = vmatprep.mubr.f32.mxu0 0.0
      %1749 = vmatmul.mubr.f32.gmra.mrb[0].mxu0 %v601
      %v1750 = vpop.f32.mrb[0].mxu0
      %v1751 = vadd.f32 %v1526, %v1750
      %v1752 = vpop.f32.mrb[0].mxu0
      %1753 = vmatprep.mubr.f32.mxu0 0.0
      %1754 = vmatmul.mubr.f32.gmra.mrb[0].mxu0 %v602
      %v1755 = vpop.f32.mrb[0].mxu0
      %v1756 = vadd.f32 %v1531, %v1755
      %v1757 = vpop.f32.mrb[0].mxu0
      %1758 = vmatprep.mubr.f32.mxu0 0.0
      %1759 = vmatmul.mubr.f32.gmra.mrb[0].mxu0 %v603
      %v1760 = vpop.f32.mrb[0].mxu0
      %v1761 = vadd.f32 %v1536, %v1760
      %v1762 = vpop.f32.mrb[0].mxu0
      %1763 = vmatprep.mubr.f32.mxu0 0.0
      %1764 = vmatmul.mubr.f32.gmra.mrb[0].mxu0 %v604
      %v1765 = vpop.f32.mrb[0].mxu0
      %v1766 = vadd.f32 %v1541, %v1765
      %v1767 = vpop.f32.mrb[0].mxu0
      %1768 = vmatprep.mubr.f32.mxu0 0.0
      %1769 = vmatmul.mubr.f32.gmra.mrb[0].mxu0 %v605
      %v1770 = vpop.f32.mrb[0].mxu0
      %v1771 = vadd.f32 %v1546, %v1770
      %v1772 = vpop.f32.mrb[0].mxu0
      %1773 = vmatprep.mubr.f32.mxu0 0.0
      %1774 = vmatmul.mubr.f32.gmra.mrb[0].mxu0 %v606
      %v1775 = vpop.f32.mrb[0].mxu0
      %v1776 = vadd.f32 %v1551, %v1775
      %v1777 = vpop.f32.mrb[0].mxu0
      %1778 = vmatprep.mubr.f32.mxu0 0.0
      %1779 = vmatmul.mubr.f32.gmra.mrb[0].mxu0 %v607
      %v1780 = vpop.f32.mrb[0].mxu0
      %v1781 = vadd.f32 %v1556, %v1780
      %v1782 = vpop.f32.mrb[0].mxu0
      %1783 = vmatprep.mubr.f32.mxu0 0.0
      %1784 = vmatmul.mubr.f32.gmra.mrb[0].mxu0 %v608
      %v1785 = vpop.f32.mrb[0].mxu0
      %v1786 = vadd.f32 %v1561, %v1785
      %v1787 = vpop.f32.mrb[0].mxu0
      %1788 = vmatprep.mubr.f32.mxu0 0.0
      %1789 = vmatmul.mubr.f32.gmra.mrb[0].mxu0 %v609
      %v1790 = vpop.f32.mrb[0].mxu0
      %v1791 = vadd.f32 %v1566, %v1790
      %v1792 = vpop.f32.mrb[0].mxu0
      %1793 = vmatprep.mubr.f32.mxu0 0.0
      %1794 = vmatmul.mubr.f32.gmra.mrb[0].mxu0 %v610
      %v1795 = vpop.f32.mrb[0].mxu0
      %v1796 = vadd.f32 %v1571, %v1795
      %v1797 = vpop.f32.mrb[0].mxu0
      %1798 = vmatprep.mubr.f32.mxu0 0.0
      %1799 = vmatmul.mubr.f32.gmra.mrb[0].mxu0 %v611
      %v1800 = vpop.f32.mrb[0].mxu0
      %v1801 = vadd.f32 %v1576, %v1800
      %v1802 = vpop.f32.mrb[0].mxu0
      %1803 = vmatprep.mubr.f32.mxu0 0.0
      %1804 = vmatmul.mubr.f32.gmra.mrb[0].mxu0 %v612
      %v1805 = vpop.f32.mrb[0].mxu0
      %v1806 = vadd.f32 %v1581, %v1805
      %v1807 = vpop.f32.mrb[0].mxu0
      %1808 = vmatprep.mubr.f32.mxu0 0.0
      %1809 = vmatmul.mubr.f32.gmra.mrb[0].mxu0 %v613
      %v1810 = vpop.f32.mrb[0].mxu0
      %v1811 = vadd.f32 %v1586, %v1810
      %v1812 = vpop.f32.mrb[0].mxu0
      %1813 = vmatprep.mubr.f32.mxu0 0.0
      %1814 = vmatmul.mubr.f32.gmra.mrb[0].mxu0 %v614
      %v1815 = vpop.f32.mrb[0].mxu0
      %v1816 = vadd.f32 %v1591, %v1815
      %v1817 = vpop.f32.mrb[0].mxu0
      %1818 = vmatprep.mubr.f32.mxu0 0.0
      %1819 = vmatmul.mubr.f32.gmra.mrb[0].mxu0 %v615
      %v1820 = vpop.f32.mrb[0].mxu0
      %v1821 = vadd.f32 %v1596, %v1820
      %v1822 = vpop.f32.mrb[0].mxu0
      %1823 = vmatprep.mubr.f32.mxu0 0.0
      %1824 = vmatmul.mubr.f32.gmra.mrb[0].mxu0 %v616
      %v1825 = vpop.f32.mrb[0].mxu0
      %v1826 = vadd.f32 %v1601, %v1825
      %v1827 = vpop.f32.mrb[0].mxu0
      %1828 = vmatprep.mubr.f32.mxu0 0.0
      %1829 = vmatmul.mubr.f32.gmra.mrb[0].mxu0 %v617
      %v1830 = vpop.f32.mrb[0].mxu0
      %v1831 = vadd.f32 %v1606, %v1830
      %v1832 = vpop.f32.mrb[0].mxu0
      %1833 = vmatprep.mubr.f32.mxu0 0.0
      %1834 = vmatmul.mubr.f32.gmra.mrb[0].mxu0 %v618
      %v1835 = vpop.f32.mrb[0].mxu0
      %v1836 = vadd.f32 %v1611, %v1835
      %v1837 = vpop.f32.mrb[0].mxu0
      %1838 = vmatprep.mubr.f32.mxu0 0.0
      %1839 = vmatmul.mubr.f32.gmra.mrb[0].mxu0 %v619
      %v1840 = vpop.f32.mrb[0].mxu0
      %v1841 = vadd.f32 %v1616, %v1840
      %v1842 = vpop.f32.mrb[0].mxu0
      %1843 = vmatprep.mubr.f32.mxu0 0.0
      %1844 = vmatmul.mubr.f32.gmra.mrb[0].mxu0 %v620
      %v1845 = vpop.f32.mrb[0].mxu0
      %v1846 = vadd.f32 %v1621, %v1845
      %v1847 = vpop.f32.mrb[0].mxu0
      %1848 = vmatprep.mubr.f32.mxu0 0.0
      %1849 = vmatmul.mubr.f32.gmra.mrb[0].mxu0 %v621
      %v1850 = vpop.f32.mrb[0].mxu0
      %v1851 = vadd.f32 %v1626, %v1850
      %v1852 = vpop.f32.mrb[0].mxu0
      %1853 = vmatprep.mubr.f32.mxu0 0.0
      %1854 = vmatmul.mubr.f32.gmra.mrb[0].mxu0 %v622
      %v1855 = vpop.f32.mrb[0].mxu0
      %v1856 = vadd.f32 %v1631, %v1855
      %v1857 = vpop.f32.mrb[0].mxu0
      %1858 = vmatprep.mubr.f32.mxu0 0.0
      %1859 = vmatmul.mubr.f32.gmra.mrb[0].mxu0 %v623
      %v1860 = vpop.f32.mrb[0].mxu0
      %v1861 = vadd.f32 %v1636, %v1860
      %v1862 = vpop.f32.mrb[0].mxu0
      %1863 = vmatprep.mubr.f32.mxu0 0.0
      %1864 = vmatmul.mubr.f32.gmra.mrb[0].mxu0 %v624
      %v1865 = vpop.f32.mrb[0].mxu0
      %v1866 = vadd.f32 %v1641, %v1865
      %v1867 = vpop.f32.mrb[0].mxu0
      %1868 = vmatprep.mubr.f32.mxu0 0.0
      %1869 = vmatmul.mubr.f32.gmra.mrb[0].mxu0 %v625
      %v1870 = vpop.f32.mrb[0].mxu0
      %v1871 = vadd.f32 %v1646, %v1870
      %v1872 = vpop.f32.mrb[0].mxu0
      %1873 = vmatprep.mubr.f32.mxu0 0.0
      %1874 = vmatmul.mubr.f32.gmra.mrb[0].mxu0 %v626
      %v1875 = vpop.f32.mrb[0].mxu0
      %v1876 = vadd.f32 %v1651, %v1875
      %v1877 = vpop.f32.mrb[0].mxu0
      %1878 = vmatprep.mubr.f32.mxu0 0.0
      %1879 = vmatmul.mubr.f32.gmra.mrb[0].mxu0 %v627
      %v1880 = vpop.f32.mrb[0].mxu0
      %v1881 = vadd.f32 %v1656, %v1880
      %v1882 = vpop.f32.mrb[0].mxu0
      %1883 = vmatprep.mubr.f32.mxu0 0.0
      %1884 = vmatmul.mubr.f32.gmra.mrb[0].mxu0 %v628
      %v1885 = vpop.f32.mrb[0].mxu0
      %v1886 = vadd.f32 %v1661, %v1885
      %v1887 = vpop.f32.mrb[0].mxu0
      %1888 = vmatprep.mubr.f32.mxu0 0.0
      %1889 = vmatmul.mubr.f32.gmra.mrb[0].mxu0 %v629
      %v1890 = vpop.f32.mrb[0].mxu0
      %v1891 = vadd.f32 %v1666, %v1890
      %v1892 = vpop.f32.mrb[0].mxu0
      %1893 = vmatprep.mubr.f32.mxu0 0.0
      %1894 = vmatmul.mubr.f32.gmra.mrb[0].mxu0 %v630
      %v1895 = vpop.f32.mrb[0].mxu0
      %v1896 = vadd.f32 %v1671, %v1895
      %v1897 = vpop.f32.mrb[0].mxu0
      %1898 = vmatprep.mubr.f32.mxu0 0.0
      %1899 = vmatmul.mubr.f32.gmra.mrb[0].mxu0 %v631
      %v1900 = vpop.f32.mrb[0].mxu0
      %v1901 = vadd.f32 %v1676, %v1900
      %v1902 = vpop.f32.mrb[0].mxu0
      %1903 = vmatprep.mubr.f32.mxu0 0.0
      %1904 = vmatmul.mubr.f32.gmra.mrb[0].mxu0 %v632
      %v1905 = vpop.f32.mrb[0].mxu0
      %v1906 = vadd.f32 %v1681, %v1905
      %v1907 = vpop.f32.mrb[0].mxu0
      %1908 = vdwg.mxu0
      %v1909 = vmax.f32 %v1751, 0.0
      %v1910 = vmax.f32 %v1756, 0.0
      %v1911 = vmax.f32 %v1761, 0.0
      %v1912 = vmax.f32 %v1766, 0.0
      %v1913 = vmax.f32 %v1771, 0.0
      %v1914 = vmax.f32 %v1776, 0.0
      %v1915 = vmax.f32 %v1781, 0.0
      %v1916 = vmax.f32 %v1786, 0.0
      %v1917 = vmax.f32 %v1791, 0.0
      %v1918 = vmax.f32 %v1796, 0.0
      %v1919 = vmax.f32 %v1801, 0.0
      %v1920 = vmax.f32 %v1806, 0.0
      %v1921 = vmax.f32 %v1811, 0.0
      %v1922 = vmax.f32 %v1816, 0.0
      %v1923 = vmax.f32 %v1821, 0.0
      %v1924 = vmax.f32 %v1826, 0.0
      %v1925 = vmax.f32 %v1831, 0.0
      %v1926 = vmax.f32 %v1836, 0.0
      %v1927 = vmax.f32 %v1841, 0.0
      %v1928 = vmax.f32 %v1846, 0.0
      %v1929 = vmax.f32 %v1851, 0.0
      %v1930 = vmax.f32 %v1856, 0.0
      %v1931 = vmax.f32 %v1861, 0.0
      %v1932 = vmax.f32 %v1866, 0.0
      %v1933 = vmax.f32 %v1871, 0.0
      %v1934 = vmax.f32 %v1876, 0.0
      %v1935 = vmax.f32 %v1881, 0.0
      %v1936 = vmax.f32 %v1886, 0.0
      %v1937 = vmax.f32 %v1891, 0.0
      %v1938 = vmax.f32 %v1896, 0.0
      %v1939 = vmax.f32 %v1901, 0.0
      %v1940 = vmax.f32 %v1906, 0.0
      %1941 = vst [vmem:[%s311 + $0x1] sm:$0xff] %v1909
      %1942 = vst [vmem:[%s311 + $0x9] sm:$0xff] %v1910
      %1943 = vst [vmem:[%s311 + $0x19] sm:$0xff] %v1911
      %1944 = vst [vmem:[%s311 + $0x21] sm:$0xff] %v1912
      %1945 = vst [vmem:[%s311 + $0x31] sm:$0xff] %v1913
      %1946 = vst [vmem:[%s311 + $0x39] sm:$0xff] %v1914
      %1947 = vst [vmem:[%s311 + $0x49] sm:$0xff] %v1915
      %1948 = vst [vmem:[%s311 + $0x51] sm:$0xff] %v1916
      %1949 = vst [vmem:[%s311 + $0x61] sm:$0xff] %v1917
      %1950 = vst [vmem:[%s311 + $0x69] sm:$0xff] %v1918
      %1951 = vst [vmem:[%s311 + $0x79] sm:$0xff] %v1919
      %1952 = vst [vmem:[%s311 + $0x81] sm:$0xff] %v1920
      %1953 = vst [vmem:[%s311 + $0x91] sm:$0xff] %v1921
      %1954 = vst [vmem:[%s311 + $0x99] sm:$0xff] %v1922
      %1955 = vst [vmem:[%s311 + $0xa9] sm:$0xff] %v1923
      %1956 = vst [vmem:[%s311 + $0xb1] sm:$0xff] %v1924
      %1957 = vst [vmem:[%s311 + $0xc1] sm:$0xff] %v1925
      %1958 = vst [vmem:[%s311 + $0xc9] sm:$0xff] %v1926
      %1959 = vst [vmem:[%s311 + $0xd9] sm:$0xff] %v1927
      %1960 = vst [vmem:[%s311 + $0xe1] sm:$0xff] %v1928
      %1961 = vst [vmem:[%s311 + $0xf1] sm:$0xff] %v1929
      %1962 = vst [vmem:[%s311 + $0xf9] sm:$0xff] %v1930
      %1963 = vst [vmem:[%s311 + $0x109] sm:$0xff] %v1931
      %1964 = vst [vmem:[%s311 + $0x111] sm:$0xff] %v1932
      %1965 = vst [vmem:[%s311 + $0x121] sm:$0xff] %v1933
      %1966 = vst [vmem:[%s311 + $0x129] sm:$0xff] %v1934
      %1967 = vst [vmem:[%s311 + $0x139] sm:$0xff] %v1935
      %1968 = vst [vmem:[%s311 + $0x141] sm:$0xff] %v1936
      %1969 = vst [vmem:[%s311 + $0x151] sm:$0xff] %v1937
      %1970 = vst [vmem:[%s311 + $0x159] sm:$0xff] %v1938
      %1971 = vst [vmem:[%s311 + $0x169] sm:$0xff] %v1939
      %1972 = vst [vmem:[%s311 + $0x171] sm:$0xff] %v1940
      %v1973 = vld [vmem:[#allocation2] sm:$0xff]
      %v1974 = vld [vmem:[#allocation2 + $0x8] sm:$0xff]
      %v1975 = vld [vmem:[#allocation2 + $0x18] sm:$0xff]
      %v1976 = vld [vmem:[#allocation2 + $0x20] sm:$0xff]
      %v1977 = vld [vmem:[#allocation2 + $0x30] sm:$0xff]
      %v1978 = vld [vmem:[#allocation2 + $0x38] sm:$0xff]
      %v1979 = vld [vmem:[#allocation2 + $0x48] sm:$0xff]
      %v1980 = vld [vmem:[#allocation2 + $0x50] sm:$0xff]
      %v1981 = vld [vmem:[#allocation2 + $0x60] sm:$0xff]
      %v1982 = vld [vmem:[#allocation2 + $0x68] sm:$0xff]
      %v1983 = vld [vmem:[#allocation2 + $0x78] sm:$0xff]
      %v1984 = vld [vmem:[#allocation2 + $0x80] sm:$0xff]
      %v1985 = vld [vmem:[#allocation2 + $0x90] sm:$0xff]
      %v1986 = vld [vmem:[#allocation2 + $0x98] sm:$0xff]
      %v1987 = vld [vmem:[#allocation2 + $0xa8] sm:$0xff]
      %v1988 = vld [vmem:[#allocation2 + $0xb0] sm:$0xff]
      %v1989 = vld [vmem:[#allocation2 + $0xc0] sm:$0xff]
      %v1990 = vld [vmem:[#allocation2 + $0xc8] sm:$0xff]
      %v1991 = vld [vmem:[#allocation2 + $0xd8] sm:$0xff]
      %v1992 = vld [vmem:[#allocation2 + $0xe0] sm:$0xff]
      %v1993 = vld [vmem:[#allocation2 + $0xf0] sm:$0xff]
      %v1994 = vld [vmem:[#allocation2 + $0xf8] sm:$0xff]
      %v1995 = vld [vmem:[#allocation2 + $0x108] sm:$0xff]
      %v1996 = vld [vmem:[#allocation2 + $0x110] sm:$0xff]
      %v1997 = vld [vmem:[#allocation2 + $0x120] sm:$0xff]
      %v1998 = vld [vmem:[#allocation2 + $0x128] sm:$0xff]
      %v1999 = vld [vmem:[#allocation2 + $0x138] sm:$0xff]
      %v2000 = vld [vmem:[#allocation2 + $0x140] sm:$0xff]
      %v2001 = vld [vmem:[#allocation2 + $0x150] sm:$0xff]
      %v2002 = vld [vmem:[#allocation2 + $0x158] sm:$0xff]
      %v2003 = vld [vmem:[#allocation2 + $0x168] sm:$0xff]
      %v2004 = vld [vmem:[#allocation2 + $0x170] sm:$0xff]
      %v2005 = vld [vmem:[#allocation2 + $0x1] sm:$0xff]
      %v2006 = vld [vmem:[#allocation2 + $0x9] sm:$0xff]
      %v2007 = vld [vmem:[#allocation2 + $0x19] sm:$0xff]
      %v2008 = vld [vmem:[#allocation2 + $0x21] sm:$0xff]
      %v2009 = vld [vmem:[#allocation2 + $0x31] sm:$0xff]
      %v2010 = vld [vmem:[#allocation2 + $0x39] sm:$0xff]
      %v2011 = vld [vmem:[#allocation2 + $0x49] sm:$0xff]
      %v2012 = vld [vmem:[#allocation2 + $0x51] sm:$0xff]
      %v2013 = vld [vmem:[#allocation2 + $0x61] sm:$0xff]
      %v2014 = vld [vmem:[#allocation2 + $0x69] sm:$0xff]
      %v2015 = vld [vmem:[#allocation2 + $0x79] sm:$0xff]
      %v2016 = vld [vmem:[#allocation2 + $0x81] sm:$0xff]
      %v2017 = vld [vmem:[#allocation2 + $0x91] sm:$0xff]
      %v2018 = vld [vmem:[#allocation2 + $0x99] sm:$0xff]
      %v2019 = vld [vmem:[#allocation2 + $0xa9] sm:$0xff]
      %v2020 = vld [vmem:[#allocation2 + $0xb1] sm:$0xff]
      %v2021 = vld [vmem:[#allocation2 + $0xc1] sm:$0xff]
      %v2022 = vld [vmem:[#allocation2 + $0xc9] sm:$0xff]
      %v2023 = vld [vmem:[#allocation2 + $0xd9] sm:$0xff]
      %v2024 = vld [vmem:[#allocation2 + $0xe1] sm:$0xff]
      %v2025 = vld [vmem:[#allocation2 + $0xf1] sm:$0xff]
      %v2026 = vld [vmem:[#allocation2 + $0xf9] sm:$0xff]
      %v2027 = vld [vmem:[#allocation2 + $0x109] sm:$0xff]
      %v2028 = vld [vmem:[#allocation2 + $0x111] sm:$0xff]
      %v2029 = vld [vmem:[#allocation2 + $0x121] sm:$0xff]
      %v2030 = vld [vmem:[#allocation2 + $0x129] sm:$0xff]
      %v2031 = vld [vmem:[#allocation2 + $0x139] sm:$0xff]
      %v2032 = vld [vmem:[#allocation2 + $0x141] sm:$0xff]
      %v2033 = vld [vmem:[#allocation2 + $0x151] sm:$0xff]
      %v2034 = vld [vmem:[#allocation2 + $0x159] sm:$0xff]
      %v2035 = vld [vmem:[#allocation2 + $0x169] sm:$0xff]
      %v2036 = vld [vmem:[#allocation2 + $0x171] sm:$0xff]
      %v2037 = vld [vmem:[#allocation2 + $0x2] sm:$0xff]
      %v2038 = vld [vmem:[#allocation2 + $0xa] sm:$0xff]
      %v2039 = vld [vmem:[#allocation2 + $0x1a] sm:$0xff]
      %v2040 = vld [vmem:[#allocation2 + $0x22] sm:$0xff]
      %v2041 = vld [vmem:[#allocation2 + $0x32] sm:$0xff]
      %v2042 = vld [vmem:[#allocation2 + $0x3a] sm:$0xff]
      %v2043 = vld [vmem:[#allocation2 + $0x4a] sm:$0xff]
      %v2044 = vld [vmem:[#allocation2 + $0x52] sm:$0xff]
      %v2045 = vld [vmem:[#allocation2 + $0x62] sm:$0xff]
      %v2046 = vld [vmem:[#allocation2 + $0x6a] sm:$0xff]
      %v2047 = vld [vmem:[#allocation2 + $0x7a] sm:$0xff]
      %v2048 = vld [vmem:[#allocation2 + $0x82] sm:$0xff]
      %v2049 = vld [vmem:[#allocation2 + $0x92] sm:$0xff]
      %v2050 = vld [vmem:[#allocation2 + $0x9a] sm:$0xff]
      %v2051 = vld [vmem:[#allocation2 + $0xaa] sm:$0xff]
      %v2052 = vld [vmem:[#allocation2 + $0xb2] sm:$0xff]
      %v2053 = vld [vmem:[#allocation2 + $0xc2] sm:$0xff]
      %v2054 = vld [vmem:[#allocation2 + $0xca] sm:$0xff]
      %v2055 = vld [vmem:[#allocation2 + $0xda] sm:$0xff]
      %v2056 = vld [vmem:[#allocation2 + $0xe2] sm:$0xff]
      %v2057 = vld [vmem:[#allocation2 + $0xf2] sm:$0xff]
      %v2058 = vld [vmem:[#allocation2 + $0xfa] sm:$0xff]
      %v2059 = vld [vmem:[#allocation2 + $0x10a] sm:$0xff]
      %v2060 = vld [vmem:[#allocation2 + $0x112] sm:$0xff]
      %v2061 = vld [vmem:[#allocation2 + $0x122] sm:$0xff]
      %v2062 = vld [vmem:[#allocation2 + $0x12a] sm:$0xff]
      %v2063 = vld [vmem:[#allocation2 + $0x13a] sm:$0xff]
      %v2064 = vld [vmem:[#allocation2 + $0x142] sm:$0xff]
      %v2065 = vld [vmem:[#allocation2 + $0x152] sm:$0xff]
      %v2066 = vld [vmem:[#allocation2 + $0x15a] sm:$0xff]
      %v2067 = vld [vmem:[#allocation2 + $0x16a] sm:$0xff]
      %v2068 = vld [vmem:[#allocation2 + $0x172] sm:$0xff]
      %v2069 = vld [vmem:[%s311] sm:$0xff]
      %v2070 = vld [vmem:[%s311 + $0x8] sm:$0xff]
      %v2071 = vld [vmem:[%s311 + $0x18] sm:$0xff]
      %v2072 = vld [vmem:[%s311 + $0x20] sm:$0xff]
      %v2073 = vld [vmem:[%s311 + $0x30] sm:$0xff]
      %v2074 = vld [vmem:[%s311 + $0x38] sm:$0xff]
      %v2075 = vld [vmem:[%s311 + $0x48] sm:$0xff]
      %v2076 = vld [vmem:[%s311 + $0x50] sm:$0xff]
      %v2077 = vld [vmem:[%s311 + $0x60] sm:$0xff]
      %v2078 = vld [vmem:[%s311 + $0x68] sm:$0xff]
      %v2079 = vld [vmem:[%s311 + $0x78] sm:$0xff]
      %v2080 = vld [vmem:[%s311 + $0x80] sm:$0xff]
      %v2081 = vld [vmem:[%s311 + $0x90] sm:$0xff]
      %v2082 = vld [vmem:[%s311 + $0x98] sm:$0xff]
      %v2083 = vld [vmem:[%s311 + $0xa8] sm:$0xff]
      %v2084 = vld [vmem:[%s311 + $0xb0] sm:$0xff]
      %v2085 = vld [vmem:[%s311 + $0xc0] sm:$0xff]
      %v2086 = vld [vmem:[%s311 + $0xc8] sm:$0xff]
      %v2087 = vld [vmem:[%s311 + $0xd8] sm:$0xff]
      %v2088 = vld [vmem:[%s311 + $0xe0] sm:$0xff]
      %v2089 = vld [vmem:[%s311 + $0xf0] sm:$0xff]
      %v2090 = vld [vmem:[%s311 + $0xf8] sm:$0xff]
      %v2091 = vld [vmem:[%s311 + $0x108] sm:$0xff]
      %v2092 = vld [vmem:[%s311 + $0x110] sm:$0xff]
      %v2093 = vld [vmem:[%s311 + $0x120] sm:$0xff]
      %v2094 = vld [vmem:[%s311 + $0x128] sm:$0xff]
      %v2095 = vld [vmem:[%s311 + $0x138] sm:$0xff]
      %v2096 = vld [vmem:[%s311 + $0x140] sm:$0xff]
      %v2097 = vld [vmem:[%s311 + $0x150] sm:$0xff]
      %v2098 = vld [vmem:[%s311 + $0x158] sm:$0xff]
      %v2099 = vld [vmem:[%s311 + $0x168] sm:$0xff]
      %v2100 = vld [vmem:[%s311 + $0x170] sm:$0xff]
      %v2101 = vld [vmem:[%s311 + $0x1] sm:$0xff]
      %v2102 = vld [vmem:[%s311 + $0x9] sm:$0xff]
      %v2103 = vld [vmem:[%s311 + $0x19] sm:$0xff]
      %v2104 = vld [vmem:[%s311 + $0x21] sm:$0xff]
      %v2105 = vld [vmem:[%s311 + $0x31] sm:$0xff]
      %v2106 = vld [vmem:[%s311 + $0x39] sm:$0xff]
      %v2107 = vld [vmem:[%s311 + $0x49] sm:$0xff]
      %v2108 = vld [vmem:[%s311 + $0x51] sm:$0xff]
      %v2109 = vld [vmem:[%s311 + $0x61] sm:$0xff]
      %v2110 = vld [vmem:[%s311 + $0x69] sm:$0xff]
      %v2111 = vld [vmem:[%s311 + $0x79] sm:$0xff]
      %v2112 = vld [vmem:[%s311 + $0x81] sm:$0xff]
      %v2113 = vld [vmem:[%s311 + $0x91] sm:$0xff]
      %v2114 = vld [vmem:[%s311 + $0x99] sm:$0xff]
      %v2115 = vld [vmem:[%s311 + $0xa9] sm:$0xff]
      %v2116 = vld [vmem:[%s311 + $0xb1] sm:$0xff]
      %v2117 = vld [vmem:[%s311 + $0xc1] sm:$0xff]
      %v2118 = vld [vmem:[%s311 + $0xc9] sm:$0xff]
      %v2119 = vld [vmem:[%s311 + $0xd9] sm:$0xff]
      %v2120 = vld [vmem:[%s311 + $0xe1] sm:$0xff]
      %v2121 = vld [vmem:[%s311 + $0xf1] sm:$0xff]
      %v2122 = vld [vmem:[%s311 + $0xf9] sm:$0xff]
      %v2123 = vld [vmem:[%s311 + $0x109] sm:$0xff]
      %v2124 = vld [vmem:[%s311 + $0x111] sm:$0xff]
      %v2125 = vld [vmem:[%s311 + $0x121] sm:$0xff]
      %v2126 = vld [vmem:[%s311 + $0x129] sm:$0xff]
      %v2127 = vld [vmem:[%s311 + $0x139] sm:$0xff]
      %v2128 = vld [vmem:[%s311 + $0x141] sm:$0xff]
      %v2129 = vld [vmem:[%s311 + $0x151] sm:$0xff]
      %v2130 = vld [vmem:[%s311 + $0x159] sm:$0xff]
      %v2131 = vld [vmem:[%s311 + $0x169] sm:$0xff]
      %v2132 = vld [vmem:[%s311 + $0x171] sm:$0xff]
      %v2133 = vld [vmem:[%s311 + $0x2] sm:$0xff]
      %v2134 = vld [vmem:[%s311 + $0xa] sm:$0xff]
      %v2135 = vld [vmem:[%s311 + $0x1a] sm:$0xff]
      %v2136 = vld [vmem:[%s311 + $0x22] sm:$0xff]
      %v2137 = vld [vmem:[%s311 + $0x32] sm:$0xff]
      %v2138 = vld [vmem:[%s311 + $0x3a] sm:$0xff]
      %v2139 = vld [vmem:[%s311 + $0x4a] sm:$0xff]
      %v2140 = vld [vmem:[%s311 + $0x52] sm:$0xff]
      %v2141 = vld [vmem:[%s311 + $0x62] sm:$0xff]
      %v2142 = vld [vmem:[%s311 + $0x6a] sm:$0xff]
      %v2143 = vld [vmem:[%s311 + $0x7a] sm:$0xff]
      %v2144 = vld [vmem:[%s311 + $0x82] sm:$0xff]
      %v2145 = vld [vmem:[%s311 + $0x92] sm:$0xff]
      %v2146 = vld [vmem:[%s311 + $0x9a] sm:$0xff]
      %v2147 = vld [vmem:[%s311 + $0xaa] sm:$0xff]
      %v2148 = vld [vmem:[%s311 + $0xb2] sm:$0xff]
      %v2149 = vld [vmem:[%s311 + $0xc2] sm:$0xff]
      %v2150 = vld [vmem:[%s311 + $0xca] sm:$0xff]
      %v2151 = vld [vmem:[%s311 + $0xda] sm:$0xff]
      %v2152 = vld [vmem:[%s311 + $0xe2] sm:$0xff]
      %v2153 = vld [vmem:[%s311 + $0xf2] sm:$0xff]
      %v2154 = vld [vmem:[%s311 + $0xfa] sm:$0xff]
      %v2155 = vld [vmem:[%s311 + $0x10a] sm:$0xff]
      %v2156 = vld [vmem:[%s311 + $0x112] sm:$0xff]
      %v2157 = vld [vmem:[%s311 + $0x122] sm:$0xff]
      %v2158 = vld [vmem:[%s311 + $0x12a] sm:$0xff]
      %v2159 = vld [vmem:[%s311 + $0x13a] sm:$0xff]
      %v2160 = vld [vmem:[%s311 + $0x142] sm:$0xff]
      %v2161 = vld [vmem:[%s311 + $0x152] sm:$0xff]
      %v2162 = vld [vmem:[%s311 + $0x15a] sm:$0xff]
      %v2163 = vld [vmem:[%s311 + $0x16a] sm:$0xff]
      %v2164 = vld [vmem:[%s311 + $0x172] sm:$0xff]
      %v2165 = vld [vmem:[%s536] sm:$0xff]
      %v2166 = vld [vmem:[%s536 + $0x8] sm:$0xff]
      %v2167 = vld [vmem:[%s536 + $0x18] sm:$0xff]
      %v2168 = vld [vmem:[%s536 + $0x20] sm:$0xff]
      %v2169 = vld [vmem:[%s536 + $0x30] sm:$0xff]
      %v2170 = vld [vmem:[%s536 + $0x38] sm:$0xff]
      %v2171 = vld [vmem:[%s536 + $0x48] sm:$0xff]
      %v2172 = vld [vmem:[%s536 + $0x50] sm:$0xff]
      %v2173 = vld [vmem:[%s536 + $0x60] sm:$0xff]
      %v2174 = vld [vmem:[%s536 + $0x68] sm:$0xff]
      %v2175 = vld [vmem:[%s536 + $0x78] sm:$0xff]
      %v2176 = vld [vmem:[%s536 + $0x80] sm:$0xff]
      %v2177 = vld [vmem:[%s536 + $0x90] sm:$0xff]
      %v2178 = vld [vmem:[%s536 + $0x98] sm:$0xff]
      %v2179 = vld [vmem:[%s536 + $0xa8] sm:$0xff]
      %v2180 = vld [vmem:[%s536 + $0xb0] sm:$0xff]
      %v2181 = vld [vmem:[%s536 + $0xc0] sm:$0xff]
      %v2182 = vld [vmem:[%s536 + $0xc8] sm:$0xff]
      %v2183 = vld [vmem:[%s536 + $0xd8] sm:$0xff]
      %v2184 = vld [vmem:[%s536 + $0xe0] sm:$0xff]
      %v2185 = vld [vmem:[%s536 + $0xf0] sm:$0xff]
      %v2186 = vld [vmem:[%s536 + $0xf8] sm:$0xff]
      %v2187 = vld [vmem:[%s536 + $0x108] sm:$0xff]
      %v2188 = vld [vmem:[%s536 + $0x110] sm:$0xff]
      %v2189 = vld [vmem:[%s536 + $0x120] sm:$0xff]
      %v2190 = vld [vmem:[%s536 + $0x128] sm:$0xff]
      %v2191 = vld [vmem:[%s536 + $0x138] sm:$0xff]
      %v2192 = vld [vmem:[%s536 + $0x140] sm:$0xff]
      %v2193 = vld [vmem:[%s536 + $0x150] sm:$0xff]
      %v2194 = vld [vmem:[%s536 + $0x158] sm:$0xff]
      %v2195 = vld [vmem:[%s536 + $0x168] sm:$0xff]
      %v2196 = vld [vmem:[%s536 + $0x170] sm:$0xff]
      %v2197 = vld [vmem:[%s536 + $0x1] sm:$0xff]
      %v2198 = vld [vmem:[%s536 + $0x9] sm:$0xff]
      %v2199 = vld [vmem:[%s536 + $0x19] sm:$0xff]
      %v2200 = vld [vmem:[%s536 + $0x21] sm:$0xff]
      %v2201 = vld [vmem:[%s536 + $0x31] sm:$0xff]
      %v2202 = vld [vmem:[%s536 + $0x39] sm:$0xff]
      %v2203 = vld [vmem:[%s536 + $0x49] sm:$0xff]
      %v2204 = vld [vmem:[%s536 + $0x51] sm:$0xff]
      %v2205 = vld [vmem:[%s536 + $0x61] sm:$0xff]
      %v2206 = vld [vmem:[%s536 + $0x69] sm:$0xff]
      %v2207 = vld [vmem:[%s536 + $0x79] sm:$0xff]
      %v2208 = vld [vmem:[%s536 + $0x81] sm:$0xff]
      %v2209 = vld [vmem:[%s536 + $0x91] sm:$0xff]
      %v2210 = vld [vmem:[%s536 + $0x99] sm:$0xff]
      %v2211 = vld [vmem:[%s536 + $0xa9] sm:$0xff]
      %v2212 = vld [vmem:[%s536 + $0xb1] sm:$0xff]
      %v2213 = vld [vmem:[%s536 + $0xc1] sm:$0xff]
      %v2214 = vld [vmem:[%s536 + $0xc9] sm:$0xff]
      %v2215 = vld [vmem:[%s536 + $0xd9] sm:$0xff]
      %v2216 = vld [vmem:[%s536 + $0xe1] sm:$0xff]
      %v2217 = vld [vmem:[%s536 + $0xf1] sm:$0xff]
      %v2218 = vld [vmem:[%s536 + $0xf9] sm:$0xff]
      %v2219 = vld [vmem:[%s536 + $0x109] sm:$0xff]
      %v2220 = vld [vmem:[%s536 + $0x111] sm:$0xff]
      %v2221 = vld [vmem:[%s536 + $0x121] sm:$0xff]
      %v2222 = vld [vmem:[%s536 + $0x129] sm:$0xff]
      %v2223 = vld [vmem:[%s536 + $0x139] sm:$0xff]
      %v2224 = vld [vmem:[%s536 + $0x141] sm:$0xff]
      %v2225 = vld [vmem:[%s536 + $0x151] sm:$0xff]
      %v2226 = vld [vmem:[%s536 + $0x159] sm:$0xff]
      %v2227 = vld [vmem:[%s536 + $0x169] sm:$0xff]
      %v2228 = vld [vmem:[%s536 + $0x171] sm:$0xff]
      %v2229 = vld [vmem:[%s536 + $0x2] sm:$0xff]
      %v2230 = vld [vmem:[%s536 + $0xa] sm:$0xff]
      %v2231 = vld [vmem:[%s536 + $0x1a] sm:$0xff]
      %v2232 = vld [vmem:[%s536 + $0x22] sm:$0xff]
      %v2233 = vld [vmem:[%s536 + $0x32] sm:$0xff]
      %v2234 = vld [vmem:[%s536 + $0x3a] sm:$0xff]
      %v2235 = vld [vmem:[%s536 + $0x4a] sm:$0xff]
      %v2236 = vld [vmem:[%s536 + $0x52] sm:$0xff]
      %v2237 = vld [vmem:[%s536 + $0x62] sm:$0xff]
      %v2238 = vld [vmem:[%s536 + $0x6a] sm:$0xff]
      %v2239 = vld [vmem:[%s536 + $0x7a] sm:$0xff]
      %v2240 = vld [vmem:[%s536 + $0x82] sm:$0xff]
      %v2241 = vld [vmem:[%s536 + $0x92] sm:$0xff]
      %v2242 = vld [vmem:[%s536 + $0x9a] sm:$0xff]
      %v2243 = vld [vmem:[%s536 + $0xaa] sm:$0xff]
      %v2244 = vld [vmem:[%s536 + $0xb2] sm:$0xff]
      %v2245 = vld [vmem:[%s536 + $0xc2] sm:$0xff]
      %v2246 = vld [vmem:[%s536 + $0xca] sm:$0xff]
      %v2247 = vld [vmem:[%s536 + $0xda] sm:$0xff]
      %v2248 = vld [vmem:[%s536 + $0xe2] sm:$0xff]
      %v2249 = vld [vmem:[%s536 + $0xf2] sm:$0xff]
      %v2250 = vld [vmem:[%s536 + $0xfa] sm:$0xff]
      %v2251 = vld [vmem:[%s536 + $0x10a] sm:$0xff]
      %v2252 = vld [vmem:[%s536 + $0x112] sm:$0xff]
      %v2253 = vld [vmem:[%s536 + $0x122] sm:$0xff]
      %v2254 = vld [vmem:[%s536 + $0x12a] sm:$0xff]
      %v2255 = vld [vmem:[%s536 + $0x13a] sm:$0xff]
      %v2256 = vld [vmem:[%s536 + $0x142] sm:$0xff]
      %v2257 = vld [vmem:[%s536 + $0x152] sm:$0xff]
      %v2258 = vld [vmem:[%s536 + $0x15a] sm:$0xff]
      %v2259 = vld [vmem:[%s536 + $0x16a] sm:$0xff]
      %v2260 = vld [vmem:[%s536 + $0x172] sm:$0xff]
      %v2261 = vld [vmem:[%s3] sm:$0xff]
      %v2262 = vld [vmem:[%s3 + $0x8] sm:$0xff]
      %v2263 = vld [vmem:[%s3 + $0x10] sm:$0xff]
      %v2264 = vld [vmem:[%s3 + $0x18] sm:$0xff]
      %v2265 = vld [vmem:[%s3 + $0x20] sm:$0xff]
      %v2266 = vld [vmem:[%s3 + $0x28] sm:$0xff]
      %v2267 = vld [vmem:[%s3 + $0x30] sm:$0xff]
      %v2268 = vld [vmem:[%s3 + $0x38] sm:$0xff]
      %v2269 = vld [vmem:[%s3 + $0x40] sm:$0xff]
      %v2270 = vld [vmem:[%s3 + $0x48] sm:$0xff]
      %v2271 = vld [vmem:[%s3 + $0x50] sm:$0xff]
      %v2272 = vld [vmem:[%s3 + $0x58] sm:$0xff]
      %v2273 = vld [vmem:[%s3 + $0x60] sm:$0xff]
      %v2274 = vld [vmem:[%s3 + $0x68] sm:$0xff]
      %v2275 = vld [vmem:[%s3 + $0x70] sm:$0xff]
      %v2276 = vld [vmem:[%s3 + $0x78] sm:$0xff]
      %v2277 = vld [vmem:[%s3 + $0x80] sm:$0xff]
      %v2278 = vld [vmem:[%s3 + $0x88] sm:$0xff]
      %v2279 = vld [vmem:[%s3 + $0x90] sm:$0xff]
      %v2280 = vld [vmem:[%s3 + $0x98] sm:$0xff]
      %v2281 = vld [vmem:[%s3 + $0xa0] sm:$0xff]
      %v2282 = vld [vmem:[%s3 + $0xa8] sm:$0xff]
      %v2283 = vld [vmem:[%s3 + $0xb0] sm:$0xff]
      %v2284 = vld [vmem:[%s3 + $0xb8] sm:$0xff]
      %v2285 = vld [vmem:[%s3 + $0xc0] sm:$0xff]
      %v2286 = vld [vmem:[%s3 + $0xc8] sm:$0xff]
      %v2287 = vld [vmem:[%s3 + $0xd0] sm:$0xff]
      %v2288 = vld [vmem:[%s3 + $0xd8] sm:$0xff]
      %v2289 = vld [vmem:[%s3 + $0xe0] sm:$0xff]
      %v2290 = vld [vmem:[%s3 + $0xe8] sm:$0xff]
      %v2291 = vld [vmem:[%s3 + $0xf0] sm:$0xff]
      %v2292 = vld [vmem:[%s3 + $0xf8] sm:$0xff]
      %v2293 = vld [vmem:[%s3 + $0x100] sm:$0xff]
      %v2294 = vld [vmem:[%s3 + $0x108] sm:$0xff]
      %v2295 = vld [vmem:[%s3 + $0x110] sm:$0xff]
      %v2296 = vld [vmem:[%s3 + $0x118] sm:$0xff]
      %v2297 = vld [vmem:[%s3 + $0x120] sm:$0xff]
      %v2298 = vld [vmem:[%s3 + $0x128] sm:$0xff]
      %v2299 = vld [vmem:[%s3 + $0x130] sm:$0xff]
      %v2300 = vld [vmem:[%s3 + $0x138] sm:$0xff]
      %v2301 = vld [vmem:[%s3 + $0x140] sm:$0xff]
      %v2302 = vld [vmem:[%s3 + $0x148] sm:$0xff]
      %v2303 = vld [vmem:[%s3 + $0x150] sm:$0xff]
      %v2304 = vld [vmem:[%s3 + $0x158] sm:$0xff]
      %v2305 = vld [vmem:[%s3 + $0x160] sm:$0xff]
      %v2306 = vld [vmem:[%s3 + $0x168] sm:$0xff]
      %v2307 = vld [vmem:[%s3 + $0x170] sm:$0xff]
      %v2308 = vld [vmem:[%s3 + $0x178] sm:$0xff]
      %v2309 = vld [vmem:[%s3 + $0x180] sm:$0xff]
      %v2310 = vld [vmem:[%s3 + $0x188] sm:$0xff]
      %v2311 = vld [vmem:[%s3 + $0x190] sm:$0xff]
      %v2312 = vld [vmem:[%s3 + $0x198] sm:$0xff]
      %v2313 = vld [vmem:[%s3 + $0x1a0] sm:$0xff]
      %v2314 = vld [vmem:[%s3 + $0x1a8] sm:$0xff]
      %v2315 = vld [vmem:[%s3 + $0x1b0] sm:$0xff]
      %v2316 = vld [vmem:[%s3 + $0x1b8] sm:$0xff]
      %v2317 = vld [vmem:[%s3 + $0x1c0] sm:$0xff]
      %v2318 = vld [vmem:[%s3 + $0x1c8] sm:$0xff]
      %v2319 = vld [vmem:[%s3 + $0x1d0] sm:$0xff]
      %v2320 = vld [vmem:[%s3 + $0x1d8] sm:$0xff]
      %v2321 = vld [vmem:[%s3 + $0x1e0] sm:$0xff]
      %v2322 = vld [vmem:[%s3 + $0x1e8] sm:$0xff]
      %v2323 = vld [vmem:[%s3 + $0x1f0] sm:$0xff]
      %v2324 = vld [vmem:[%s3 + $0x1f8] sm:$0xff]
      %v2325 = vld [vmem:[%s3 + $0x200] sm:$0xff]
      %v2326 = vld [vmem:[%s3 + $0x208] sm:$0xff]
      %v2327 = vld [vmem:[%s3 + $0x210] sm:$0xff]
      %v2328 = vld [vmem:[%s3 + $0x218] sm:$0xff]
      %v2329 = vld [vmem:[%s3 + $0x220] sm:$0xff]
      %v2330 = vld [vmem:[%s3 + $0x228] sm:$0xff]
      %v2331 = vld [vmem:[%s3 + $0x230] sm:$0xff]
      %v2332 = vld [vmem:[%s3 + $0x238] sm:$0xff]
      %v2333 = vld [vmem:[%s3 + $0x240] sm:$0xff]
      %v2334 = vld [vmem:[%s3 + $0x248] sm:$0xff]
      %v2335 = vld [vmem:[%s3 + $0x250] sm:$0xff]
      %v2336 = vld [vmem:[%s3 + $0x258] sm:$0xff]
      %v2337 = vld [vmem:[%s3 + $0x260] sm:$0xff]
      %v2338 = vld [vmem:[%s3 + $0x268] sm:$0xff]
      %v2339 = vld [vmem:[%s3 + $0x270] sm:$0xff]
      %v2340 = vld [vmem:[%s3 + $0x278] sm:$0xff]
      %v2341 = vld [vmem:[%s3 + $0x280] sm:$0xff]
      %v2342 = vld [vmem:[%s3 + $0x288] sm:$0xff]
      %v2343 = vld [vmem:[%s3 + $0x290] sm:$0xff]
      %v2344 = vld [vmem:[%s3 + $0x298] sm:$0xff]
      %v2345 = vld [vmem:[%s3 + $0x2a0] sm:$0xff]
      %v2346 = vld [vmem:[%s3 + $0x2a8] sm:$0xff]
      %v2347 = vld [vmem:[%s3 + $0x2b0] sm:$0xff]
      %v2348 = vld [vmem:[%s3 + $0x2b8] sm:$0xff]
      %v2349 = vld [vmem:[%s3 + $0x2c0] sm:$0xff]
      %v2350 = vld [vmem:[%s3 + $0x2c8] sm:$0xff]
      %v2351 = vld [vmem:[%s3 + $0x2d0] sm:$0xff]
      %v2352 = vld [vmem:[%s3 + $0x2d8] sm:$0xff]
      %v2353 = vld [vmem:[%s3 + $0x2e0] sm:$0xff]
      %v2354 = vld [vmem:[%s3 + $0x2e8] sm:$0xff]
      %v2355 = vld [vmem:[%s3 + $0x2f0] sm:$0xff]
      %v2356 = vld [vmem:[%s3 + $0x2f8] sm:$0xff]
      %v2357 = vld [vmem:[%s3 + $0x300] sm:$0xff]
      %v2358 = vld [vmem:[%s3 + $0x308] sm:$0xff]
      %v2359 = vld [vmem:[%s3 + $0x310] sm:$0xff]
      %v2360 = vld [vmem:[%s3 + $0x318] sm:$0xff]
      %v2361 = vld [vmem:[%s3 + $0x320] sm:$0xff]
      %v2362 = vld [vmem:[%s3 + $0x328] sm:$0xff]
      %v2363 = vld [vmem:[%s3 + $0x330] sm:$0xff]
      %v2364 = vld [vmem:[%s3 + $0x338] sm:$0xff]
      %v2365 = vld [vmem:[%s3 + $0x340] sm:$0xff]
      %v2366 = vld [vmem:[%s3 + $0x348] sm:$0xff]
      %v2367 = vld [vmem:[%s3 + $0x350] sm:$0xff]
      %v2368 = vld [vmem:[%s3 + $0x358] sm:$0xff]
      %v2369 = vld [vmem:[%s3 + $0x360] sm:$0xff]
      %v2370 = vld [vmem:[%s3 + $0x368] sm:$0xff]
      %v2371 = vld [vmem:[%s3 + $0x370] sm:$0xff]
      %v2372 = vld [vmem:[%s3 + $0x378] sm:$0xff]
      %v2373 = vld [vmem:[%s3 + $0x380] sm:$0xff]
      %v2374 = vld [vmem:[%s3 + $0x388] sm:$0xff]
      %v2375 = vld [vmem:[%s3 + $0x390] sm:$0xff]
      %v2376 = vld [vmem:[%s3 + $0x398] sm:$0xff]
      %v2377 = vld [vmem:[%s3 + $0x3a0] sm:$0xff]
      %v2378 = vld [vmem:[%s3 + $0x3a8] sm:$0xff]
      %v2379 = vld [vmem:[%s3 + $0x3b0] sm:$0xff]
      %v2380 = vld [vmem:[%s3 + $0x3b8] sm:$0xff]
      %v2381 = vld [vmem:[%s3 + $0x3c0] sm:$0xff]
      %v2382 = vld [vmem:[%s3 + $0x3c8] sm:$0xff]
      %v2383 = vld [vmem:[%s3 + $0x3d0] sm:$0xff]
      %v2384 = vld [vmem:[%s3 + $0x3d8] sm:$0xff]
      %v2385 = vld [vmem:[%s3 + $0x3e0] sm:$0xff]
      %v2386 = vld [vmem:[%s3 + $0x3e8] sm:$0xff]
      %v2387 = vld [vmem:[%s3 + $0x3f0] sm:$0xff]
      %v2388 = vld [vmem:[%s3 + $0x3f8] sm:$0xff]
      %v2389 = vld [vmem:[%s3 + $0x400] sm:$0xff]
      %v2390 = vld [vmem:[%s3 + $0x408] sm:$0xff]
      %v2391 = vld [vmem:[%s3 + $0x410] sm:$0xff]
      %v2392 = vld [vmem:[%s3 + $0x418] sm:$0xff]
      %v2393 = vld [vmem:[%s3 + $0x420] sm:$0xff]
      %v2394 = vld [vmem:[%s3 + $0x428] sm:$0xff]
      %v2395 = vld [vmem:[%s3 + $0x430] sm:$0xff]
      %v2396 = vld [vmem:[%s3 + $0x438] sm:$0xff]
      %v2397 = vld [vmem:[%s3 + $0x440] sm:$0xff]
      %v2398 = vld [vmem:[%s3 + $0x448] sm:$0xff]
      %v2399 = vld [vmem:[%s3 + $0x450] sm:$0xff]
      %v2400 = vld [vmem:[%s3 + $0x458] sm:$0xff]
      %v2401 = vld [vmem:[%s3 + $0x460] sm:$0xff]
      %v2402 = vld [vmem:[%s3 + $0x468] sm:$0xff]
      %v2403 = vld [vmem:[%s3 + $0x470] sm:$0xff]
      %v2404 = vld [vmem:[%s3 + $0x478] sm:$0xff]
      %v2405 = vld [vmem:[%s4] sm:$0x1]
      %v2407 = vlaneseq
      %v2408 = vshrl.u32 %v2407, 7
      %v2409 = vsub.s32 0, %v2408
      %v2410 = vrot.slane %v2405, %v2409
      %2412 = vmatprep.subr.mxu0 0.0
      %2413 = vmatpush1.msra.mxu0 %v2261
      %2414 = vmatprep.subr.mxu0 0.0
      %2415 = vmatpush1.msra.mxu0 %v2262
      %2416 = vmatprep.subr.mxu0 0.0
      %2417 = vmatpush1.msra.mxu0 %v2263
      %2418 = vmatprep.subr.mxu0 0.0
      %2419 = vmatpush1.msra.mxu0 %v2264
      %2420 = vmatprep.subr.mxu0 0.0
      %2421 = vmatpush1.msra.mxu0 %v2265
      %2422 = vmatprep.subr.mxu0 0.0
      %2423 = vmatpush1.msra.mxu0 %v2266
      %2424 = vmatprep.subr.mxu0 0.0
      %2425 = vmatpush1.msra.mxu0 %v2267
      %2426 = vmatprep.subr.mxu0 0.0
      %2427 = vmatpush1.msra.mxu0 %v2268
      %2428 = vmatprep.subr.mxu0 0.0
      %2429 = vmatpush1.msra.mxu0 %v2269
      %2430 = vmatprep.subr.mxu0 0.0
      %2431 = vmatpush1.msra.mxu0 %v2270
      %2432 = vmatprep.subr.mxu0 0.0
      %2433 = vmatpush1.msra.mxu0 %v2271
      %2434 = vmatprep.subr.mxu0 0.0
      %2435 = vmatpush1.msra.mxu0 %v2272
      %2436 = vmatprep.subr.mxu0 0.0
      %2437 = vmatpush1.msra.mxu0 %v2273
      %2438 = vmatprep.subr.mxu0 0.0
      %2439 = vmatpush1.msra.mxu0 %v2274
      %2440 = vmatprep.subr.mxu0 0.0
      %2441 = vmatpush1.msra.mxu0 %v2275
      %2442 = vmatprep.subr.mxu0 0.0
      %2443 = vmatpush1.msra.mxu0 %v2276
      %2444 = vmatprep.subr.mxu0 0.0
      %2445 = vmatpush1.msra.mxu0 %v2277
      %2446 = vmatprep.subr.mxu0 0.0
      %2447 = vmatpush1.msra.mxu0 %v2278
      %2448 = vmatprep.subr.mxu0 0.0
      %2449 = vmatpush1.msra.mxu0 %v2279
      %2450 = vmatprep.subr.mxu0 0.0
      %2451 = vmatpush1.msra.mxu0 %v2280
      %2452 = vmatprep.subr.mxu0 0.0
      %2453 = vmatpush1.msra.mxu0 %v2281
      %2454 = vmatprep.subr.mxu0 0.0
      %2455 = vmatpush1.msra.mxu0 %v2282
      %2456 = vmatprep.subr.mxu0 0.0
      %2457 = vmatpush1.msra.mxu0 %v2283
      %2458 = vmatprep.subr.mxu0 0.0
      %2459 = vmatpush1.msra.mxu0 %v2284
      %2460 = vmatprep.subr.mxu0 0.0
      %2461 = vmatpush1.msra.mxu0 %v2285
      %2462 = vmatprep.subr.mxu0 0.0
      %2463 = vmatpush1.msra.mxu0 %v2286
      %2464 = vmatprep.subr.mxu0 0.0
      %2465 = vmatpush1.msra.mxu0 %v2287
      %2466 = vmatprep.subr.mxu0 0.0
      %2467 = vmatpush1.msra.mxu0 %v2288
      %2468 = vmatprep.subr.mxu0 0.0
      %2469 = vmatpush1.msra.mxu0 %v2289
      %2470 = vmatprep.subr.mxu0 0.0
      %2471 = vmatpush1.msra.mxu0 %v2290
      %2472 = vmatprep.subr.mxu0 0.0
      %2473 = vmatpush1.msra.mxu0 %v2291
      %2474 = vmatprep.subr.mxu0 0.0
      %2475 = vmatpush1.msra.mxu0 %v2292
      %2476 = vmatprep.mubr.f32.mxu0 %v2005
      %2477 = vmatmul.mubr.f32.gmra.mrb[0].mxu0 %v1973
      %v2478 = vpop.f32.mrb[0].mxu0
      %v2479 = vadd.f32 %v2410, %v2478
      %v2480 = vpop.f32.mrb[0].mxu0
      %2481 = vmatprep.mubr.f32.mxu0 %v2006
      %2482 = vmatmul.mubr.f32.gmra.mrb[0].mxu0 %v1974
      %v2483 = vpop.f32.mrb[0].mxu0
      %v2484 = vadd.f32 %v2410, %v2483
      %v2485 = vpop.f32.mrb[0].mxu0
      %2486 = vmatprep.mubr.f32.mxu0 %v2007
      %2487 = vmatmul.mubr.f32.gmra.mrb[0].mxu0 %v1975
      %v2488 = vpop.f32.mrb[0].mxu0
      %v2489 = vadd.f32 %v2410, %v2488
      %v2490 = vpop.f32.mrb[0].mxu0
      %2491 = vmatprep.mubr.f32.mxu0 %v2008
      %2492 = vmatmul.mubr.f32.gmra.mrb[0].mxu0 %v1976
      %v2493 = vpop.f32.mrb[0].mxu0
      %v2494 = vadd.f32 %v2410, %v2493
      %v2495 = vpop.f32.mrb[0].mxu0
      %2496 = vmatprep.mubr.f32.mxu0 %v2009
      %2497 = vmatmul.mubr.f32.gmra.mrb[0].mxu0 %v1977
      %v2498 = vpop.f32.mrb[0].mxu0
      %v2499 = vadd.f32 %v2410, %v2498
      %v2500 = vpop.f32.mrb[0].mxu0
      %2501 = vmatprep.mubr.f32.mxu0 %v2010
      %2502 = vmatmul.mubr.f32.gmra.mrb[0].mxu0 %v1978
      %v2503 = vpop.f32.mrb[0].mxu0
      %v2504 = vadd.f32 %v2410, %v2503
      %v2505 = vpop.f32.mrb[0].mxu0
      %2506 = vmatprep.mubr.f32.mxu0 %v2011
      %2507 = vmatmul.mubr.f32.gmra.mrb[0].mxu0 %v1979
      %v2508 = vpop.f32.mrb[0].mxu0
      %v2509 = vadd.f32 %v2410, %v2508
      %v2510 = vpop.f32.mrb[0].mxu0
      %2511 = vmatprep.mubr.f32.mxu0 %v2012
      %2512 = vmatmul.mubr.f32.gmra.mrb[0].mxu0 %v1980
      %v2513 = vpop.f32.mrb[0].mxu0
      %v2514 = vadd.f32 %v2410, %v2513
      %v2515 = vpop.f32.mrb[0].mxu0
      %2516 = vmatprep.mubr.f32.mxu0 %v2013
      %2517 = vmatmul.mubr.f32.gmra.mrb[0].mxu0 %v1981
      %v2518 = vpop.f32.mrb[0].mxu0
      %v2519 = vadd.f32 %v2410, %v2518
      %v2520 = vpop.f32.mrb[0].mxu0
      %2521 = vmatprep.mubr.f32.mxu0 %v2014
      %2522 = vmatmul.mubr.f32.gmra.mrb[0].mxu0 %v1982
      %v2523 = vpop.f32.mrb[0].mxu0
      %v2524 = vadd.f32 %v2410, %v2523
      %v2525 = vpop.f32.mrb[0].mxu0
      %2526 = vmatprep.mubr.f32.mxu0 %v2015
      %2527 = vmatmul.mubr.f32.gmra.mrb[0].mxu0 %v1983
      %v2528 = vpop.f32.mrb[0].mxu0
      %v2529 = vadd.f32 %v2410, %v2528
      %v2530 = vpop.f32.mrb[0].mxu0
      %2531 = vmatprep.mubr.f32.mxu0 %v2016
      %2532 = vmatmul.mubr.f32.gmra.mrb[0].mxu0 %v1984
      %v2533 = vpop.f32.mrb[0].mxu0
      %v2534 = vadd.f32 %v2410, %v2533
      %v2535 = vpop.f32.mrb[0].mxu0
      %2536 = vmatprep.mubr.f32.mxu0 %v2017
      %2537 = vmatmul.mubr.f32.gmra.mrb[0].mxu0 %v1985
      %v2538 = vpop.f32.mrb[0].mxu0
      %v2539 = vadd.f32 %v2410, %v2538
      %v2540 = vpop.f32.mrb[0].mxu0
      %2541 = vmatprep.mubr.f32.mxu0 %v2018
      %2542 = vmatmul.mubr.f32.gmra.mrb[0].mxu0 %v1986
      %v2543 = vpop.f32.mrb[0].mxu0
      %v2544 = vadd.f32 %v2410, %v2543
      %v2545 = vpop.f32.mrb[0].mxu0
      %2546 = vmatprep.mubr.f32.mxu0 %v2019
      %2547 = vmatmul.mubr.f32.gmra.mrb[0].mxu0 %v1987
      %v2548 = vpop.f32.mrb[0].mxu0
      %v2549 = vadd.f32 %v2410, %v2548
      %v2550 = vpop.f32.mrb[0].mxu0
      %2551 = vmatprep.mubr.f32.mxu0 %v2020
      %2552 = vmatmul.mubr.f32.gmra.mrb[0].mxu0 %v1988
      %v2553 = vpop.f32.mrb[0].mxu0
      %v2554 = vadd.f32 %v2410, %v2553
      %v2555 = vpop.f32.mrb[0].mxu0
      %2556 = vmatprep.mubr.f32.mxu0 %v2021
      %2557 = vmatmul.mubr.f32.gmra.mrb[0].mxu0 %v1989
      %v2558 = vpop.f32.mrb[0].mxu0
      %v2559 = vadd.f32 %v2410, %v2558
      %v2560 = vpop.f32.mrb[0].mxu0
      %2561 = vmatprep.mubr.f32.mxu0 %v2022
      %2562 = vmatmul.mubr.f32.gmra.mrb[0].mxu0 %v1990
      %v2563 = vpop.f32.mrb[0].mxu0
      %v2564 = vadd.f32 %v2410, %v2563
      %v2565 = vpop.f32.mrb[0].mxu0
      %2566 = vmatprep.mubr.f32.mxu0 %v2023
      %2567 = vmatmul.mubr.f32.gmra.mrb[0].mxu0 %v1991
      %v2568 = vpop.f32.mrb[0].mxu0
      %v2569 = vadd.f32 %v2410, %v2568
      %v2570 = vpop.f32.mrb[0].mxu0
      %2571 = vmatprep.mubr.f32.mxu0 %v2024
      %2572 = vmatmul.mubr.f32.gmra.mrb[0].mxu0 %v1992
      %v2573 = vpop.f32.mrb[0].mxu0
      %v2574 = vadd.f32 %v2410, %v2573
      %v2575 = vpop.f32.mrb[0].mxu0
      %2576 = vmatprep.mubr.f32.mxu0 %v2025
      %2577 = vmatmul.mubr.f32.gmra.mrb[0].mxu0 %v1993
      %v2578 = vpop.f32.mrb[0].mxu0
      %v2579 = vadd.f32 %v2410, %v2578
      %v2580 = vpop.f32.mrb[0].mxu0
      %2581 = vmatprep.mubr.f32.mxu0 %v2026
      %2582 = vmatmul.mubr.f32.gmra.mrb[0].mxu0 %v1994
      %v2583 = vpop.f32.mrb[0].mxu0
      %v2584 = vadd.f32 %v2410, %v2583
      %v2585 = vpop.f32.mrb[0].mxu0
      %2586 = vmatprep.mubr.f32.mxu0 %v2027
      %2587 = vmatmul.mubr.f32.gmra.mrb[0].mxu0 %v1995
      %v2588 = vpop.f32.mrb[0].mxu0
      %v2589 = vadd.f32 %v2410, %v2588
      %v2590 = vpop.f32.mrb[0].mxu0
      %2591 = vmatprep.mubr.f32.mxu0 %v2028
      %2592 = vmatmul.mubr.f32.gmra.mrb[0].mxu0 %v1996
      %v2593 = vpop.f32.mrb[0].mxu0
      %v2594 = vadd.f32 %v2410, %v2593
      %v2595 = vpop.f32.mrb[0].mxu0
      %2596 = vmatprep.mubr.f32.mxu0 %v2029
      %2597 = vmatmul.mubr.f32.gmra.mrb[0].mxu0 %v1997
      %v2598 = vpop.f32.mrb[0].mxu0
      %v2599 = vadd.f32 %v2410, %v2598
      %v2600 = vpop.f32.mrb[0].mxu0
      %2601 = vmatprep.mubr.f32.mxu0 %v2030
      %2602 = vmatmul.mubr.f32.gmra.mrb[0].mxu0 %v1998
      %v2603 = vpop.f32.mrb[0].mxu0
      %v2604 = vadd.f32 %v2410, %v2603
      %v2605 = vpop.f32.mrb[0].mxu0
      %2606 = vmatprep.mubr.f32.mxu0 %v2031
      %2607 = vmatmul.mubr.f32.gmra.mrb[0].mxu0 %v1999
      %v2608 = vpop.f32.mrb[0].mxu0
      %v2609 = vadd.f32 %v2410, %v2608
      %v2610 = vpop.f32.mrb[0].mxu0
      %2611 = vmatprep.mubr.f32.mxu0 %v2032
      %2612 = vmatmul.mubr.f32.gmra.mrb[0].mxu0 %v2000
      %v2613 = vpop.f32.mrb[0].mxu0
      %v2614 = vadd.f32 %v2410, %v2613
      %v2615 = vpop.f32.mrb[0].mxu0
      %2616 = vmatprep.mubr.f32.mxu0 %v2033
      %2617 = vmatmul.mubr.f32.gmra.mrb[0].mxu0 %v2001
      %v2618 = vpop.f32.mrb[0].mxu0
      %v2619 = vadd.f32 %v2410, %v2618
      %v2620 = vpop.f32.mrb[0].mxu0
      %2621 = vmatprep.mubr.f32.mxu0 %v2034
      %2622 = vmatmul.mubr.f32.gmra.mrb[0].mxu0 %v2002
      %v2623 = vpop.f32.mrb[0].mxu0
      %v2624 = vadd.f32 %v2410, %v2623
      %v2625 = vpop.f32.mrb[0].mxu0
      %2626 = vmatprep.mubr.f32.mxu0 %v2035
      %2627 = vmatmul.mubr.f32.gmra.mrb[0].mxu0 %v2003
      %v2628 = vpop.f32.mrb[0].mxu0
      %v2629 = vadd.f32 %v2410, %v2628
      %v2630 = vpop.f32.mrb[0].mxu0
      %2631 = vmatprep.mubr.f32.mxu0 %v2036
      %2632 = vmatmul.mubr.f32.gmra.mrb[0].mxu0 %v2004
      %v2633 = vpop.f32.mrb[0].mxu0
      %v2634 = vadd.f32 %v2410, %v2633
      %v2635 = vpop.f32.mrb[0].mxu0
      %2636 = vdwg.mxu0
      %2637 = vmatprep.subr.mxu0 0.0
      %2638 = vmatpush1.msra.mxu0 %v2293
      %2639 = vmatprep.subr.mxu0 0.0
      %2640 = vmatpush1.msra.mxu0 %v2294
      %2641 = vmatprep.subr.mxu0 0.0
      %2642 = vmatpush1.msra.mxu0 %v2295
      %2643 = vmatprep.subr.mxu0 0.0
      %2644 = vmatpush1.msra.mxu0 %v2296
      %2645 = vmatprep.subr.mxu0 0.0
      %2646 = vmatpush1.msra.mxu0 %v2297
      %2647 = vmatprep.subr.mxu0 0.0
      %2648 = vmatpush1.msra.mxu0 %v2298
      %2649 = vmatprep.subr.mxu0 0.0
      %2650 = vmatpush1.msra.mxu0 %v2299
      %2651 = vmatprep.subr.mxu0 0.0
      %2652 = vmatpush1.msra.mxu0 %v2300
      %2653 = vmatprep.subr.mxu0 0.0
      %2654 = vmatpush1.msra.mxu0 %v2301
      %2655 = vmatprep.subr.mxu0 0.0
      %2656 = vmatpush1.msra.mxu0 %v2302
      %2657 = vmatprep.subr.mxu0 0.0
      %2658 = vmatpush1.msra.mxu0 %v2303
      %2659 = vmatprep.subr.mxu0 0.0
      %2660 = vmatpush1.msra.mxu0 %v2304
      %2661 = vmatprep.subr.mxu0 0.0
      %2662 = vmatpush1.msra.mxu0 %v2305
      %2663 = vmatprep.subr.mxu0 0.0
      %2664 = vmatpush1.msra.mxu0 %v2306
      %2665 = vmatprep.subr.mxu0 0.0
      %2666 = vmatpush1.msra.mxu0 %v2307
      %2667 = vmatprep.subr.mxu0 0.0
      %2668 = vmatpush1.msra.mxu0 %v2308
      %2669 = vmatprep.subr.mxu0 0.0
      %2670 = vmatpush1.msra.mxu0 %v2309
      %2671 = vmatprep.subr.mxu0 0.0
      %2672 = vmatpush1.msra.mxu0 %v2310
      %2673 = vmatprep.subr.mxu0 0.0
      %2674 = vmatpush1.msra.mxu0 %v2311
      %2675 = vmatprep.subr.mxu0 0.0
      %2676 = vmatpush1.msra.mxu0 %v2312
      %2677 = vmatprep.subr.mxu0 0.0
      %2678 = vmatpush1.msra.mxu0 %v2313
      %2679 = vmatprep.subr.mxu0 0.0
      %2680 = vmatpush1.msra.mxu0 %v2314
      %2681 = vmatprep.subr.mxu0 0.0
      %2682 = vmatpush1.msra.mxu0 %v2315
      %2683 = vmatprep.subr.mxu0 0.0
      %2684 = vmatpush1.msra.mxu0 %v2316
      %2685 = vmatprep.subr.mxu0 0.0
      %2686 = vmatpush1.msra.mxu0 %v2317
      %2687 = vmatprep.subr.mxu0 0.0
      %2688 = vmatpush1.msra.mxu0 %v2318
      %2689 = vmatprep.subr.mxu0 0.0
      %2690 = vmatpush1.msra.mxu0 %v2319
      %2691 = vmatprep.subr.mxu0 0.0
      %2692 = vmatpush1.msra.mxu0 %v2320
      %2693 = vmatprep.subr.mxu0 0.0
      %2694 = vmatpush1.msra.mxu0 %v2321
      %2695 = vmatprep.subr.mxu0 0.0
      %2696 = vmatpush1.msra.mxu0 %v2322
      %2697 = vmatprep.subr.mxu0 0.0
      %2698 = vmatpush1.msra.mxu0 %v2323
      %2699 = vmatprep.subr.mxu0 0.0
      %2700 = vmatpush1.msra.mxu0 %v2324
      %2701 = vmatprep.mubr.f32.mxu0 %v2069
      %2702 = vmatmul.mubr.f32.gmra.mrb[0].mxu0 %v2037
      %v2703 = vpop.f32.mrb[0].mxu0
      %v2704 = vadd.f32 %v2479, %v2703
      %v2705 = vpop.f32.mrb[0].mxu0
      %2706 = vmatprep.mubr.f32.mxu0 %v2070
      %2707 = vmatmul.mubr.f32.gmra.mrb[0].mxu0 %v2038
      %v2708 = vpop.f32.mrb[0].mxu0
      %v2709 = vadd.f32 %v2484, %v2708
      %v2710 = vpop.f32.mrb[0].mxu0
      %2711 = vmatprep.mubr.f32.mxu0 %v2071
      %2712 = vmatmul.mubr.f32.gmra.mrb[0].mxu0 %v2039
      %v2713 = vpop.f32.mrb[0].mxu0
      %v2714 = vadd.f32 %v2489, %v2713
      %v2715 = vpop.f32.mrb[0].mxu0
      %2716 = vmatprep.mubr.f32.mxu0 %v2072
      %2717 = vmatmul.mubr.f32.gmra.mrb[0].mxu0 %v2040
      %v2718 = vpop.f32.mrb[0].mxu0
      %v2719 = vadd.f32 %v2494, %v2718
      %v2720 = vpop.f32.mrb[0].mxu0
      %2721 = vmatprep.mubr.f32.mxu0 %v2073
      %2722 = vmatmul.mubr.f32.gmra.mrb[0].mxu0 %v2041
      %v2723 = vpop.f32.mrb[0].mxu0
      %v2724 = vadd.f32 %v2499, %v2723
      %v2725 = vpop.f32.mrb[0].mxu0
      %2726 = vmatprep.mubr.f32.mxu0 %v2074
      %2727 = vmatmul.mubr.f32.gmra.mrb[0].mxu0 %v2042
      %v2728 = vpop.f32.mrb[0].mxu0
      %v2729 = vadd.f32 %v2504, %v2728
      %v2730 = vpop.f32.mrb[0].mxu0
      %2731 = vmatprep.mubr.f32.mxu0 %v2075
      %2732 = vmatmul.mubr.f32.gmra.mrb[0].mxu0 %v2043
      %v2733 = vpop.f32.mrb[0].mxu0
      %v2734 = vadd.f32 %v2509, %v2733
      %v2735 = vpop.f32.mrb[0].mxu0
      %2736 = vmatprep.mubr.f32.mxu0 %v2076
      %2737 = vmatmul.mubr.f32.gmra.mrb[0].mxu0 %v2044
      %v2738 = vpop.f32.mrb[0].mxu0
      %v2739 = vadd.f32 %v2514, %v2738
      %v2740 = vpop.f32.mrb[0].mxu0
      %2741 = vmatprep.mubr.f32.mxu0 %v2077
      %2742 = vmatmul.mubr.f32.gmra.mrb[0].mxu0 %v2045
      %v2743 = vpop.f32.mrb[0].mxu0
      %v2744 = vadd.f32 %v2519, %v2743
      %v2745 = vpop.f32.mrb[0].mxu0
      %2746 = vmatprep.mubr.f32.mxu0 %v2078
      %2747 = vmatmul.mubr.f32.gmra.mrb[0].mxu0 %v2046
      %v2748 = vpop.f32.mrb[0].mxu0
      %v2749 = vadd.f32 %v2524, %v2748
      %v2750 = vpop.f32.mrb[0].mxu0
      %2751 = vmatprep.mubr.f32.mxu0 %v2079
      %2752 = vmatmul.mubr.f32.gmra.mrb[0].mxu0 %v2047
      %v2753 = vpop.f32.mrb[0].mxu0
      %v2754 = vadd.f32 %v2529, %v2753
      %v2755 = vpop.f32.mrb[0].mxu0
      %2756 = vmatprep.mubr.f32.mxu0 %v2080
      %2757 = vmatmul.mubr.f32.gmra.mrb[0].mxu0 %v2048
      %v2758 = vpop.f32.mrb[0].mxu0
      %v2759 = vadd.f32 %v2534, %v2758
      %v2760 = vpop.f32.mrb[0].mxu0
      %2761 = vmatprep.mubr.f32.mxu0 %v2081
      %2762 = vmatmul.mubr.f32.gmra.mrb[0].mxu0 %v2049
      %v2763 = vpop.f32.mrb[0].mxu0
      %v2764 = vadd.f32 %v2539, %v2763
      %v2765 = vpop.f32.mrb[0].mxu0
      %2766 = vmatprep.mubr.f32.mxu0 %v2082
      %2767 = vmatmul.mubr.f32.gmra.mrb[0].mxu0 %v2050
      %v2768 = vpop.f32.mrb[0].mxu0
      %v2769 = vadd.f32 %v2544, %v2768
      %v2770 = vpop.f32.mrb[0].mxu0
      %2771 = vmatprep.mubr.f32.mxu0 %v2083
      %2772 = vmatmul.mubr.f32.gmra.mrb[0].mxu0 %v2051
      %v2773 = vpop.f32.mrb[0].mxu0
      %v2774 = vadd.f32 %v2549, %v2773
      %v2775 = vpop.f32.mrb[0].mxu0
      %2776 = vmatprep.mubr.f32.mxu0 %v2084
      %2777 = vmatmul.mubr.f32.gmra.mrb[0].mxu0 %v2052
      %v2778 = vpop.f32.mrb[0].mxu0
      %v2779 = vadd.f32 %v2554, %v2778
      %v2780 = vpop.f32.mrb[0].mxu0
      %2781 = vmatprep.mubr.f32.mxu0 %v2085
      %2782 = vmatmul.mubr.f32.gmra.mrb[0].mxu0 %v2053
      %v2783 = vpop.f32.mrb[0].mxu0
      %v2784 = vadd.f32 %v2559, %v2783
      %v2785 = vpop.f32.mrb[0].mxu0
      %2786 = vmatprep.mubr.f32.mxu0 %v2086
      %2787 = vmatmul.mubr.f32.gmra.mrb[0].mxu0 %v2054
      %v2788 = vpop.f32.mrb[0].mxu0
      %v2789 = vadd.f32 %v2564, %v2788
      %v2790 = vpop.f32.mrb[0].mxu0
      %2791 = vmatprep.mubr.f32.mxu0 %v2087
      %2792 = vmatmul.mubr.f32.gmra.mrb[0].mxu0 %v2055
      %v2793 = vpop.f32.mrb[0].mxu0
      %v2794 = vadd.f32 %v2569, %v2793
      %v2795 = vpop.f32.mrb[0].mxu0
      %2796 = vmatprep.mubr.f32.mxu0 %v2088
      %2797 = vmatmul.mubr.f32.gmra.mrb[0].mxu0 %v2056
      %v2798 = vpop.f32.mrb[0].mxu0
      %v2799 = vadd.f32 %v2574, %v2798
      %v2800 = vpop.f32.mrb[0].mxu0
      %2801 = vmatprep.mubr.f32.mxu0 %v2089
      %2802 = vmatmul.mubr.f32.gmra.mrb[0].mxu0 %v2057
      %v2803 = vpop.f32.mrb[0].mxu0
      %v2804 = vadd.f32 %v2579, %v2803
      %v2805 = vpop.f32.mrb[0].mxu0
      %2806 = vmatprep.mubr.f32.mxu0 %v2090
      %2807 = vmatmul.mubr.f32.gmra.mrb[0].mxu0 %v2058
      %v2808 = vpop.f32.mrb[0].mxu0
      %v2809 = vadd.f32 %v2584, %v2808
      %v2810 = vpop.f32.mrb[0].mxu0
      %2811 = vmatprep.mubr.f32.mxu0 %v2091
      %2812 = vmatmul.mubr.f32.gmra.mrb[0].mxu0 %v2059
      %v2813 = vpop.f32.mrb[0].mxu0
      %v2814 = vadd.f32 %v2589, %v2813
      %v2815 = vpop.f32.mrb[0].mxu0
      %2816 = vmatprep.mubr.f32.mxu0 %v2092
      %2817 = vmatmul.mubr.f32.gmra.mrb[0].mxu0 %v2060
      %v2818 = vpop.f32.mrb[0].mxu0
      %v2819 = vadd.f32 %v2594, %v2818
      %v2820 = vpop.f32.mrb[0].mxu0
      %2821 = vmatprep.mubr.f32.mxu0 %v2093
      %2822 = vmatmul.mubr.f32.gmra.mrb[0].mxu0 %v2061
      %v2823 = vpop.f32.mrb[0].mxu0
      %v2824 = vadd.f32 %v2599, %v2823
      %v2825 = vpop.f32.mrb[0].mxu0
      %2826 = vmatprep.mubr.f32.mxu0 %v2094
      %2827 = vmatmul.mubr.f32.gmra.mrb[0].mxu0 %v2062
      %v2828 = vpop.f32.mrb[0].mxu0
      %v2829 = vadd.f32 %v2604, %v2828
      %v2830 = vpop.f32.mrb[0].mxu0
      %2831 = vmatprep.mubr.f32.mxu0 %v2095
      %2832 = vmatmul.mubr.f32.gmra.mrb[0].mxu0 %v2063
      %v2833 = vpop.f32.mrb[0].mxu0
      %v2834 = vadd.f32 %v2609, %v2833
      %v2835 = vpop.f32.mrb[0].mxu0
      %2836 = vmatprep.mubr.f32.mxu0 %v2096
      %2837 = vmatmul.mubr.f32.gmra.mrb[0].mxu0 %v2064
      %v2838 = vpop.f32.mrb[0].mxu0
      %v2839 = vadd.f32 %v2614, %v2838
      %v2840 = vpop.f32.mrb[0].mxu0
      %2841 = vmatprep.mubr.f32.mxu0 %v2097
      %2842 = vmatmul.mubr.f32.gmra.mrb[0].mxu0 %v2065
      %v2843 = vpop.f32.mrb[0].mxu0
      %v2844 = vadd.f32 %v2619, %v2843
      %v2845 = vpop.f32.mrb[0].mxu0
      %2846 = vmatprep.mubr.f32.mxu0 %v2098
      %2847 = vmatmul.mubr.f32.gmra.mrb[0].mxu0 %v2066
      %v2848 = vpop.f32.mrb[0].mxu0
      %v2849 = vadd.f32 %v2624, %v2848
      %v2850 = vpop.f32.mrb[0].mxu0
      %2851 = vmatprep.mubr.f32.mxu0 %v2099
      %2852 = vmatmul.mubr.f32.gmra.mrb[0].mxu0 %v2067
      %v2853 = vpop.f32.mrb[0].mxu0
      %v2854 = vadd.f32 %v2629, %v2853
      %v2855 = vpop.f32.mrb[0].mxu0
      %2856 = vmatprep.mubr.f32.mxu0 %v2100
      %2857 = vmatmul.mubr.f32.gmra.mrb[0].mxu0 %v2068
      %v2858 = vpop.f32.mrb[0].mxu0
      %v2859 = vadd.f32 %v2634, %v2858
      %v2860 = vpop.f32.mrb[0].mxu0
      %2861 = vdwg.mxu0
      %2862 = vmatprep.subr.mxu0 0.0
      %2863 = vmatpush1.msra.mxu0 %v2325
      %2864 = vmatprep.subr.mxu0 0.0
      %2865 = vmatpush1.msra.mxu0 %v2326
      %2866 = vmatprep.subr.mxu0 0.0
      %2867 = vmatpush1.msra.mxu0 %v2327
      %2868 = vmatprep.subr.mxu0 0.0
      %2869 = vmatpush1.msra.mxu0 %v2328
      %2870 = vmatprep.subr.mxu0 0.0
      %2871 = vmatpush1.msra.mxu0 %v2329
      %2872 = vmatprep.subr.mxu0 0.0
      %2873 = vmatpush1.msra.mxu0 %v2330
      %2874 = vmatprep.subr.mxu0 0.0
      %2875 = vmatpush1.msra.mxu0 %v2331
      %2876 = vmatprep.subr.mxu0 0.0
      %2877 = vmatpush1.msra.mxu0 %v2332
      %2878 = vmatprep.subr.mxu0 0.0
      %2879 = vmatpush1.msra.mxu0 %v2333
      %2880 = vmatprep.subr.mxu0 0.0
      %2881 = vmatpush1.msra.mxu0 %v2334
      %2882 = vmatprep.subr.mxu0 0.0
      %2883 = vmatpush1.msra.mxu0 %v2335
      %2884 = vmatprep.subr.mxu0 0.0
      %2885 = vmatpush1.msra.mxu0 %v2336
      %2886 = vmatprep.subr.mxu0 0.0
      %2887 = vmatpush1.msra.mxu0 %v2337
      %2888 = vmatprep.subr.mxu0 0.0
      %2889 = vmatpush1.msra.mxu0 %v2338
      %2890 = vmatprep.subr.mxu0 0.0
      %2891 = vmatpush1.msra.mxu0 %v2339
      %2892 = vmatprep.subr.mxu0 0.0
      %2893 = vmatpush1.msra.mxu0 %v2340
      %2894 = vmatprep.subr.mxu0 0.0
      %2895 = vmatpush1.msra.mxu0 %v2341
      %2896 = vmatprep.subr.mxu0 0.0
      %2897 = vmatpush1.msra.mxu0 %v2342
      %2898 = vmatprep.subr.mxu0 0.0
      %2899 = vmatpush1.msra.mxu0 %v2343
      %2900 = vmatprep.subr.mxu0 0.0
      %2901 = vmatpush1.msra.mxu0 %v2344
      %2902 = vmatprep.subr.mxu0 0.0
      %2903 = vmatpush1.msra.mxu0 %v2345
      %2904 = vmatprep.subr.mxu0 0.0
      %2905 = vmatpush1.msra.mxu0 %v2346
      %2906 = vmatprep.subr.mxu0 0.0
      %2907 = vmatpush1.msra.mxu0 %v2347
      %2908 = vmatprep.subr.mxu0 0.0
      %2909 = vmatpush1.msra.mxu0 %v2348
      %2910 = vmatprep.subr.mxu0 0.0
      %2911 = vmatpush1.msra.mxu0 %v2349
      %2912 = vmatprep.subr.mxu0 0.0
      %2913 = vmatpush1.msra.mxu0 %v2350
      %2914 = vmatprep.subr.mxu0 0.0
      %2915 = vmatpush1.msra.mxu0 %v2351
      %2916 = vmatprep.subr.mxu0 0.0
      %2917 = vmatpush1.msra.mxu0 %v2352
      %2918 = vmatprep.subr.mxu0 0.0
      %2919 = vmatpush1.msra.mxu0 %v2353
      %2920 = vmatprep.subr.mxu0 0.0
      %2921 = vmatpush1.msra.mxu0 %v2354
      %2922 = vmatprep.subr.mxu0 0.0
      %2923 = vmatpush1.msra.mxu0 %v2355
      %2924 = vmatprep.subr.mxu0 0.0
      %2925 = vmatpush1.msra.mxu0 %v2356
      %2926 = vmatprep.mubr.f32.mxu0 %v2133
      %2927 = vmatmul.mubr.f32.gmra.mrb[0].mxu0 %v2101
      %v2928 = vpop.f32.mrb[0].mxu0
      %v2929 = vadd.f32 %v2704, %v2928
      %v2930 = vpop.f32.mrb[0].mxu0
      %2931 = vmatprep.mubr.f32.mxu0 %v2134
      %2932 = vmatmul.mubr.f32.gmra.mrb[0].mxu0 %v2102
      %v2933 = vpop.f32.mrb[0].mxu0
      %v2934 = vadd.f32 %v2709, %v2933
      %v2935 = vpop.f32.mrb[0].mxu0
      %2936 = vmatprep.mubr.f32.mxu0 %v2135
      %2937 = vmatmul.mubr.f32.gmra.mrb[0].mxu0 %v2103
      %v2938 = vpop.f32.mrb[0].mxu0
      %v2939 = vadd.f32 %v2714, %v2938
      %v2940 = vpop.f32.mrb[0].mxu0
      %2941 = vmatprep.mubr.f32.mxu0 %v2136
      %2942 = vmatmul.mubr.f32.gmra.mrb[0].mxu0 %v2104
      %v2943 = vpop.f32.mrb[0].mxu0
      %v2944 = vadd.f32 %v2719, %v2943
      %v2945 = vpop.f32.mrb[0].mxu0
      %2946 = vmatprep.mubr.f32.mxu0 %v2137
      %2947 = vmatmul.mubr.f32.gmra.mrb[0].mxu0 %v2105
      %v2948 = vpop.f32.mrb[0].mxu0
      %v2949 = vadd.f32 %v2724, %v2948
      %v2950 = vpop.f32.mrb[0].mxu0
      %2951 = vmatprep.mubr.f32.mxu0 %v2138
      %2952 = vmatmul.mubr.f32.gmra.mrb[0].mxu0 %v2106
      %v2953 = vpop.f32.mrb[0].mxu0
      %v2954 = vadd.f32 %v2729, %v2953
      %v2955 = vpop.f32.mrb[0].mxu0
      %2956 = vmatprep.mubr.f32.mxu0 %v2139
      %2957 = vmatmul.mubr.f32.gmra.mrb[0].mxu0 %v2107
      %v2958 = vpop.f32.mrb[0].mxu0
      %v2959 = vadd.f32 %v2734, %v2958
      %v2960 = vpop.f32.mrb[0].mxu0
      %2961 = vmatprep.mubr.f32.mxu0 %v2140
      %2962 = vmatmul.mubr.f32.gmra.mrb[0].mxu0 %v2108
      %v2963 = vpop.f32.mrb[0].mxu0
      %v2964 = vadd.f32 %v2739, %v2963
      %v2965 = vpop.f32.mrb[0].mxu0
      %2966 = vmatprep.mubr.f32.mxu0 %v2141
      %2967 = vmatmul.mubr.f32.gmra.mrb[0].mxu0 %v2109
      %v2968 = vpop.f32.mrb[0].mxu0
      %v2969 = vadd.f32 %v2744, %v2968
      %v2970 = vpop.f32.mrb[0].mxu0
      %2971 = vmatprep.mubr.f32.mxu0 %v2142
      %2972 = vmatmul.mubr.f32.gmra.mrb[0].mxu0 %v2110
      %v2973 = vpop.f32.mrb[0].mxu0
      %v2974 = vadd.f32 %v2749, %v2973
      %v2975 = vpop.f32.mrb[0].mxu0
      %2976 = vmatprep.mubr.f32.mxu0 %v2143
      %2977 = vmatmul.mubr.f32.gmra.mrb[0].mxu0 %v2111
      %v2978 = vpop.f32.mrb[0].mxu0
      %v2979 = vadd.f32 %v2754, %v2978
      %v2980 = vpop.f32.mrb[0].mxu0
      %2981 = vmatprep.mubr.f32.mxu0 %v2144
      %2982 = vmatmul.mubr.f32.gmra.mrb[0].mxu0 %v2112
      %v2983 = vpop.f32.mrb[0].mxu0
      %v2984 = vadd.f32 %v2759, %v2983
      %v2985 = vpop.f32.mrb[0].mxu0
      %2986 = vmatprep.mubr.f32.mxu0 %v2145
      %2987 = vmatmul.mubr.f32.gmra.mrb[0].mxu0 %v2113
      %v2988 = vpop.f32.mrb[0].mxu0
      %v2989 = vadd.f32 %v2764, %v2988
      %v2990 = vpop.f32.mrb[0].mxu0
      %2991 = vmatprep.mubr.f32.mxu0 %v2146
      %2992 = vmatmul.mubr.f32.gmra.mrb[0].mxu0 %v2114
      %v2993 = vpop.f32.mrb[0].mxu0
      %v2994 = vadd.f32 %v2769, %v2993
      %v2995 = vpop.f32.mrb[0].mxu0
      %2996 = vmatprep.mubr.f32.mxu0 %v2147
      %2997 = vmatmul.mubr.f32.gmra.mrb[0].mxu0 %v2115
      %v2998 = vpop.f32.mrb[0].mxu0
      %v2999 = vadd.f32 %v2774, %v2998
      %v3000 = vpop.f32.mrb[0].mxu0
      %3001 = vmatprep.mubr.f32.mxu0 %v2148
      %3002 = vmatmul.mubr.f32.gmra.mrb[0].mxu0 %v2116
      %v3003 = vpop.f32.mrb[0].mxu0
      %v3004 = vadd.f32 %v2779, %v3003
      %v3005 = vpop.f32.mrb[0].mxu0
      %3006 = vmatprep.mubr.f32.mxu0 %v2149
      %3007 = vmatmul.mubr.f32.gmra.mrb[0].mxu0 %v2117
      %v3008 = vpop.f32.mrb[0].mxu0
      %v3009 = vadd.f32 %v2784, %v3008
      %v3010 = vpop.f32.mrb[0].mxu0
      %3011 = vmatprep.mubr.f32.mxu0 %v2150
      %3012 = vmatmul.mubr.f32.gmra.mrb[0].mxu0 %v2118
      %v3013 = vpop.f32.mrb[0].mxu0
      %v3014 = vadd.f32 %v2789, %v3013
      %v3015 = vpop.f32.mrb[0].mxu0
      %3016 = vmatprep.mubr.f32.mxu0 %v2151
      %3017 = vmatmul.mubr.f32.gmra.mrb[0].mxu0 %v2119
      %v3018 = vpop.f32.mrb[0].mxu0
      %v3019 = vadd.f32 %v2794, %v3018
      %v3020 = vpop.f32.mrb[0].mxu0
      %3021 = vmatprep.mubr.f32.mxu0 %v2152
      %3022 = vmatmul.mubr.f32.gmra.mrb[0].mxu0 %v2120
      %v3023 = vpop.f32.mrb[0].mxu0
      %v3024 = vadd.f32 %v2799, %v3023
      %v3025 = vpop.f32.mrb[0].mxu0
      %3026 = vmatprep.mubr.f32.mxu0 %v2153
      %3027 = vmatmul.mubr.f32.gmra.mrb[0].mxu0 %v2121
      %v3028 = vpop.f32.mrb[0].mxu0
      %v3029 = vadd.f32 %v2804, %v3028
      %v3030 = vpop.f32.mrb[0].mxu0
      %3031 = vmatprep.mubr.f32.mxu0 %v2154
      %3032 = vmatmul.mubr.f32.gmra.mrb[0].mxu0 %v2122
      %v3033 = vpop.f32.mrb[0].mxu0
      %v3034 = vadd.f32 %v2809, %v3033
      %v3035 = vpop.f32.mrb[0].mxu0
      %3036 = vmatprep.mubr.f32.mxu0 %v2155
      %3037 = vmatmul.mubr.f32.gmra.mrb[0].mxu0 %v2123
      %v3038 = vpop.f32.mrb[0].mxu0
      %v3039 = vadd.f32 %v2814, %v3038
      %v3040 = vpop.f32.mrb[0].mxu0
      %3041 = vmatprep.mubr.f32.mxu0 %v2156
      %3042 = vmatmul.mubr.f32.gmra.mrb[0].mxu0 %v2124
      %v3043 = vpop.f32.mrb[0].mxu0
      %v3044 = vadd.f32 %v2819, %v3043
      %v3045 = vpop.f32.mrb[0].mxu0
      %3046 = vmatprep.mubr.f32.mxu0 %v2157
      %3047 = vmatmul.mubr.f32.gmra.mrb[0].mxu0 %v2125
      %v3048 = vpop.f32.mrb[0].mxu0
      %v3049 = vadd.f32 %v2824, %v3048
      %v3050 = vpop.f32.mrb[0].mxu0
      %3051 = vmatprep.mubr.f32.mxu0 %v2158
      %3052 = vmatmul.mubr.f32.gmra.mrb[0].mxu0 %v2126
      %v3053 = vpop.f32.mrb[0].mxu0
      %v3054 = vadd.f32 %v2829, %v3053
      %v3055 = vpop.f32.mrb[0].mxu0
      %3056 = vmatprep.mubr.f32.mxu0 %v2159
      %3057 = vmatmul.mubr.f32.gmra.mrb[0].mxu0 %v2127
      %v3058 = vpop.f32.mrb[0].mxu0
      %v3059 = vadd.f32 %v2834, %v3058
      %v3060 = vpop.f32.mrb[0].mxu0
      %3061 = vmatprep.mubr.f32.mxu0 %v2160
      %3062 = vmatmul.mubr.f32.gmra.mrb[0].mxu0 %v2128
      %v3063 = vpop.f32.mrb[0].mxu0
      %v3064 = vadd.f32 %v2839, %v3063
      %v3065 = vpop.f32.mrb[0].mxu0
      %3066 = vmatprep.mubr.f32.mxu0 %v2161
      %3067 = vmatmul.mubr.f32.gmra.mrb[0].mxu0 %v2129
      %v3068 = vpop.f32.mrb[0].mxu0
      %v3069 = vadd.f32 %v2844, %v3068
      %v3070 = vpop.f32.mrb[0].mxu0
      %3071 = vmatprep.mubr.f32.mxu0 %v2162
      %3072 = vmatmul.mubr.f32.gmra.mrb[0].mxu0 %v2130
      %v3073 = vpop.f32.mrb[0].mxu0
      %v3074 = vadd.f32 %v2849, %v3073
      %v3075 = vpop.f32.mrb[0].mxu0
      %3076 = vmatprep.mubr.f32.mxu0 %v2163
      %3077 = vmatmul.mubr.f32.gmra.mrb[0].mxu0 %v2131
      %v3078 = vpop.f32.mrb[0].mxu0
      %v3079 = vadd.f32 %v2854, %v3078
      %v3080 = vpop.f32.mrb[0].mxu0
      %3081 = vmatprep.mubr.f32.mxu0 %v2164
      %3082 = vmatmul.mubr.f32.gmra.mrb[0].mxu0 %v2132
      %v3083 = vpop.f32.mrb[0].mxu0
      %v3084 = vadd.f32 %v2859, %v3083
      %v3085 = vpop.f32.mrb[0].mxu0
      %3086 = vdwg.mxu0
      %3087 = vmatprep.subr.mxu0 0.0
      %3088 = vmatpush1.msra.mxu0 %v2357
      %3089 = vmatprep.subr.mxu0 0.0
      %3090 = vmatpush1.msra.mxu0 %v2358
      %3091 = vmatprep.subr.mxu0 0.0
      %3092 = vmatpush1.msra.mxu0 %v2359
      %3093 = vmatprep.subr.mxu0 0.0
      %3094 = vmatpush1.msra.mxu0 %v2360
      %3095 = vmatprep.subr.mxu0 0.0
      %3096 = vmatpush1.msra.mxu0 %v2361
      %3097 = vmatprep.subr.mxu0 0.0
      %3098 = vmatpush1.msra.mxu0 %v2362
      %3099 = vmatprep.subr.mxu0 0.0
      %3100 = vmatpush1.msra.mxu0 %v2363
      %3101 = vmatprep.subr.mxu0 0.0
      %3102 = vmatpush1.msra.mxu0 %v2364
      %3103 = vmatprep.subr.mxu0 0.0
      %3104 = vmatpush1.msra.mxu0 %v2365
      %3105 = vmatprep.subr.mxu0 0.0
      %3106 = vmatpush1.msra.mxu0 %v2366
      %3107 = vmatprep.subr.mxu0 0.0
      %3108 = vmatpush1.msra.mxu0 %v2367
      %3109 = vmatprep.subr.mxu0 0.0
      %3110 = vmatpush1.msra.mxu0 %v2368
      %3111 = vmatprep.subr.mxu0 0.0
      %3112 = vmatpush1.msra.mxu0 %v2369
      %3113 = vmatprep.subr.mxu0 0.0
      %3114 = vmatpush1.msra.mxu0 %v2370
      %3115 = vmatprep.subr.mxu0 0.0
      %3116 = vmatpush1.msra.mxu0 %v2371
      %3117 = vmatprep.subr.mxu0 0.0
      %3118 = vmatpush1.msra.mxu0 %v2372
      %3119 = vmatprep.subr.mxu0 0.0
      %3120 = vmatpush1.msra.mxu0 %v2373
      %3121 = vmatprep.subr.mxu0 0.0
      %3122 = vmatpush1.msra.mxu0 %v2374
      %3123 = vmatprep.subr.mxu0 0.0
      %3124 = vmatpush1.msra.mxu0 %v2375
      %3125 = vmatprep.subr.mxu0 0.0
      %3126 = vmatpush1.msra.mxu0 %v2376
      %3127 = vmatprep.subr.mxu0 0.0
      %3128 = vmatpush1.msra.mxu0 %v2377
      %3129 = vmatprep.subr.mxu0 0.0
      %3130 = vmatpush1.msra.mxu0 %v2378
      %3131 = vmatprep.subr.mxu0 0.0
      %3132 = vmatpush1.msra.mxu0 %v2379
      %3133 = vmatprep.subr.mxu0 0.0
      %3134 = vmatpush1.msra.mxu0 %v2380
      %3135 = vmatprep.subr.mxu0 0.0
      %3136 = vmatpush1.msra.mxu0 %v2381
      %3137 = vmatprep.subr.mxu0 0.0
      %3138 = vmatpush1.msra.mxu0 %v2382
      %3139 = vmatprep.subr.mxu0 0.0
      %3140 = vmatpush1.msra.mxu0 %v2383
      %3141 = vmatprep.subr.mxu0 0.0
      %3142 = vmatpush1.msra.mxu0 %v2384
      %3143 = vmatprep.subr.mxu0 0.0
      %3144 = vmatpush1.msra.mxu0 %v2385
      %3145 = vmatprep.subr.mxu0 0.0
      %3146 = vmatpush1.msra.mxu0 %v2386
      %3147 = vmatprep.subr.mxu0 0.0
      %3148 = vmatpush1.msra.mxu0 %v2387
      %3149 = vmatprep.subr.mxu0 0.0
      %3150 = vmatpush1.msra.mxu0 %v2388
      %3151 = vmatprep.mubr.f32.mxu0 %v2197
      %3152 = vmatmul.mubr.f32.gmra.mrb[0].mxu0 %v2165
      %v3153 = vpop.f32.mrb[0].mxu0
      %v3154 = vadd.f32 %v2929, %v3153
      %v3155 = vpop.f32.mrb[0].mxu0
      %3156 = vmatprep.mubr.f32.mxu0 %v2198
      %3157 = vmatmul.mubr.f32.gmra.mrb[0].mxu0 %v2166
      %v3158 = vpop.f32.mrb[0].mxu0
      %v3159 = vadd.f32 %v2934, %v3158
      %v3160 = vpop.f32.mrb[0].mxu0
      %3161 = vmatprep.mubr.f32.mxu0 %v2199
      %3162 = vmatmul.mubr.f32.gmra.mrb[0].mxu0 %v2167
      %v3163 = vpop.f32.mrb[0].mxu0
      %v3164 = vadd.f32 %v2939, %v3163
      %v3165 = vpop.f32.mrb[0].mxu0
      %3166 = vmatprep.mubr.f32.mxu0 %v2200
      %3167 = vmatmul.mubr.f32.gmra.mrb[0].mxu0 %v2168
      %v3168 = vpop.f32.mrb[0].mxu0
      %v3169 = vadd.f32 %v2944, %v3168
      %v3170 = vpop.f32.mrb[0].mxu0
      %3171 = vmatprep.mubr.f32.mxu0 %v2201
      %3172 = vmatmul.mubr.f32.gmra.mrb[0].mxu0 %v2169
      %v3173 = vpop.f32.mrb[0].mxu0
      %v3174 = vadd.f32 %v2949, %v3173
      %v3175 = vpop.f32.mrb[0].mxu0
      %3176 = vmatprep.mubr.f32.mxu0 %v2202
      %3177 = vmatmul.mubr.f32.gmra.mrb[0].mxu0 %v2170
      %v3178 = vpop.f32.mrb[0].mxu0
      %v3179 = vadd.f32 %v2954, %v3178
      %v3180 = vpop.f32.mrb[0].mxu0
      %3181 = vmatprep.mubr.f32.mxu0 %v2203
      %3182 = vmatmul.mubr.f32.gmra.mrb[0].mxu0 %v2171
      %v3183 = vpop.f32.mrb[0].mxu0
      %v3184 = vadd.f32 %v2959, %v3183
      %v3185 = vpop.f32.mrb[0].mxu0
      %3186 = vmatprep.mubr.f32.mxu0 %v2204
      %3187 = vmatmul.mubr.f32.gmra.mrb[0].mxu0 %v2172
      %v3188 = vpop.f32.mrb[0].mxu0
      %v3189 = vadd.f32 %v2964, %v3188
      %v3190 = vpop.f32.mrb[0].mxu0
      %3191 = vmatprep.mubr.f32.mxu0 %v2205
      %3192 = vmatmul.mubr.f32.gmra.mrb[0].mxu0 %v2173
      %v3193 = vpop.f32.mrb[0].mxu0
      %v3194 = vadd.f32 %v2969, %v3193
      %v3195 = vpop.f32.mrb[0].mxu0
      %3196 = vmatprep.mubr.f32.mxu0 %v2206
      %3197 = vmatmul.mubr.f32.gmra.mrb[0].mxu0 %v2174
      %v3198 = vpop.f32.mrb[0].mxu0
      %v3199 = vadd.f32 %v2974, %v3198
      %v3200 = vpop.f32.mrb[0].mxu0
      %3201 = vmatprep.mubr.f32.mxu0 %v2207
      %3202 = vmatmul.mubr.f32.gmra.mrb[0].mxu0 %v2175
      %v3203 = vpop.f32.mrb[0].mxu0
      %v3204 = vadd.f32 %v2979, %v3203
      %v3205 = vpop.f32.mrb[0].mxu0
      %3206 = vmatprep.mubr.f32.mxu0 %v2208
      %3207 = vmatmul.mubr.f32.gmra.mrb[0].mxu0 %v2176
      %v3208 = vpop.f32.mrb[0].mxu0
      %v3209 = vadd.f32 %v2984, %v3208
      %v3210 = vpop.f32.mrb[0].mxu0
      %3211 = vmatprep.mubr.f32.mxu0 %v2209
      %3212 = vmatmul.mubr.f32.gmra.mrb[0].mxu0 %v2177
      %v3213 = vpop.f32.mrb[0].mxu0
      %v3214 = vadd.f32 %v2989, %v3213
      %v3215 = vpop.f32.mrb[0].mxu0
      %3216 = vmatprep.mubr.f32.mxu0 %v2210
      %3217 = vmatmul.mubr.f32.gmra.mrb[0].mxu0 %v2178
      %v3218 = vpop.f32.mrb[0].mxu0
      %v3219 = vadd.f32 %v2994, %v3218
      %v3220 = vpop.f32.mrb[0].mxu0
      %3221 = vmatprep.mubr.f32.mxu0 %v2211
      %3222 = vmatmul.mubr.f32.gmra.mrb[0].mxu0 %v2179
      %v3223 = vpop.f32.mrb[0].mxu0
      %v3224 = vadd.f32 %v2999, %v3223
      %v3225 = vpop.f32.mrb[0].mxu0
      %3226 = vmatprep.mubr.f32.mxu0 %v2212
      %3227 = vmatmul.mubr.f32.gmra.mrb[0].mxu0 %v2180
      %v3228 = vpop.f32.mrb[0].mxu0
      %v3229 = vadd.f32 %v3004, %v3228
      %v3230 = vpop.f32.mrb[0].mxu0
      %3231 = vmatprep.mubr.f32.mxu0 %v2213
      %3232 = vmatmul.mubr.f32.gmra.mrb[0].mxu0 %v2181
      %v3233 = vpop.f32.mrb[0].mxu0
      %v3234 = vadd.f32 %v3009, %v3233
      %v3235 = vpop.f32.mrb[0].mxu0
      %3236 = vmatprep.mubr.f32.mxu0 %v2214
      %3237 = vmatmul.mubr.f32.gmra.mrb[0].mxu0 %v2182
      %v3238 = vpop.f32.mrb[0].mxu0
      %v3239 = vadd.f32 %v3014, %v3238
      %v3240 = vpop.f32.mrb[0].mxu0
      %3241 = vmatprep.mubr.f32.mxu0 %v2215
      %3242 = vmatmul.mubr.f32.gmra.mrb[0].mxu0 %v2183
      %v3243 = vpop.f32.mrb[0].mxu0
      %v3244 = vadd.f32 %v3019, %v3243
      %v3245 = vpop.f32.mrb[0].mxu0
      %3246 = vmatprep.mubr.f32.mxu0 %v2216
      %3247 = vmatmul.mubr.f32.gmra.mrb[0].mxu0 %v2184
      %v3248 = vpop.f32.mrb[0].mxu0
      %v3249 = vadd.f32 %v3024, %v3248
      %v3250 = vpop.f32.mrb[0].mxu0
      %3251 = vmatprep.mubr.f32.mxu0 %v2217
      %3252 = vmatmul.mubr.f32.gmra.mrb[0].mxu0 %v2185
      %v3253 = vpop.f32.mrb[0].mxu0
      %v3254 = vadd.f32 %v3029, %v3253
      %v3255 = vpop.f32.mrb[0].mxu0
      %3256 = vmatprep.mubr.f32.mxu0 %v2218
      %3257 = vmatmul.mubr.f32.gmra.mrb[0].mxu0 %v2186
      %v3258 = vpop.f32.mrb[0].mxu0
      %v3259 = vadd.f32 %v3034, %v3258
      %v3260 = vpop.f32.mrb[0].mxu0
      %3261 = vmatprep.mubr.f32.mxu0 %v2219
      %3262 = vmatmul.mubr.f32.gmra.mrb[0].mxu0 %v2187
      %v3263 = vpop.f32.mrb[0].mxu0
      %v3264 = vadd.f32 %v3039, %v3263
      %v3265 = vpop.f32.mrb[0].mxu0
      %3266 = vmatprep.mubr.f32.mxu0 %v2220
      %3267 = vmatmul.mubr.f32.gmra.mrb[0].mxu0 %v2188
      %v3268 = vpop.f32.mrb[0].mxu0
      %v3269 = vadd.f32 %v3044, %v3268
      %v3270 = vpop.f32.mrb[0].mxu0
      %3271 = vmatprep.mubr.f32.mxu0 %v2221
      %3272 = vmatmul.mubr.f32.gmra.mrb[0].mxu0 %v2189
      %v3273 = vpop.f32.mrb[0].mxu0
      %v3274 = vadd.f32 %v3049, %v3273
      %v3275 = vpop.f32.mrb[0].mxu0
      %3276 = vmatprep.mubr.f32.mxu0 %v2222
      %3277 = vmatmul.mubr.f32.gmra.mrb[0].mxu0 %v2190
      %v3278 = vpop.f32.mrb[0].mxu0
      %v3279 = vadd.f32 %v3054, %v3278
      %v3280 = vpop.f32.mrb[0].mxu0
      %3281 = vmatprep.mubr.f32.mxu0 %v2223
      %3282 = vmatmul.mubr.f32.gmra.mrb[0].mxu0 %v2191
      %v3283 = vpop.f32.mrb[0].mxu0
      %v3284 = vadd.f32 %v3059, %v3283
      %v3285 = vpop.f32.mrb[0].mxu0
      %3286 = vmatprep.mubr.f32.mxu0 %v2224
      %3287 = vmatmul.mubr.f32.gmra.mrb[0].mxu0 %v2192
      %v3288 = vpop.f32.mrb[0].mxu0
      %v3289 = vadd.f32 %v3064, %v3288
      %v3290 = vpop.f32.mrb[0].mxu0
      %3291 = vmatprep.mubr.f32.mxu0 %v2225
      %3292 = vmatmul.mubr.f32.gmra.mrb[0].mxu0 %v2193
      %v3293 = vpop.f32.mrb[0].mxu0
      %v3294 = vadd.f32 %v3069, %v3293
      %v3295 = vpop.f32.mrb[0].mxu0
      %3296 = vmatprep.mubr.f32.mxu0 %v2226
      %3297 = vmatmul.mubr.f32.gmra.mrb[0].mxu0 %v2194
      %v3298 = vpop.f32.mrb[0].mxu0
      %v3299 = vadd.f32 %v3074, %v3298
      %v3300 = vpop.f32.mrb[0].mxu0
      %3301 = vmatprep.mubr.f32.mxu0 %v2227
      %3302 = vmatmul.mubr.f32.gmra.mrb[0].mxu0 %v2195
      %v3303 = vpop.f32.mrb[0].mxu0
      %v3304 = vadd.f32 %v3079, %v3303
      %v3305 = vpop.f32.mrb[0].mxu0
      %3306 = vmatprep.mubr.f32.mxu0 %v2228
      %3307 = vmatmul.mubr.f32.gmra.mrb[0].mxu0 %v2196
      %v3308 = vpop.f32.mrb[0].mxu0
      %v3309 = vadd.f32 %v3084, %v3308
      %v3310 = vpop.f32.mrb[0].mxu0
      %3311 = vdwg.mxu0
      %3312 = vmatprep.subr.mxu0 0.0
      %3313 = vmatpush1.msra.mxu0 %v2389
      %3314 = vmatprep.subr.mxu0 0.0
      %3315 = vmatpush1.msra.mxu0 %v2390
      %3316 = vmatprep.subr.mxu0 0.0
      %3317 = vmatpush1.msra.mxu0 %v2391
      %3318 = vmatprep.subr.mxu0 0.0
      %3319 = vmatpush1.msra.mxu0 %v2392
      %3320 = vmatprep.subr.mxu0 0.0
      %3321 = vmatpush1.msra.mxu0 %v2393
      %3322 = vmatprep.subr.mxu0 0.0
      %3323 = vmatpush1.msra.mxu0 %v2394
      %3324 = vmatprep.subr.mxu0 0.0
      %3325 = vmatpush1.msra.mxu0 %v2395
      %3326 = vmatprep.subr.mxu0 0.0
      %3327 = vmatpush1.msra.mxu0 %v2396
      %3328 = vmatprep.subr.mxu0 0.0
      %3329 = vmatpush1.msra.mxu0 %v2397
      %3330 = vmatprep.subr.mxu0 0.0
      %3331 = vmatpush1.msra.mxu0 %v2398
      %3332 = vmatprep.subr.mxu0 0.0
      %3333 = vmatpush1.msra.mxu0 %v2399
      %3334 = vmatprep.subr.mxu0 0.0
      %3335 = vmatpush1.msra.mxu0 %v2400
      %3336 = vmatprep.subr.mxu0 0.0
      %3337 = vmatpush1.msra.mxu0 %v2401
      %3338 = vmatprep.subr.mxu0 0.0
      %3339 = vmatpush1.msra.mxu0 %v2402
      %3340 = vmatprep.subr.mxu0 0.0
      %3341 = vmatpush1.msra.mxu0 %v2403
      %3342 = vmatprep.subr.mxu0 0.0
      %3343 = vmatpush1.msra.mxu0 %v2404
      %3344 = vmatprep.subr.mxu0 0.0
      %3345 = vmatpush1.msra.mxu0 0.0
      %3346 = vmatprep.subr.mxu0 0.0
      %3347 = vmatpush1.msra.mxu0 0.0
      %3348 = vmatprep.subr.mxu0 0.0
      %3349 = vmatpush1.msra.mxu0 0.0
      %3350 = vmatprep.subr.mxu0 0.0
      %3351 = vmatpush1.msra.mxu0 0.0
      %3352 = vmatprep.subr.mxu0 0.0
      %3353 = vmatpush1.msra.mxu0 0.0
      %3354 = vmatprep.subr.mxu0 0.0
      %3355 = vmatpush1.msra.mxu0 0.0
      %3356 = vmatprep.subr.mxu0 0.0
      %3357 = vmatpush1.msra.mxu0 0.0
      %3358 = vmatprep.subr.mxu0 0.0
      %3359 = vmatpush1.msra.mxu0 0.0
      %3360 = vmatprep.subr.mxu0 0.0
      %3361 = vmatpush1.msra.mxu0 0.0
      %3362 = vmatprep.subr.mxu0 0.0
      %3363 = vmatpush1.msra.mxu0 0.0
      %3364 = vmatprep.subr.mxu0 0.0
      %3365 = vmatpush1.msra.mxu0 0.0
      %3366 = vmatprep.subr.mxu0 0.0
      %3367 = vmatpush1.msra.mxu0 0.0
      %3368 = vmatprep.subr.mxu0 0.0
      %3369 = vmatpush1.msra.mxu0 0.0
      %3370 = vmatprep.subr.mxu0 0.0
      %3371 = vmatpush1.msra.mxu0 0.0
      %3372 = vmatprep.subr.mxu0 0.0
      %3373 = vmatpush1.msra.mxu0 0.0
      %3374 = vmatprep.subr.mxu0 0.0
      %3375 = vmatpush1.msra.mxu0 0.0
      %3376 = vmatprep.mubr.f32.mxu0 0.0
      %3377 = vmatmul.mubr.f32.gmra.mrb[0].mxu0 %v2229
      %v3378 = vpop.f32.mrb[0].mxu0
      %v3379 = vadd.f32 %v3154, %v3378
      %v3380 = vpop.f32.mrb[0].mxu0
      %3381 = vmatprep.mubr.f32.mxu0 0.0
      %3382 = vmatmul.mubr.f32.gmra.mrb[0].mxu0 %v2230
      %v3383 = vpop.f32.mrb[0].mxu0
      %v3384 = vadd.f32 %v3159, %v3383
      %v3385 = vpop.f32.mrb[0].mxu0
      %3386 = vmatprep.mubr.f32.mxu0 0.0
      %3387 = vmatmul.mubr.f32.gmra.mrb[0].mxu0 %v2231
      %v3388 = vpop.f32.mrb[0].mxu0
      %v3389 = vadd.f32 %v3164, %v3388
      %v3390 = vpop.f32.mrb[0].mxu0
      %3391 = vmatprep.mubr.f32.mxu0 0.0
      %3392 = vmatmul.mubr.f32.gmra.mrb[0].mxu0 %v2232
      %v3393 = vpop.f32.mrb[0].mxu0
      %v3394 = vadd.f32 %v3169, %v3393
      %v3395 = vpop.f32.mrb[0].mxu0
      %3396 = vmatprep.mubr.f32.mxu0 0.0
      %3397 = vmatmul.mubr.f32.gmra.mrb[0].mxu0 %v2233
      %v3398 = vpop.f32.mrb[0].mxu0
      %v3399 = vadd.f32 %v3174, %v3398
      %v3400 = vpop.f32.mrb[0].mxu0
      %3401 = vmatprep.mubr.f32.mxu0 0.0
      %3402 = vmatmul.mubr.f32.gmra.mrb[0].mxu0 %v2234
      %v3403 = vpop.f32.mrb[0].mxu0
      %v3404 = vadd.f32 %v3179, %v3403
      %v3405 = vpop.f32.mrb[0].mxu0
      %3406 = vmatprep.mubr.f32.mxu0 0.0
      %3407 = vmatmul.mubr.f32.gmra.mrb[0].mxu0 %v2235
      %v3408 = vpop.f32.mrb[0].mxu0
      %v3409 = vadd.f32 %v3184, %v3408
      %v3410 = vpop.f32.mrb[0].mxu0
      %3411 = vmatprep.mubr.f32.mxu0 0.0
      %3412 = vmatmul.mubr.f32.gmra.mrb[0].mxu0 %v2236
      %v3413 = vpop.f32.mrb[0].mxu0
      %v3414 = vadd.f32 %v3189, %v3413
      %v3415 = vpop.f32.mrb[0].mxu0
      %3416 = vmatprep.mubr.f32.mxu0 0.0
      %3417 = vmatmul.mubr.f32.gmra.mrb[0].mxu0 %v2237
      %v3418 = vpop.f32.mrb[0].mxu0
      %v3419 = vadd.f32 %v3194, %v3418
      %v3420 = vpop.f32.mrb[0].mxu0
      %3421 = vmatprep.mubr.f32.mxu0 0.0
      %3422 = vmatmul.mubr.f32.gmra.mrb[0].mxu0 %v2238
      %v3423 = vpop.f32.mrb[0].mxu0
      %v3424 = vadd.f32 %v3199, %v3423
      %v3425 = vpop.f32.mrb[0].mxu0
      %3426 = vmatprep.mubr.f32.mxu0 0.0
      %3427 = vmatmul.mubr.f32.gmra.mrb[0].mxu0 %v2239
      %v3428 = vpop.f32.mrb[0].mxu0
      %v3429 = vadd.f32 %v3204, %v3428
      %v3430 = vpop.f32.mrb[0].mxu0
      %3431 = vmatprep.mubr.f32.mxu0 0.0
      %3432 = vmatmul.mubr.f32.gmra.mrb[0].mxu0 %v2240
      %v3433 = vpop.f32.mrb[0].mxu0
      %v3434 = vadd.f32 %v3209, %v3433
      %v3435 = vpop.f32.mrb[0].mxu0
      %3436 = vmatprep.mubr.f32.mxu0 0.0
      %3437 = vmatmul.mubr.f32.gmra.mrb[0].mxu0 %v2241
      %v3438 = vpop.f32.mrb[0].mxu0
      %v3439 = vadd.f32 %v3214, %v3438
      %v3440 = vpop.f32.mrb[0].mxu0
      %3441 = vmatprep.mubr.f32.mxu0 0.0
      %3442 = vmatmul.mubr.f32.gmra.mrb[0].mxu0 %v2242
      %v3443 = vpop.f32.mrb[0].mxu0
      %v3444 = vadd.f32 %v3219, %v3443
      %v3445 = vpop.f32.mrb[0].mxu0
      %3446 = vmatprep.mubr.f32.mxu0 0.0
      %3447 = vmatmul.mubr.f32.gmra.mrb[0].mxu0 %v2243
      %v3448 = vpop.f32.mrb[0].mxu0
      %v3449 = vadd.f32 %v3224, %v3448
      %v3450 = vpop.f32.mrb[0].mxu0
      %3451 = vmatprep.mubr.f32.mxu0 0.0
      %3452 = vmatmul.mubr.f32.gmra.mrb[0].mxu0 %v2244
      %v3453 = vpop.f32.mrb[0].mxu0
      %v3454 = vadd.f32 %v3229, %v3453
      %v3455 = vpop.f32.mrb[0].mxu0
      %3456 = vmatprep.mubr.f32.mxu0 0.0
      %3457 = vmatmul.mubr.f32.gmra.mrb[0].mxu0 %v2245
      %v3458 = vpop.f32.mrb[0].mxu0
      %v3459 = vadd.f32 %v3234, %v3458
      %v3460 = vpop.f32.mrb[0].mxu0
      %3461 = vmatprep.mubr.f32.mxu0 0.0
      %3462 = vmatmul.mubr.f32.gmra.mrb[0].mxu0 %v2246
      %v3463 = vpop.f32.mrb[0].mxu0
      %v3464 = vadd.f32 %v3239, %v3463
      %v3465 = vpop.f32.mrb[0].mxu0
      %3466 = vmatprep.mubr.f32.mxu0 0.0
      %3467 = vmatmul.mubr.f32.gmra.mrb[0].mxu0 %v2247
      %v3468 = vpop.f32.mrb[0].mxu0
      %v3469 = vadd.f32 %v3244, %v3468
      %v3470 = vpop.f32.mrb[0].mxu0
      %3471 = vmatprep.mubr.f32.mxu0 0.0
      %3472 = vmatmul.mubr.f32.gmra.mrb[0].mxu0 %v2248
      %v3473 = vpop.f32.mrb[0].mxu0
      %v3474 = vadd.f32 %v3249, %v3473
      %v3475 = vpop.f32.mrb[0].mxu0
      %3476 = vmatprep.mubr.f32.mxu0 0.0
      %3477 = vmatmul.mubr.f32.gmra.mrb[0].mxu0 %v2249
      %v3478 = vpop.f32.mrb[0].mxu0
      %v3479 = vadd.f32 %v3254, %v3478
      %v3480 = vpop.f32.mrb[0].mxu0
      %3481 = vmatprep.mubr.f32.mxu0 0.0
      %3482 = vmatmul.mubr.f32.gmra.mrb[0].mxu0 %v2250
      %v3483 = vpop.f32.mrb[0].mxu0
      %v3484 = vadd.f32 %v3259, %v3483
      %v3485 = vpop.f32.mrb[0].mxu0
      %3486 = vmatprep.mubr.f32.mxu0 0.0
      %3487 = vmatmul.mubr.f32.gmra.mrb[0].mxu0 %v2251
      %v3488 = vpop.f32.mrb[0].mxu0
      %v3489 = vadd.f32 %v3264, %v3488
      %v3490 = vpop.f32.mrb[0].mxu0
      %3491 = vmatprep.mubr.f32.mxu0 0.0
      %3492 = vmatmul.mubr.f32.gmra.mrb[0].mxu0 %v2252
      %v3493 = vpop.f32.mrb[0].mxu0
      %v3494 = vadd.f32 %v3269, %v3493
      %v3495 = vpop.f32.mrb[0].mxu0
      %3496 = vmatprep.mubr.f32.mxu0 0.0
      %3497 = vmatmul.mubr.f32.gmra.mrb[0].mxu0 %v2253
      %v3498 = vpop.f32.mrb[0].mxu0
      %v3499 = vadd.f32 %v3274, %v3498
      %v3500 = vpop.f32.mrb[0].mxu0
      %3501 = vmatprep.mubr.f32.mxu0 0.0
      %3502 = vmatmul.mubr.f32.gmra.mrb[0].mxu0 %v2254
      %v3503 = vpop.f32.mrb[0].mxu0
      %v3504 = vadd.f32 %v3279, %v3503
      %v3505 = vpop.f32.mrb[0].mxu0
      %3506 = vmatprep.mubr.f32.mxu0 0.0
      %3507 = vmatmul.mubr.f32.gmra.mrb[0].mxu0 %v2255
      %v3508 = vpop.f32.mrb[0].mxu0
      %v3509 = vadd.f32 %v3284, %v3508
      %v3510 = vpop.f32.mrb[0].mxu0
      %3511 = vmatprep.mubr.f32.mxu0 0.0
      %3512 = vmatmul.mubr.f32.gmra.mrb[0].mxu0 %v2256
      %v3513 = vpop.f32.mrb[0].mxu0
      %v3514 = vadd.f32 %v3289, %v3513
      %v3515 = vpop.f32.mrb[0].mxu0
      %3516 = vmatprep.mubr.f32.mxu0 0.0
      %3517 = vmatmul.mubr.f32.gmra.mrb[0].mxu0 %v2257
      %v3518 = vpop.f32.mrb[0].mxu0
      %v3519 = vadd.f32 %v3294, %v3518
      %v3520 = vpop.f32.mrb[0].mxu0
      %3521 = vmatprep.mubr.f32.mxu0 0.0
      %3522 = vmatmul.mubr.f32.gmra.mrb[0].mxu0 %v2258
      %v3523 = vpop.f32.mrb[0].mxu0
      %v3524 = vadd.f32 %v3299, %v3523
      %v3525 = vpop.f32.mrb[0].mxu0
      %3526 = vmatprep.mubr.f32.mxu0 0.0
      %3527 = vmatmul.mubr.f32.gmra.mrb[0].mxu0 %v2259
      %v3528 = vpop.f32.mrb[0].mxu0
      %v3529 = vadd.f32 %v3304, %v3528
      %v3530 = vpop.f32.mrb[0].mxu0
      %3531 = vmatprep.mubr.f32.mxu0 0.0
      %3532 = vmatmul.mubr.f32.gmra.mrb[0].mxu0 %v2260
      %v3533 = vpop.f32.mrb[0].mxu0
      %v3534 = vadd.f32 %v3309, %v3533
      %v3535 = vpop.f32.mrb[0].mxu0
      %3536 = vdwg.mxu0
      %v3537 = vld [vmem:[%s219] sm:$0xff]
      %v3538 = vld [vmem:[%s219 + $0x8] sm:$0xff]
      %v3539 = vld [vmem:[%s219 + $0x10] sm:$0xff]
      %v3540 = vld [vmem:[%s219 + $0x18] sm:$0xff]
      %v3541 = vld [vmem:[%s219 + $0x20] sm:$0xff]
      %v3542 = vld [vmem:[%s219 + $0x28] sm:$0xff]
      %v3543 = vld [vmem:[%s219 + $0x30] sm:$0xff]
      %v3544 = vld [vmem:[%s219 + $0x38] sm:$0xff]
      %v3545 = vld [vmem:[%s219 + $0x40] sm:$0xff]
      %v3546 = vld [vmem:[%s219 + $0x48] sm:$0xff]
      %v3547 = vld [vmem:[%s219 + $0x50] sm:$0xff]
      %v3548 = vld [vmem:[%s219 + $0x58] sm:$0xff]
      %v3549 = vld [vmem:[%s219 + $0x60] sm:$0xff]
      %v3550 = vld [vmem:[%s219 + $0x68] sm:$0xff]
      %v3551 = vld [vmem:[%s219 + $0x70] sm:$0xff]
      %v3552 = vld [vmem:[%s219 + $0x78] sm:$0xff]
      %v3553 = vld [vmem:[%s219 + $0x80] sm:$0xff]
      %v3554 = vld [vmem:[%s219 + $0x88] sm:$0xff]
      %v3555 = vld [vmem:[%s219 + $0x90] sm:$0xff]
      %v3556 = vld [vmem:[%s219 + $0x98] sm:$0xff]
      %v3557 = vld [vmem:[%s219 + $0xa0] sm:$0xff]
      %v3558 = vld [vmem:[%s219 + $0xa8] sm:$0xff]
      %v3559 = vld [vmem:[%s219 + $0xb0] sm:$0xff]
      %v3560 = vld [vmem:[%s219 + $0xb8] sm:$0xff]
      %v3561 = vld [vmem:[%s219 + $0xc0] sm:$0xff]
      %v3562 = vld [vmem:[%s219 + $0xc8] sm:$0xff]
      %v3563 = vld [vmem:[%s219 + $0xd0] sm:$0xff]
      %v3564 = vld [vmem:[%s219 + $0xd8] sm:$0xff]
      %v3565 = vld [vmem:[%s219 + $0xe0] sm:$0xff]
      %v3566 = vld [vmem:[%s219 + $0xe8] sm:$0xff]
      %v3567 = vld [vmem:[%s219 + $0xf0] sm:$0xff]
      %v3568 = vld [vmem:[%s219 + $0xf8] sm:$0xff]
      %v3569 = vadd.f32 %v3379, %v3537
      %v3570 = vadd.f32 %v3384, %v3538
      %v3571 = vadd.f32 %v3389, %v3539
      %v3572 = vadd.f32 %v3394, %v3540
      %v3573 = vadd.f32 %v3399, %v3541
      %v3574 = vadd.f32 %v3404, %v3542
      %v3575 = vadd.f32 %v3409, %v3543
      %v3576 = vadd.f32 %v3414, %v3544
      %v3577 = vadd.f32 %v3419, %v3545
      %v3578 = vadd.f32 %v3424, %v3546
      %v3579 = vadd.f32 %v3429, %v3547
      %v3580 = vadd.f32 %v3434, %v3548
      %v3581 = vadd.f32 %v3439, %v3549
      %v3582 = vadd.f32 %v3444, %v3550
      %v3583 = vadd.f32 %v3449, %v3551
      %v3584 = vadd.f32 %v3454, %v3552
      %v3585 = vadd.f32 %v3459, %v3553
      %v3586 = vadd.f32 %v3464, %v3554
      %v3587 = vadd.f32 %v3469, %v3555
      %v3588 = vadd.f32 %v3474, %v3556
      %v3589 = vadd.f32 %v3479, %v3557
      %v3590 = vadd.f32 %v3484, %v3558
      %v3591 = vadd.f32 %v3489, %v3559
      %v3592 = vadd.f32 %v3494, %v3560
      %v3593 = vadd.f32 %v3499, %v3561
      %v3594 = vadd.f32 %v3504, %v3562
      %v3595 = vadd.f32 %v3509, %v3563
      %v3596 = vadd.f32 %v3514, %v3564
      %v3597 = vadd.f32 %v3519, %v3565
      %v3598 = vadd.f32 %v3524, %v3566
      %v3599 = vadd.f32 %v3529, %v3567
      %v3600 = vadd.f32 %v3534, %v3568
      %v3601 = vmax.f32 %v3569, 0.0
      %v3602 = vmax.f32 %v3570, 0.0
      %v3603 = vmax.f32 %v3571, 0.0
      %v3604 = vmax.f32 %v3572, 0.0
      %v3605 = vmax.f32 %v3573, 0.0
      %v3606 = vmax.f32 %v3574, 0.0
      %v3607 = vmax.f32 %v3575, 0.0
      %v3608 = vmax.f32 %v3576, 0.0
      %v3609 = vmax.f32 %v3577, 0.0
      %v3610 = vmax.f32 %v3578, 0.0
      %v3611 = vmax.f32 %v3579, 0.0
      %v3612 = vmax.f32 %v3580, 0.0
      %v3613 = vmax.f32 %v3581, 0.0
      %v3614 = vmax.f32 %v3582, 0.0
      %v3615 = vmax.f32 %v3583, 0.0
      %v3616 = vmax.f32 %v3584, 0.0
      %v3617 = vmax.f32 %v3585, 0.0
      %v3618 = vmax.f32 %v3586, 0.0
      %v3619 = vmax.f32 %v3587, 0.0
      %v3620 = vmax.f32 %v3588, 0.0
      %v3621 = vmax.f32 %v3589, 0.0
      %v3622 = vmax.f32 %v3590, 0.0
      %v3623 = vmax.f32 %v3591, 0.0
      %v3624 = vmax.f32 %v3592, 0.0
      %v3625 = vmax.f32 %v3593, 0.0
      %v3626 = vmax.f32 %v3594, 0.0
      %v3627 = vmax.f32 %v3595, 0.0
      %v3628 = vmax.f32 %v3596, 0.0
      %v3629 = vmax.f32 %v3597, 0.0
      %v3630 = vmax.f32 %v3598, 0.0
      %v3631 = vmax.f32 %v3599, 0.0
      %v3632 = vmax.f32 %v3600, 0.0
      %3633 = vst [vmem:[%s224] sm:$0xff] %v3601
      %3634 = vst [vmem:[%s224 + $0x8] sm:$0xff] %v3602
      %3635 = vst [vmem:[%s224 + $0x10] sm:$0xff] %v3603
      %3636 = vst [vmem:[%s224 + $0x18] sm:$0xff] %v3604
      %3637 = vst [vmem:[%s224 + $0x20] sm:$0xff] %v3605
      %3638 = vst [vmem:[%s224 + $0x28] sm:$0xff] %v3606
      %3639 = vst [vmem:[%s224 + $0x30] sm:$0xff] %v3607
      %3640 = vst [vmem:[%s224 + $0x38] sm:$0xff] %v3608
      %3641 = vst [vmem:[%s224 + $0x40] sm:$0xff] %v3609
      %3642 = vst [vmem:[%s224 + $0x48] sm:$0xff] %v3610
      %3643 = vst [vmem:[%s224 + $0x50] sm:$0xff] %v3611
      %3644 = vst [vmem:[%s224 + $0x58] sm:$0xff] %v3612
      %3645 = vst [vmem:[%s224 + $0x60] sm:$0xff] %v3613
      %3646 = vst [vmem:[%s224 + $0x68] sm:$0xff] %v3614
      %3647 = vst [vmem:[%s224 + $0x70] sm:$0xff] %v3615
      %3648 = vst [vmem:[%s224 + $0x78] sm:$0xff] %v3616
      %3649 = vst [vmem:[%s224 + $0x80] sm:$0xff] %v3617
      %3650 = vst [vmem:[%s224 + $0x88] sm:$0xff] %v3618
      %3651 = vst [vmem:[%s224 + $0x90] sm:$0xff] %v3619
      %3652 = vst [vmem:[%s224 + $0x98] sm:$0xff] %v3620
      %3653 = vst [vmem:[%s224 + $0xa0] sm:$0xff] %v3621
      %3654 = vst [vmem:[%s224 + $0xa8] sm:$0xff] %v3622
      %3655 = vst [vmem:[%s224 + $0xb0] sm:$0xff] %v3623
      %3656 = vst [vmem:[%s224 + $0xb8] sm:$0xff] %v3624
      %3657 = vst [vmem:[%s224 + $0xc0] sm:$0xff] %v3625
      %3658 = vst [vmem:[%s224 + $0xc8] sm:$0xff] %v3626
      %3659 = vst [vmem:[%s224 + $0xd0] sm:$0xff] %v3627
      %3660 = vst [vmem:[%s224 + $0xd8] sm:$0xff] %v3628
      %3661 = vst [vmem:[%s224 + $0xe0] sm:$0xff] %v3629
      %3662 = vst [vmem:[%s224 + $0xe8] sm:$0xff] %v3630
      %3663 = vst [vmem:[%s224 + $0xf0] sm:$0xff] %v3631
      %3664 = vst [vmem:[%s224 + $0xf8] sm:$0xff] %v3632
      %p3665 = scmp.lt.s32.totalorder %s16, 1
      %s3666 = scalar_select %p3665, %s16, 1
      %s3667 = smul.addr %s3666, 32
      %s3668 = smul.addr %s3667, 8
      %s3669 = scalar_lea.vmem %s5, %s3668
      // Predicated region
      $region41: #{basic_block_pallas.1} parent=39 // pred_check
        %p3670 = pneg %p144
      $region42: #{basic_block_pallas.1} parent=39 // pred_check_branch
        %3672 = sbr.rel (%p3670) target = $region44
      $region43: #{basic_block_pallas.1} parent=39 // pred_region
        _
      $region44: #{basic_block_pallas.1} parent=39 // pred_fallthru
        _
    $region40: #{basic_block_pallas.1} parent=5 // pred_fallthru
      _
    %p3673 = scmp.le.s32.totalorder 2, %s11
    // Predicated region
    $region45: #{basic_block_pallas.1} parent=5 // pred_check
      %p3674 = pneg %p3673
    $region46: #{basic_block_pallas.1} parent=5 // pred_check_branch
      %3676 = sbr.rel (%p3674) target = $region48
    $region47: #{basic_block_pallas.1} parent=5 // pred_region
      %s3677 = ssub.s32 %s11, 2
      // Predicated region
      $region49: #{basic_block_pallas.1} parent=47 // pred_check
        %p3678 = pneg %p150
      $region50: #{basic_block_pallas.1} parent=47 // pred_check_branch
        %3680 = sbr.rel (%p3678) target = $region52
      $region51: #{basic_block_pallas.1} parent=47 // pred_region
        %p3681 = scmp.lt.s32.totalorder %s17, 1
        %s3682 = scalar_select %p3681, %s17, 1
        %s3683 = smul.addr %s3682, 32
        %s3684 = smul.addr %s3683, 8
        %s3685 = scalar_lea.vmem %s5, %s3684
      $region52: #{basic_block_pallas.1} parent=47 // pred_fallthru
        _
    $region48: #{basic_block_pallas.1} parent=5 // pred_fallthru
      _
  $region6: #{basic_block_pallas.1} parent=0 // loop_footer
    %s15 = sadd.s32 1, %s11
  $region7: #{basic_block_pallas.1} parent=0 // loop_footer_branch
    %10 = sbr.rel target = $region3
  $region8: #{basic_block_pallas.1} parent=0 // loop_exit
    _

</llo_original>
